<compile_context>
chip_gen: v6e
topology: v6e:2x2x1
jax: 0.10.0
libtpu: 0.0.40
codegen_flags: <defaults>
</compile_context>

<pallas_src>
import functools

import numpy as np
import jax
import jax.numpy as jnp
from jax.experimental import pallas as pl
from jax.experimental.pallas import tpu as pltpu


LANE_CHUNK = 512   # inner-loop chunk width (multiple of 128)


# ----------------------------- Pallas kernel -------------------------------

def magnet_kernel(x_ref, a_ref, o_ref, *, hp, chunk, n_chunks):
    # x_ref: (3, TS)      rows = [x0, x1, 1] for one lane tile
    # a_ref: (3*hp, 3)    folded per-channel constants (see magnet_forward)
    # o_ref: (hp, TS)
    a = a_ref[...]                                             # (3*hp, 3), VMEM-resident

    def body(c, carry):
        off = pl.multiple_of(c * chunk, chunk)
        x3 = x_ref[:, pl.ds(off, chunk)]                       # (3, chunk)
        # One MXU matmul yields all three per-channel linear forms:
        #   rows [0:hp)    -> g0  =  a0*x0 + a1*x1 - c0
        #   rows [hp:2hp)  -> g1  =  a2*x0 + a3*x1 - c1
        #   rows [2hp:3hp) -> lin =  w0*x0 + w1*x1 + bias
        y = jnp.dot(a, x3, preferred_element_type=jnp.float32,
                    precision=jax.lax.Precision.HIGHEST)       # (3*hp, chunk)
        g0 = y[0:hp, :]
        g1 = y[hp:2 * hp, :]
        lin = y[2 * hp:3 * hp, :]
        window = jnp.exp(-(g0 * g0 + g1 * g1))                 # EUP
        o_ref[:, pl.ds(off, chunk)] = (window * jnp.sin(lin)).astype(o_ref.dtype)
        return carry

    jax.lax.fori_loop(0, n_chunks, body, 0, unroll=True)


def magnet_forward(x, mu, gamma, theta, w, b, *, max_tile_s=8192,
                   out_dtype=jnp.float32):
    """x: (B, 2, H, W) float32 -> (B, HID, H, W) out_dtype."""
    B, D, H, W = x.shape
    assert D == 2, "steerable MAGNet layer requires data_dim == 2"
    HID = mu.shape[0]
    S = H * W
    BS = B * S

    # Pad channel count to a sublane multiple so the hp-row slices of the
    # stacked matmul result stay sublane-aligned.
    HP = pl.cdiv(HID, 8) * 8

    # ---- lane-tile selection -----------------------------------------------
    # Double-buffered in (3 rows) + out (HP rows) f32 blocks; cap so the budget
    # also fits v7x's 64 MiB VMEM. Big tiles amortize the ~600-cycle/step cost.
    vmem_budget = 32 << 20
    bytes_per_lane = 2 * (HP + 3) * 4
    max_by_vmem = max(LANE_CHUNK,
                      (vmem_budget // bytes_per_lane) // LANE_CHUNK * LANE_CHUNK)
    bs_round = pl.cdiv(BS, LANE_CHUNK) * LANE_CHUNK
    tile_s = min(max_tile_s, max_by_vmem, bs_round)
    BS_pad = pl.cdiv(BS, tile_s) * tile_s
    n_chunks = tile_s // LANE_CHUNK

    # ---- inputs: collapse (B, S) into one lane axis, append a ones-row ------
    x2 = jnp.transpose(x.astype(jnp.float32), (1, 0, 2, 3)).reshape(D, BS)
    if BS_pad != BS:
        # elementwise along lanes -> zero padding is harmless, sliced off below
        x2 = jnp.pad(x2, ((0, 0), (0, BS_pad - BS)))
    x3 = jnp.concatenate([x2, jnp.ones((1, BS_pad), jnp.float32)], axis=0)

    # ---- fold all per-channel constants into one (3*HP, 3) matrix -----------
    # With s = sqrt(0.5):
    #   a0 =  s*gamma0*cos(2*pi*theta),  a1 =  s*gamma0*sin(2*pi*theta)
    #   a2 = -s*gamma1*sin(2*pi*theta),  a3 =  s*gamma1*cos(2*pi*theta)
    #   c0 = a0*mu0 + a1*mu1,            c1 = a2*mu0 + a3*mu1
    # so  exp(-(g0^2 + g1^2)) == exp(-0.5*|gamma * R(2*pi*theta)(x-mu)|^2)
    s = np.float32(np.sqrt(0.5))
    cos_t = jnp.cos(2.0 * np.pi * theta)
    sin_t = jnp.sin(2.0 * np.pi * theta)
    a0 = s * gamma[:, 0] * cos_t
    a1 = s * gamma[:, 0] * sin_t
    a2 = -s * gamma[:, 1] * sin_t
    a3 = s * gamma[:, 1] * cos_t
    c0 = a0 * mu[:, 0] + a1 * mu[:, 1]
    c1 = a2 * mu[:, 0] + a3 * mu[:, 1]
    rows_g0 = jnp.stack([a0, a1, -c0], axis=-1)          # (HID, 3)
    rows_g1 = jnp.stack([a2, a3, -c1], axis=-1)          # (HID, 3)
    rows_ln = jnp.stack([w[:, 0], w[:, 1], b], axis=-1)  # (HID, 3)

    def pad_rows(r):
        return jnp.pad(r, ((0, HP - HID), (0, 0))) if HP != HID else r

    coeff = jnp.concatenate(
        [pad_rows(rows_g0), pad_rows(rows_g1), pad_rows(rows_ln)],
        axis=0).astype(jnp.float32)                      # (3*HP, 3)

    grid = (BS_pad // tile_s,)
    kernel = functools.partial(magnet_kernel, hp=HP, chunk=LANE_CHUNK,
                               n_chunks=n_chunks)

    out_flat = pl.pallas_call(
        kernel,
        out_shape=jax.ShapeDtypeStruct((HP, BS_pad), out_dtype),
        grid_spec=pltpu.PrefetchScalarGridSpec(
            num_scalar_prefetch=0,
            grid=grid,
            in_specs=[
                # coordinate block: lane-tiled along the fused B*S axis
                pl.BlockSpec((3, tile_s), lambda i: (0, i)),
                # folded constants: constant index map -> stays VMEM-resident
                pl.BlockSpec((3 * HP, 3), lambda i: (0, 0)),
            ],
            out_specs=pl.BlockSpec((HP, tile_s), lambda i: (0, i)),
        ),
        compiler_params=pltpu.CompilerParams(
            dimension_semantics=("parallel",),
            vmem_limit_bytes=44 << 20,
        ),
    )(x3, coeff)

    out = out_flat[:HID, :BS].reshape(HID, B, H, W)
    return jnp.transpose(out, (1, 0, 2, 3))


# --------------------------- pure-JAX reference ----------------------------

def magnet_reference(x, mu, gamma, theta, w, b):
    # Mirrors rotated_gaussian_window(...) * sin(linear(x)) from PyTorch,
    # computed fully elementwise in f32 (no matmul precision ambiguity).
    x0 = x[:, 0]                                              # (B, H, W)
    x1 = x[:, 1]
    cos = jnp.cos(2.0 * np.pi * theta)[None, :, None, None]   # (1, C, 1, 1)
    sin = jnp.sin(2.0 * np.pi * theta)[None, :, None, None]
    d0 = x0[:, None] - mu[None, :, 0, None, None]             # (B, C, H, W)
    d1 = x1[:, None] - mu[None, :, 1, None, None]
    r0 = cos * d0 + sin * d1
    r1 = -sin * d0 + cos * d1
    g0 = gamma[None, :, 0, None, None] * r0
    g1 = gamma[None, :, 1, None, None] * r1
    window = jnp.exp(-0.5 * (g0 * g0 + g1 * g1))
    lin = (w[None, :, 0, None, None] * x0[:, None]
           + w[None, :, 1, None, None] * x1[:, None]
           + b[None, :, None, None])
    return window * jnp.sin(lin)


# --------------------------------- main ------------------------------------

if __name__ == "__main__":
    # Module hyper-parameters (synthetic, deterministic init).
    data_dim = 2
    hidden_channels = 32
    omega_0 = 1.0
    alpha, beta = 6.0, 1.0
    init_spatial_value = 1.0

    # Input: coordinate grid (B, data_dim, H, W), NCHW like the PyTorch conv input.
    B, H, W = 2, 16, 16

    key = jax.random.PRNGKey(0)
    k_mu, k_gamma, k_theta, k_w, k_x = jax.random.split(key, 5)

    # mu = init_spatial_value * (2*rand - 1)  in [-1, 1]
    mu = init_spatial_value * (
        2.0 * jax.random.uniform(k_mu, (hidden_channels, data_dim), jnp.float32) - 1.0)
    # gamma ~ Gamma(alpha, rate=beta)
    gamma = jax.random.gamma(k_gamma, alpha,
                             (hidden_channels, data_dim)).astype(jnp.float32) / beta
    # theta ~ U[0, 1)
    theta = jax.random.uniform(k_theta, (hidden_channels,), jnp.float32)
    # Linear2d (1x1 conv) weight, scaled by 2*pi*omega_0*gamma ; bias = 0
    k_bound = 1.0 / np.sqrt(data_dim)
    w_raw = jax.random.uniform(k_w, (hidden_channels, data_dim), jnp.float32,
                               minval=-k_bound, maxval=k_bound)
    w = w_raw * (2.0 * np.pi * omega_0 * gamma)
    b = jnp.zeros((hidden_channels,), jnp.float32)

    # Coordinate-grid-like input in [-1, 1]
    x = jax.random.uniform(k_x, (B, data_dim, H, W), jnp.float32,
                           minval=-1.0, maxval=1.0)

    out = magnet_forward(x, mu, gamma, theta, w, b)
    out = jax.block_until_ready(out)

    ref = magnet_reference(x, mu, gamma, theta, w, b)
    # Tolerance leaves a little room for the MXU f32 (multi-pass) dot vs the
    # purely elementwise f32 reference at |lin| up to ~O(100).
    np.testing.assert_allclose(np.asarray(out), np.asarray(ref),
                               rtol=2e-4, atol=2e-4)

    print("KERNEL_OK")
</pallas_src>

<mosaic_0001>
module attributes {stable_mosaic.version = 11 : i64} {
  func.func @magnet_kernel(%arg0: i32, %arg1: memref<3x512xf32, #tpu.memory_space<vmem>>, %arg2: memref<96x3xf32, #tpu.memory_space<vmem>>, %arg3: memref<32x512xf32, #tpu.memory_space<vmem>>) attributes {dimension_semantics = [#tpu.dimension_semantics<parallel>], iteration_bounds = array<i64: 1>, scalar_prefetch = 0 : i64, scratch_operands = 0 : i64, tpu.core_type = #tpu.core_type<tc>, window_params = [{transform_indices = @transform_0, window_bounds = array<i64: 3, 512>}, {pipeline_mode = #tpu.pipeline_mode<synchronous>, transform_indices = @transform_1, window_bounds = array<i64: 96, 3>}, {transform_indices = @transform_2, window_bounds = array<i64: 32, 512>}]} {
    %c0 = arith.constant 0 : index
    %c0_0 = arith.constant 0 : index
    %0 = vector.load %arg2[%c0, %c0_0] : memref<96x3xf32, #tpu.memory_space<vmem>>, vector<96x3xf32>
    %c0_i32 = arith.constant 0 : i32
    %c512_i32 = arith.constant 512 : i32
    %1 = arith.muli %c0_i32, %c512_i32 : i32
    %2 = tpu.assume_multiple %1, 512 : i32
    %c0_1 = arith.constant 0 : index
    %3 = arith.index_cast %2 : i32 to index
    %4 = vector.load %arg1[%c0_1, %3] : memref<3x512xf32, #tpu.memory_space<vmem>>, vector<3x512xf32>
    %cst = arith.constant dense<0.000000e+00> : vector<96x512xf32>
    %5 = tpu.matmul %0, %4, %cst {dimension_numbers = #tpu.dot_dimension_numbers<[1], [0], [0], [1], [0, 0, 1, 1], [], []>, precision = #tpu.contract_precision<fp32>} : vector<96x3xf32>, vector<3x512xf32>, vector<96x512xf32> -> vector<96x512xf32>
    %6 = vector.extract_strided_slice %5 {offsets = [0, 0], sizes = [32, 512], strides = [1, 1]} : vector<96x512xf32> to vector<32x512xf32>
    %7 = vector.extract_strided_slice %5 {offsets = [32, 0], sizes = [32, 512], strides = [1, 1]} : vector<96x512xf32> to vector<32x512xf32>
    %8 = vector.extract_strided_slice %5 {offsets = [64, 0], sizes = [32, 512], strides = [1, 1]} : vector<96x512xf32> to vector<32x512xf32>
    %9 = arith.mulf %6, %6 : vector<32x512xf32>
    %10 = arith.mulf %7, %7 : vector<32x512xf32>
    %11 = arith.addf %9, %10 : vector<32x512xf32>
    %cst_2 = arith.constant 0.000000e+00 : f32
    %12 = vector.broadcast %cst_2 : f32 to vector<32x512xf32>
    %13 = arith.subf %12, %11 : vector<32x512xf32>
    %14 = math.exp %13 : vector<32x512xf32>
    %15 = math.sin %8 : vector<32x512xf32>
    %16 = arith.mulf %14, %15 : vector<32x512xf32>
    %c0_3 = arith.constant 0 : index
    %17 = arith.index_cast %2 : i32 to index
    %18 = vector.load %arg3[%c0_3, %17] : memref<32x512xf32, #tpu.memory_space<vmem>>, vector<32x512xf32>
    tpu.vector_store %arg3[%c0_3, %17], %16 {strides = array<i32>} : memref<32x512xf32, #tpu.memory_space<vmem>>, vector<32x512xf32>,
    %c1_i32 = arith.constant 1 : i32
    return
  }
  func.func @transform_0(%arg0: i32) -> (i32, i32) {
    %c0_i32 = arith.constant 0 : i32
    %c0_i32_0 = arith.constant 0 : i32
    return %c0_i32, %arg0 : i32, i32
  }
  func.func @transform_1(%arg0: i32) -> (i32, i32) {
    %c0_i32 = arith.constant 0 : i32
    %c0_i32_0 = arith.constant 0 : i32
    %c0_i32_1 = arith.constant 0 : i32
    return %c0_i32, %c0_i32_0 : i32, i32
  }
  func.func @transform_2(%arg0: i32) -> (i32, i32) {
    %c0_i32 = arith.constant 0 : i32
    %c0_i32_0 = arith.constant 0 : i32
    return %c0_i32, %arg0 : i32, i32
  }
}

</mosaic_0001>

<llo_original>
// kernel: tpu_custom_call.1
$region0: #{tpu_custom_call.1}
  #allocation0 [shape = 'u32[]', space=smem, size = 0x4, offset = 0x4, fixed_abs, tag = 'smem constant byte address 0x4 - core index']
  #allocation1 [shape = 'u32[144,128]{1,0:T(1,128)}', space=vmem, size = 0x12000, scoped, tag = 'internal scratch']
  %s0 = inlined_call_operand.vmem [shape: f32[3,512], index: 0, kind: input, shape index: {}]
  %s1 = inlined_call_operand.vmem [shape: f32[96,3], index: 1, kind: input, shape index: {}]
  %s2 = inlined_call_operand.hbm [shape: f32[32,512], index: 2, kind: output, shape index: {}]
  %s3 = sld [smem:[#allocation0]]
  $region18: #{tpu_custom_call.1} parent=0
    _
  %s5 = ssub.s32 1, %s3
  %s6 = scalar_select 0, %s5, %s3
  $region1: #{tpu_custom_call.1} parent=0
    #allocation2 [shape = 'u8[65536]{0}', space=vmem, size = 0x10000, scoped, tag = 'output window, operand 0, single buffered']
    #allocation3 [shape = 's32[1]{0}', space=sflag, size = 0x4, scoped, tag = 'scoped memory for tpu_custom_call.1']
    %7 = vsyncpa [#allocation3], 0
    // Predicated region
    $region2: #{tpu_custom_call.1} parent=1 // pred_check
      _
    $region3: #{tpu_custom_call.1} parent=1 // pred_check_branch
      %9 = sbr.rel (0) target = $region5
    $region4: #{tpu_custom_call.1} parent=1 // pred_region
      _
    $region5: #{tpu_custom_call.1} parent=1 // pred_fallthru
      _
    // Predicated region
    $region6: #{tpu_custom_call.1} parent=1 // pred_check
      _
    $region7: #{tpu_custom_call.1} parent=1 // pred_check_branch
      %11 = sbr.rel (0) target = $region9
    $region8: #{tpu_custom_call.1} parent=1 // pred_region
      _
    $region9: #{tpu_custom_call.1} parent=1 // pred_fallthru
      _
    %v12 = vld [vmem:[%s1] sm:$0xff]
    %v13 = vld [vmem:[%s1 + $0x8] sm:$0xff]
    %v14 = vld [vmem:[%s1 + $0x10] sm:$0xff]
    %v15 = vld [vmem:[%s1 + $0x18] sm:$0xff]
    %v16 = vld [vmem:[%s1 + $0x20] sm:$0xff]
    %v17 = vld [vmem:[%s1 + $0x28] sm:$0xff]
    %v18 = vld [vmem:[%s1 + $0x30] sm:$0xff]
    %v19 = vld [vmem:[%s1 + $0x38] sm:$0xff]
    %v20 = vld [vmem:[%s1 + $0x40] sm:$0xff]
    %v21 = vld [vmem:[%s1 + $0x48] sm:$0xff]
    %v22 = vld [vmem:[%s1 + $0x50] sm:$0xff]
    %v23 = vld [vmem:[%s1 + $0x58] sm:$0xff]
    %v24 = vld [vmem:[%s0] sm:$0x77]
    %v25 = vld [vmem:[%s0 + $0x8] sm:$0x77]
    %v28 = vcombine.high %v24, %v24
    %v29 = vcombine.high %v25, %v25
    %vm30 = vcmask 23552
    %v32 = vsel %vm30, %v12, 0
    %v35 = vsel %vm30, %v13, 0
    %v38 = vsel %vm30, %v14, 0
    %v41 = vsel %vm30, %v15, 0
    %v44 = vsel %vm30, %v16, 0
    %v47 = vsel %vm30, %v17, 0
    %v50 = vsel %vm30, %v18, 0
    %v53 = vsel %vm30, %v19, 0
    %v56 = vsel %vm30, %v20, 0
    %v59 = vsel %vm30, %v21, 0
    %v62 = vsel %vm30, %v22, 0
    %v65 = vsel %vm30, %v23, 0
    %vm67 = vcmask 1042432
    %v68 = vsel %vm67, %v24, 0
    %v70 = vsel %vm67, %v28, 0
    %v72 = vsel %vm67, %v25, 0
    %v74 = vsel %vm67, %v29, 0
    %76 = vmatprep.subr.mxu0 0.0
    %77 = vmatpush1.msra.mxu0 0.0
    %78 = vmatprep.subr.mxu0 0.0
    %79 = vmatpush1.msra.mxu0 0.0
    %80 = vmatprep.subr.mxu0 0.0
    %81 = vmatpush1.msra.mxu0 0.0
    %82 = vmatprep.subr.mxu0 0.0
    %83 = vmatpush1.msra.mxu0 0.0
    %84 = vmatprep.subr.mxu0 0.0
    %85 = vmatpush1.msra.mxu0 0.0
    %86 = vmatprep.subr.mxu0 0.0
    %87 = vmatpush1.msra.mxu0 0.0
    %88 = vmatprep.subr.mxu0 0.0
    %89 = vmatpush1.msra.mxu0 0.0
    %90 = vmatprep.subr.mxu0 0.0
    %91 = vmatpush1.msra.mxu0 0.0
    %92 = vmatprep.subr.mxu0 0.0
    %93 = vmatpush1.msra.mxu0 0.0
    %94 = vmatprep.subr.mxu0 0.0
    %95 = vmatpush1.msra.mxu0 0.0
    %96 = vmatprep.subr.mxu0 0.0
    %97 = vmatpush1.msra.mxu0 0.0
    %98 = vmatprep.subr.mxu0 0.0
    %99 = vmatpush1.msra.mxu0 0.0
    %100 = vmatprep.subr.mxu0 0.0
    %101 = vmatpush1.msra.mxu0 0.0
    %102 = vmatprep.subr.mxu0 0.0
    %103 = vmatpush1.msra.mxu0 0.0
    %104 = vmatprep.subr.mxu0 0.0
    %105 = vmatpush1.msra.mxu0 0.0
    %v106 = vand.u32 %v70, 4294901760
    %107 = vmatprep.subr.mxu0 %v106
    %v108 = vand.u32 %v68, 4294901760
    %109 = vmatpush1.msra.mxu0 %v108
    %110 = vmatprep.subr.mxu0 0.0
    %111 = vmatpush2.msra.mxu0 0.0
    %112 = vmatprep.subr.mxu0 0.0
    %113 = vmatpush2.msra.mxu0 0.0
    %114 = vmatprep.subr.mxu0 0.0
    %115 = vmatpush2.msra.mxu0 0.0
    %116 = vmatprep.subr.mxu0 0.0
    %117 = vmatpush2.msra.mxu0 0.0
    %118 = vmatprep.subr.mxu0 0.0
    %119 = vmatpush2.msra.mxu0 0.0
    %120 = vmatprep.subr.mxu0 0.0
    %121 = vmatpush2.msra.mxu0 0.0
    %122 = vmatprep.subr.mxu0 0.0
    %123 = vmatpush2.msra.mxu0 0.0
    %124 = vmatprep.subr.mxu0 0.0
    %125 = vmatpush2.msra.mxu0 0.0
    %126 = vmatprep.subr.mxu0 0.0
    %127 = vmatpush2.msra.mxu0 0.0
    %128 = vmatprep.subr.mxu0 0.0
    %129 = vmatpush2.msra.mxu0 0.0
    %130 = vmatprep.subr.mxu0 0.0
    %131 = vmatpush2.msra.mxu0 0.0
    %132 = vmatprep.subr.mxu0 0.0
    %133 = vmatpush2.msra.mxu0 0.0
    %134 = vmatprep.subr.mxu0 0.0
    %135 = vmatpush2.msra.mxu0 0.0
    %136 = vmatprep.subr.mxu0 0.0
    %137 = vmatpush2.msra.mxu0 0.0
    %138 = vmatprep.subr.mxu0 0.0
    %139 = vmatpush2.msra.mxu0 0.0
    %140 = vmatprep.subr.mxu0 0.0
    %141 = vmatpush2.msra.mxu0 0.0
    %142 = vmatprep.mubr.f32.mxu0 0.0
    %v143 = vand.u32 %v32, 4294901760
    %v144 = vsub.f32 %v32, %v143
    %v145 = vand.u32 %v144, 4294901760
    %v146 = vsub.f32 %v144, %v145
    %v147 = vand.u32 %v146, 4294901760
    %148 = vmatmul.mubr.f32.gmra.mxu0 %v147
    %v149 = vpop.f32.mrf.mxu0
    %v150 = vadd.f32 0.0, %v149
    %v151 = vpop.f32.mrf.mxu0
    %v152 = vadd.f32 0.0, %v151
    %153 = vmatprep.mubr.f32.mxu0 0.0
    %v154 = vand.u32 %v35, 4294901760
    %v155 = vsub.f32 %v35, %v154
    %v156 = vand.u32 %v155, 4294901760
    %v157 = vsub.f32 %v155, %v156
    %v158 = vand.u32 %v157, 4294901760
    %159 = vmatmul.mubr.f32.gmra.mxu0 %v158
    %v160 = vpop.f32.mrf.mxu0
    %v161 = vadd.f32 0.0, %v160
    %v162 = vpop.f32.mrf.mxu0
    %v163 = vadd.f32 0.0, %v162
    %164 = vmatprep.mubr.f32.mxu0 0.0
    %v165 = vand.u32 %v38, 4294901760
    %v166 = vsub.f32 %v38, %v165
    %v167 = vand.u32 %v166, 4294901760
    %v168 = vsub.f32 %v166, %v167
    %v169 = vand.u32 %v168, 4294901760
    %170 = vmatmul.mubr.f32.gmra.mxu0 %v169
    %v171 = vpop.f32.mrf.mxu0
    %v172 = vadd.f32 0.0, %v171
    %v173 = vpop.f32.mrf.mxu0
    %v174 = vadd.f32 0.0, %v173
    %175 = vmatprep.mubr.f32.mxu0 0.0
    %v176 = vand.u32 %v41, 4294901760
    %v177 = vsub.f32 %v41, %v176
    %v178 = vand.u32 %v177, 4294901760
    %v179 = vsub.f32 %v177, %v178
    %v180 = vand.u32 %v179, 4294901760
    %181 = vmatmul.mubr.f32.gmra.mxu0 %v180
    %v182 = vpop.f32.mrf.mxu0
    %v183 = vadd.f32 0.0, %v182
    %v184 = vpop.f32.mrf.mxu0
    %v185 = vadd.f32 0.0, %v184
    %186 = vmatprep.mubr.f32.mxu0 0.0
    %v187 = vand.u32 %v44, 4294901760
    %v188 = vsub.f32 %v44, %v187
    %v189 = vand.u32 %v188, 4294901760
    %v190 = vsub.f32 %v188, %v189
    %v191 = vand.u32 %v190, 4294901760
    %192 = vmatmul.mubr.f32.gmra.mxu0 %v191
    %v193 = vpop.f32.mrf.mxu0
    %v194 = vadd.f32 0.0, %v193
    %v195 = vpop.f32.mrf.mxu0
    %v196 = vadd.f32 0.0, %v195
    %197 = vmatprep.mubr.f32.mxu0 0.0
    %v198 = vand.u32 %v47, 4294901760
    %v199 = vsub.f32 %v47, %v198
    %v200 = vand.u32 %v199, 4294901760
    %v201 = vsub.f32 %v199, %v200
    %v202 = vand.u32 %v201, 4294901760
    %203 = vmatmul.mubr.f32.gmra.mxu0 %v202
    %v204 = vpop.f32.mrf.mxu0
    %v205 = vadd.f32 0.0, %v204
    %v206 = vpop.f32.mrf.mxu0
    %v207 = vadd.f32 0.0, %v206
    %208 = vmatprep.mubr.f32.mxu0 0.0
    %v209 = vand.u32 %v50, 4294901760
    %v210 = vsub.f32 %v50, %v209
    %v211 = vand.u32 %v210, 4294901760
    %v212 = vsub.f32 %v210, %v211
    %v213 = vand.u32 %v212, 4294901760
    %214 = vmatmul.mubr.f32.gmra.mxu0 %v213
    %v215 = vpop.f32.mrf.mxu0
    %v216 = vadd.f32 0.0, %v215
    %v217 = vpop.f32.mrf.mxu0
    %v218 = vadd.f32 0.0, %v217
    %219 = vmatprep.mubr.f32.mxu0 0.0
    %v220 = vand.u32 %v53, 4294901760
    %v221 = vsub.f32 %v53, %v220
    %v222 = vand.u32 %v221, 4294901760
    %v223 = vsub.f32 %v221, %v222
    %v224 = vand.u32 %v223, 4294901760
    %225 = vmatmul.mubr.f32.gmra.mxu0 %v224
    %v226 = vpop.f32.mrf.mxu0
    %v227 = vadd.f32 0.0, %v226
    %v228 = vpop.f32.mrf.mxu0
    %v229 = vadd.f32 0.0, %v228
    %230 = vmatprep.mubr.f32.mxu0 0.0
    %v231 = vand.u32 %v56, 4294901760
    %v232 = vsub.f32 %v56, %v231
    %v233 = vand.u32 %v232, 4294901760
    %v234 = vsub.f32 %v232, %v233
    %v235 = vand.u32 %v234, 4294901760
    %236 = vmatmul.mubr.f32.gmra.mxu0 %v235
    %v237 = vpop.f32.mrf.mxu0
    %v238 = vadd.f32 0.0, %v237
    %v239 = vpop.f32.mrf.mxu0
    %v240 = vadd.f32 0.0, %v239
    %241 = vmatprep.mubr.f32.mxu0 0.0
    %v242 = vand.u32 %v59, 4294901760
    %v243 = vsub.f32 %v59, %v242
    %v244 = vand.u32 %v243, 4294901760
    %v245 = vsub.f32 %v243, %v244
    %v246 = vand.u32 %v245, 4294901760
    %247 = vmatmul.mubr.f32.gmra.mxu0 %v246
    %v248 = vpop.f32.mrf.mxu0
    %v249 = vadd.f32 0.0, %v248
    %v250 = vpop.f32.mrf.mxu0
    %v251 = vadd.f32 0.0, %v250
    %252 = vmatprep.mubr.f32.mxu0 0.0
    %v253 = vand.u32 %v62, 4294901760
    %v254 = vsub.f32 %v62, %v253
    %v255 = vand.u32 %v254, 4294901760
    %v256 = vsub.f32 %v254, %v255
    %v257 = vand.u32 %v256, 4294901760
    %258 = vmatmul.mubr.f32.gmra.mxu0 %v257
    %v259 = vpop.f32.mrf.mxu0
    %v260 = vadd.f32 0.0, %v259
    %v261 = vpop.f32.mrf.mxu0
    %v262 = vadd.f32 0.0, %v261
    %263 = vmatprep.mubr.f32.mxu0 0.0
    %v264 = vand.u32 %v65, 4294901760
    %v265 = vsub.f32 %v65, %v264
    %v266 = vand.u32 %v265, 4294901760
    %v267 = vsub.f32 %v265, %v266
    %v268 = vand.u32 %v267, 4294901760
    %269 = vmatmul.mubr.f32.gmra.mxu0 %v268
    %v270 = vpop.f32.mrf.mxu0
    %v271 = vadd.f32 0.0, %v270
    %v272 = vpop.f32.mrf.mxu0
    %v273 = vadd.f32 0.0, %v272
    %274 = vdwg.mxu0
    %275 = vmatprep.subr.mxu0 0.0
    %276 = vmatpush1.msra.mxu0 0.0
    %277 = vmatprep.subr.mxu0 0.0
    %278 = vmatpush1.msra.mxu0 0.0
    %279 = vmatprep.subr.mxu0 0.0
    %280 = vmatpush1.msra.mxu0 0.0
    %281 = vmatprep.subr.mxu0 0.0
    %282 = vmatpush1.msra.mxu0 0.0
    %283 = vmatprep.subr.mxu0 0.0
    %284 = vmatpush1.msra.mxu0 0.0
    %285 = vmatprep.subr.mxu0 0.0
    %286 = vmatpush1.msra.mxu0 0.0
    %287 = vmatprep.subr.mxu0 0.0
    %288 = vmatpush1.msra.mxu0 0.0
    %289 = vmatprep.subr.mxu0 0.0
    %290 = vmatpush1.msra.mxu0 0.0
    %291 = vmatprep.subr.mxu0 0.0
    %292 = vmatpush1.msra.mxu0 0.0
    %293 = vmatprep.subr.mxu0 0.0
    %294 = vmatpush1.msra.mxu0 0.0
    %295 = vmatprep.subr.mxu0 0.0
    %296 = vmatpush1.msra.mxu0 0.0
    %297 = vmatprep.subr.mxu0 0.0
    %298 = vmatpush1.msra.mxu0 0.0
    %299 = vmatprep.subr.mxu0 0.0
    %300 = vmatpush1.msra.mxu0 0.0
    %301 = vmatprep.subr.mxu0 0.0
    %302 = vmatpush1.msra.mxu0 0.0
    %303 = vmatprep.subr.mxu0 0.0
    %304 = vmatpush1.msra.mxu0 0.0
    %v305 = vand.u32 %v70, 4294901760
    %v306 = vsub.f32 %v70, %v305
    %v307 = vand.u32 %v306, 4294901760
    %v308 = vsub.f32 %v306, %v307
    %v309 = vand.u32 %v308, 4294901760
    %310 = vmatprep.subr.mxu0 %v309
    %v311 = vand.u32 %v68, 4294901760
    %v312 = vsub.f32 %v68, %v311
    %v313 = vand.u32 %v312, 4294901760
    %v314 = vsub.f32 %v312, %v313
    %v315 = vand.u32 %v314, 4294901760
    %316 = vmatpush1.msra.mxu0 %v315
    %317 = vmatprep.subr.mxu0 0.0
    %318 = vmatpush2.msra.mxu0 0.0
    %319 = vmatprep.subr.mxu0 0.0
    %320 = vmatpush2.msra.mxu0 0.0
    %321 = vmatprep.subr.mxu0 0.0
    %322 = vmatpush2.msra.mxu0 0.0
    %323 = vmatprep.subr.mxu0 0.0
    %324 = vmatpush2.msra.mxu0 0.0
    %325 = vmatprep.subr.mxu0 0.0
    %326 = vmatpush2.msra.mxu0 0.0
    %327 = vmatprep.subr.mxu0 0.0
    %328 = vmatpush2.msra.mxu0 0.0
    %329 = vmatprep.subr.mxu0 0.0
    %330 = vmatpush2.msra.mxu0 0.0
    %331 = vmatprep.subr.mxu0 0.0
    %332 = vmatpush2.msra.mxu0 0.0
    %333 = vmatprep.subr.mxu0 0.0
    %334 = vmatpush2.msra.mxu0 0.0
    %335 = vmatprep.subr.mxu0 0.0
    %336 = vmatpush2.msra.mxu0 0.0
    %337 = vmatprep.subr.mxu0 0.0
    %338 = vmatpush2.msra.mxu0 0.0
    %339 = vmatprep.subr.mxu0 0.0
    %340 = vmatpush2.msra.mxu0 0.0
    %341 = vmatprep.subr.mxu0 0.0
    %342 = vmatpush2.msra.mxu0 0.0
    %343 = vmatprep.subr.mxu0 0.0
    %344 = vmatpush2.msra.mxu0 0.0
    %345 = vmatprep.subr.mxu0 0.0
    %346 = vmatpush2.msra.mxu0 0.0
    %347 = vmatprep.subr.mxu0 0.0
    %348 = vmatpush2.msra.mxu0 0.0
    %349 = vmatprep.mubr.f32.mxu0 0.0
    %v350 = vand.u32 %v32, 4294901760
    %351 = vmatmul.mubr.f32.gmra.mxu0 %v350
    %v352 = vpop.f32.mrf.mxu0
    %v353 = vadd.f32 %v150, %v352
    %v354 = vpop.f32.mrf.mxu0
    %v355 = vadd.f32 %v152, %v354
    %356 = vmatprep.mubr.f32.mxu0 0.0
    %v357 = vand.u32 %v35, 4294901760
    %358 = vmatmul.mubr.f32.gmra.mxu0 %v357
    %v359 = vpop.f32.mrf.mxu0
    %v360 = vadd.f32 %v161, %v359
    %v361 = vpop.f32.mrf.mxu0
    %v362 = vadd.f32 %v163, %v361
    %363 = vmatprep.mubr.f32.mxu0 0.0
    %v364 = vand.u32 %v38, 4294901760
    %365 = vmatmul.mubr.f32.gmra.mxu0 %v364
    %v366 = vpop.f32.mrf.mxu0
    %v367 = vadd.f32 %v172, %v366
    %v368 = vpop.f32.mrf.mxu0
    %v369 = vadd.f32 %v174, %v368
    %370 = vmatprep.mubr.f32.mxu0 0.0
    %v371 = vand.u32 %v41, 4294901760
    %372 = vmatmul.mubr.f32.gmra.mxu0 %v371
    %v373 = vpop.f32.mrf.mxu0
    %v374 = vadd.f32 %v183, %v373
    %v375 = vpop.f32.mrf.mxu0
    %v376 = vadd.f32 %v185, %v375
    %377 = vmatprep.mubr.f32.mxu0 0.0
    %v378 = vand.u32 %v44, 4294901760
    %379 = vmatmul.mubr.f32.gmra.mxu0 %v378
    %v380 = vpop.f32.mrf.mxu0
    %v381 = vadd.f32 %v194, %v380
    %v382 = vpop.f32.mrf.mxu0
    %v383 = vadd.f32 %v196, %v382
    %384 = vmatprep.mubr.f32.mxu0 0.0
    %v385 = vand.u32 %v47, 4294901760
    %386 = vmatmul.mubr.f32.gmra.mxu0 %v385
    %v387 = vpop.f32.mrf.mxu0
    %v388 = vadd.f32 %v205, %v387
    %v389 = vpop.f32.mrf.mxu0
    %v390 = vadd.f32 %v207, %v389
    %391 = vmatprep.mubr.f32.mxu0 0.0
    %v392 = vand.u32 %v50, 4294901760
    %393 = vmatmul.mubr.f32.gmra.mxu0 %v392
    %v394 = vpop.f32.mrf.mxu0
    %v395 = vadd.f32 %v216, %v394
    %v396 = vpop.f32.mrf.mxu0
    %v397 = vadd.f32 %v218, %v396
    %398 = vmatprep.mubr.f32.mxu0 0.0
    %v399 = vand.u32 %v53, 4294901760
    %400 = vmatmul.mubr.f32.gmra.mxu0 %v399
    %v401 = vpop.f32.mrf.mxu0
    %v402 = vadd.f32 %v227, %v401
    %v403 = vpop.f32.mrf.mxu0
    %v404 = vadd.f32 %v229, %v403
    %405 = vmatprep.mubr.f32.mxu0 0.0
    %v406 = vand.u32 %v56, 4294901760
    %407 = vmatmul.mubr.f32.gmra.mxu0 %v406
    %v408 = vpop.f32.mrf.mxu0
    %v409 = vadd.f32 %v238, %v408
    %v410 = vpop.f32.mrf.mxu0
    %v411 = vadd.f32 %v240, %v410
    %412 = vmatprep.mubr.f32.mxu0 0.0
    %v413 = vand.u32 %v59, 4294901760
    %414 = vmatmul.mubr.f32.gmra.mxu0 %v413
    %v415 = vpop.f32.mrf.mxu0
    %v416 = vadd.f32 %v249, %v415
    %v417 = vpop.f32.mrf.mxu0
    %v418 = vadd.f32 %v251, %v417
    %419 = vmatprep.mubr.f32.mxu0 0.0
    %v420 = vand.u32 %v62, 4294901760
    %421 = vmatmul.mubr.f32.gmra.mxu0 %v420
    %v422 = vpop.f32.mrf.mxu0
    %v423 = vadd.f32 %v260, %v422
    %v424 = vpop.f32.mrf.mxu0
    %v425 = vadd.f32 %v262, %v424
    %426 = vmatprep.mubr.f32.mxu0 0.0
    %v427 = vand.u32 %v65, 4294901760
    %428 = vmatmul.mubr.f32.gmra.mxu0 %v427
    %v429 = vpop.f32.mrf.mxu0
    %v430 = vadd.f32 %v271, %v429
    %v431 = vpop.f32.mrf.mxu0
    %v432 = vadd.f32 %v273, %v431
    %433 = vdwg.mxu0
    %434 = vmatprep.subr.mxu0 0.0
    %435 = vmatpush1.msra.mxu0 0.0
    %436 = vmatprep.subr.mxu0 0.0
    %437 = vmatpush1.msra.mxu0 0.0
    %438 = vmatprep.subr.mxu0 0.0
    %439 = vmatpush1.msra.mxu0 0.0
    %440 = vmatprep.subr.mxu0 0.0
    %441 = vmatpush1.msra.mxu0 0.0
    %442 = vmatprep.subr.mxu0 0.0
    %443 = vmatpush1.msra.mxu0 0.0
    %444 = vmatprep.subr.mxu0 0.0
    %445 = vmatpush1.msra.mxu0 0.0
    %446 = vmatprep.subr.mxu0 0.0
    %447 = vmatpush1.msra.mxu0 0.0
    %448 = vmatprep.subr.mxu0 0.0
    %449 = vmatpush1.msra.mxu0 0.0
    %450 = vmatprep.subr.mxu0 0.0
    %451 = vmatpush1.msra.mxu0 0.0
    %452 = vmatprep.subr.mxu0 0.0
    %453 = vmatpush1.msra.mxu0 0.0
    %454 = vmatprep.subr.mxu0 0.0
    %455 = vmatpush1.msra.mxu0 0.0
    %456 = vmatprep.subr.mxu0 0.0
    %457 = vmatpush1.msra.mxu0 0.0
    %458 = vmatprep.subr.mxu0 0.0
    %459 = vmatpush1.msra.mxu0 0.0
    %460 = vmatprep.subr.mxu0 0.0
    %461 = vmatpush1.msra.mxu0 0.0
    %462 = vmatprep.subr.mxu0 0.0
    %463 = vmatpush1.msra.mxu0 0.0
    %v464 = vand.u32 %v70, 4294901760
    %v465 = vsub.f32 %v70, %v464
    %466 = vmatprep.subr.mxu0 %v465
    %v467 = vand.u32 %v68, 4294901760
    %v468 = vsub.f32 %v68, %v467
    %469 = vmatpush1.msra.mxu0 %v468
    %470 = vmatprep.subr.mxu0 0.0
    %471 = vmatpush2.msra.mxu0 0.0
    %472 = vmatprep.subr.mxu0 0.0
    %473 = vmatpush2.msra.mxu0 0.0
    %474 = vmatprep.subr.mxu0 0.0
    %475 = vmatpush2.msra.mxu0 0.0
    %476 = vmatprep.subr.mxu0 0.0
    %477 = vmatpush2.msra.mxu0 0.0
    %478 = vmatprep.subr.mxu0 0.0
    %479 = vmatpush2.msra.mxu0 0.0
    %480 = vmatprep.subr.mxu0 0.0
    %481 = vmatpush2.msra.mxu0 0.0
    %482 = vmatprep.subr.mxu0 0.0
    %483 = vmatpush2.msra.mxu0 0.0
    %484 = vmatprep.subr.mxu0 0.0
    %485 = vmatpush2.msra.mxu0 0.0
    %486 = vmatprep.subr.mxu0 0.0
    %487 = vmatpush2.msra.mxu0 0.0
    %488 = vmatprep.subr.mxu0 0.0
    %489 = vmatpush2.msra.mxu0 0.0
    %490 = vmatprep.subr.mxu0 0.0
    %491 = vmatpush2.msra.mxu0 0.0
    %492 = vmatprep.subr.mxu0 0.0
    %493 = vmatpush2.msra.mxu0 0.0
    %494 = vmatprep.subr.mxu0 0.0
    %495 = vmatpush2.msra.mxu0 0.0
    %496 = vmatprep.subr.mxu0 0.0
    %497 = vmatpush2.msra.mxu0 0.0
    %498 = vmatprep.subr.mxu0 0.0
    %499 = vmatpush2.msra.mxu0 0.0
    %500 = vmatprep.subr.mxu0 0.0
    %501 = vmatpush2.msra.mxu0 0.0
    %502 = vmatprep.mubr.f32.mxu0 0.0
    %v503 = vand.u32 %v32, 4294901760
    %v504 = vsub.f32 %v32, %v503
    %505 = vmatmul.mubr.f32.gmra.mxu0 %v504
    %v506 = vpop.f32.mrf.mxu0
    %v507 = vadd.f32 %v353, %v506
    %v508 = vpop.f32.mrf.mxu0
    %v509 = vadd.f32 %v355, %v508
    %510 = vmatprep.mubr.f32.mxu0 0.0
    %v511 = vand.u32 %v35, 4294901760
    %v512 = vsub.f32 %v35, %v511
    %513 = vmatmul.mubr.f32.gmra.mxu0 %v512
    %v514 = vpop.f32.mrf.mxu0
    %v515 = vadd.f32 %v360, %v514
    %v516 = vpop.f32.mrf.mxu0
    %v517 = vadd.f32 %v362, %v516
    %518 = vmatprep.mubr.f32.mxu0 0.0
    %v519 = vand.u32 %v38, 4294901760
    %v520 = vsub.f32 %v38, %v519
    %521 = vmatmul.mubr.f32.gmra.mxu0 %v520
    %v522 = vpop.f32.mrf.mxu0
    %v523 = vadd.f32 %v367, %v522
    %v524 = vpop.f32.mrf.mxu0
    %v525 = vadd.f32 %v369, %v524
    %526 = vmatprep.mubr.f32.mxu0 0.0
    %v527 = vand.u32 %v41, 4294901760
    %v528 = vsub.f32 %v41, %v527
    %529 = vmatmul.mubr.f32.gmra.mxu0 %v528
    %v530 = vpop.f32.mrf.mxu0
    %v531 = vadd.f32 %v374, %v530
    %v532 = vpop.f32.mrf.mxu0
    %v533 = vadd.f32 %v376, %v532
    %534 = vmatprep.mubr.f32.mxu0 0.0
    %v535 = vand.u32 %v44, 4294901760
    %v536 = vsub.f32 %v44, %v535
    %537 = vmatmul.mubr.f32.gmra.mxu0 %v536
    %v538 = vpop.f32.mrf.mxu0
    %v539 = vadd.f32 %v381, %v538
    %v540 = vpop.f32.mrf.mxu0
    %v541 = vadd.f32 %v383, %v540
    %542 = vmatprep.mubr.f32.mxu0 0.0
    %v543 = vand.u32 %v47, 4294901760
    %v544 = vsub.f32 %v47, %v543
    %545 = vmatmul.mubr.f32.gmra.mxu0 %v544
    %v546 = vpop.f32.mrf.mxu0
    %v547 = vadd.f32 %v388, %v546
    %v548 = vpop.f32.mrf.mxu0
    %v549 = vadd.f32 %v390, %v548
    %550 = vmatprep.mubr.f32.mxu0 0.0
    %v551 = vand.u32 %v50, 4294901760
    %v552 = vsub.f32 %v50, %v551
    %553 = vmatmul.mubr.f32.gmra.mxu0 %v552
    %v554 = vpop.f32.mrf.mxu0
    %v555 = vadd.f32 %v395, %v554
    %v556 = vpop.f32.mrf.mxu0
    %v557 = vadd.f32 %v397, %v556
    %558 = vmatprep.mubr.f32.mxu0 0.0
    %v559 = vand.u32 %v53, 4294901760
    %v560 = vsub.f32 %v53, %v559
    %561 = vmatmul.mubr.f32.gmra.mxu0 %v560
    %v562 = vpop.f32.mrf.mxu0
    %v563 = vadd.f32 %v402, %v562
    %v564 = vpop.f32.mrf.mxu0
    %v565 = vadd.f32 %v404, %v564
    %566 = vmatprep.mubr.f32.mxu0 0.0
    %v567 = vand.u32 %v56, 4294901760
    %v568 = vsub.f32 %v56, %v567
    %569 = vmatmul.mubr.f32.gmra.mxu0 %v568
    %v570 = vpop.f32.mrf.mxu0
    %v571 = vadd.f32 %v409, %v570
    %v572 = vpop.f32.mrf.mxu0
    %v573 = vadd.f32 %v411, %v572
    %574 = vmatprep.mubr.f32.mxu0 0.0
    %v575 = vand.u32 %v59, 4294901760
    %v576 = vsub.f32 %v59, %v575
    %577 = vmatmul.mubr.f32.gmra.mxu0 %v576
    %v578 = vpop.f32.mrf.mxu0
    %v579 = vadd.f32 %v416, %v578
    %v580 = vpop.f32.mrf.mxu0
    %v581 = vadd.f32 %v418, %v580
    %582 = vmatprep.mubr.f32.mxu0 0.0
    %v583 = vand.u32 %v62, 4294901760
    %v584 = vsub.f32 %v62, %v583
    %585 = vmatmul.mubr.f32.gmra.mxu0 %v584
    %v586 = vpop.f32.mrf.mxu0
    %v587 = vadd.f32 %v423, %v586
    %v588 = vpop.f32.mrf.mxu0
    %v589 = vadd.f32 %v425, %v588
    %590 = vmatprep.mubr.f32.mxu0 0.0
    %v591 = vand.u32 %v65, 4294901760
    %v592 = vsub.f32 %v65, %v591
    %593 = vmatmul.mubr.f32.gmra.mxu0 %v592
    %v594 = vpop.f32.mrf.mxu0
    %v595 = vadd.f32 %v430, %v594
    %v596 = vpop.f32.mrf.mxu0
    %v597 = vadd.f32 %v432, %v596
    %598 = vdwg.mxu0
    %599 = vmatprep.subr.mxu0 0.0
    %600 = vmatpush1.msra.mxu0 0.0
    %601 = vmatprep.subr.mxu0 0.0
    %602 = vmatpush1.msra.mxu0 0.0
    %603 = vmatprep.subr.mxu0 0.0
    %604 = vmatpush1.msra.mxu0 0.0
    %605 = vmatprep.subr.mxu0 0.0
    %606 = vmatpush1.msra.mxu0 0.0
    %607 = vmatprep.subr.mxu0 0.0
    %608 = vmatpush1.msra.mxu0 0.0
    %609 = vmatprep.subr.mxu0 0.0
    %610 = vmatpush1.msra.mxu0 0.0
    %611 = vmatprep.subr.mxu0 0.0
    %612 = vmatpush1.msra.mxu0 0.0
    %613 = vmatprep.subr.mxu0 0.0
    %614 = vmatpush1.msra.mxu0 0.0
    %615 = vmatprep.subr.mxu0 0.0
    %616 = vmatpush1.msra.mxu0 0.0
    %617 = vmatprep.subr.mxu0 0.0
    %618 = vmatpush1.msra.mxu0 0.0
    %619 = vmatprep.subr.mxu0 0.0
    %620 = vmatpush1.msra.mxu0 0.0
    %621 = vmatprep.subr.mxu0 0.0
    %622 = vmatpush1.msra.mxu0 0.0
    %623 = vmatprep.subr.mxu0 0.0
    %624 = vmatpush1.msra.mxu0 0.0
    %625 = vmatprep.subr.mxu0 0.0
    %626 = vmatpush1.msra.mxu0 0.0
    %627 = vmatprep.subr.mxu0 0.0
    %628 = vmatpush1.msra.mxu0 0.0
    %v629 = vand.u32 %v70, 4294901760
    %630 = vmatprep.subr.mxu0 %v629
    %v631 = vand.u32 %v68, 4294901760
    %632 = vmatpush1.msra.mxu0 %v631
    %633 = vmatprep.subr.mxu0 0.0
    %634 = vmatpush2.msra.mxu0 0.0
    %635 = vmatprep.subr.mxu0 0.0
    %636 = vmatpush2.msra.mxu0 0.0
    %637 = vmatprep.subr.mxu0 0.0
    %638 = vmatpush2.msra.mxu0 0.0
    %639 = vmatprep.subr.mxu0 0.0
    %640 = vmatpush2.msra.mxu0 0.0
    %641 = vmatprep.subr.mxu0 0.0
    %642 = vmatpush2.msra.mxu0 0.0
    %643 = vmatprep.subr.mxu0 0.0
    %644 = vmatpush2.msra.mxu0 0.0
    %645 = vmatprep.subr.mxu0 0.0
    %646 = vmatpush2.msra.mxu0 0.0
    %647 = vmatprep.subr.mxu0 0.0
    %648 = vmatpush2.msra.mxu0 0.0
    %649 = vmatprep.subr.mxu0 0.0
    %650 = vmatpush2.msra.mxu0 0.0
    %651 = vmatprep.subr.mxu0 0.0
    %652 = vmatpush2.msra.mxu0 0.0
    %653 = vmatprep.subr.mxu0 0.0
    %654 = vmatpush2.msra.mxu0 0.0
    %655 = vmatprep.subr.mxu0 0.0
    %656 = vmatpush2.msra.mxu0 0.0
    %657 = vmatprep.subr.mxu0 0.0
    %658 = vmatpush2.msra.mxu0 0.0
    %659 = vmatprep.subr.mxu0 0.0
    %660 = vmatpush2.msra.mxu0 0.0
    %661 = vmatprep.subr.mxu0 0.0
    %662 = vmatpush2.msra.mxu0 0.0
    %663 = vmatprep.subr.mxu0 0.0
    %664 = vmatpush2.msra.mxu0 0.0
    %665 = vmatprep.mubr.f32.mxu0 0.0
    %v666 = vand.u32 %v32, 4294901760
    %v667 = vsub.f32 %v32, %v666
    %v668 = vand.u32 %v667, 4294901760
    %669 = vmatmul.mubr.f32.gmra.mxu0 %v668
    %v670 = vpop.f32.mrf.mxu0
    %v671 = vadd.f32 %v507, %v670
    %v672 = vpop.f32.mrf.mxu0
    %v673 = vadd.f32 %v509, %v672
    %674 = vmatprep.mubr.f32.mxu0 0.0
    %v675 = vand.u32 %v35, 4294901760
    %v676 = vsub.f32 %v35, %v675
    %v677 = vand.u32 %v676, 4294901760
    %678 = vmatmul.mubr.f32.gmra.mxu0 %v677
    %v679 = vpop.f32.mrf.mxu0
    %v680 = vadd.f32 %v515, %v679
    %v681 = vpop.f32.mrf.mxu0
    %v682 = vadd.f32 %v517, %v681
    %683 = vmatprep.mubr.f32.mxu0 0.0
    %v684 = vand.u32 %v38, 4294901760
    %v685 = vsub.f32 %v38, %v684
    %v686 = vand.u32 %v685, 4294901760
    %687 = vmatmul.mubr.f32.gmra.mxu0 %v686
    %v688 = vpop.f32.mrf.mxu0
    %v689 = vadd.f32 %v523, %v688
    %v690 = vpop.f32.mrf.mxu0
    %v691 = vadd.f32 %v525, %v690
    %692 = vmatprep.mubr.f32.mxu0 0.0
    %v693 = vand.u32 %v41, 4294901760
    %v694 = vsub.f32 %v41, %v693
    %v695 = vand.u32 %v694, 4294901760
    %696 = vmatmul.mubr.f32.gmra.mxu0 %v695
    %v697 = vpop.f32.mrf.mxu0
    %v698 = vadd.f32 %v531, %v697
    %v699 = vpop.f32.mrf.mxu0
    %v700 = vadd.f32 %v533, %v699
    %701 = vmatprep.mubr.f32.mxu0 0.0
    %v702 = vand.u32 %v44, 4294901760
    %v703 = vsub.f32 %v44, %v702
    %v704 = vand.u32 %v703, 4294901760
    %705 = vmatmul.mubr.f32.gmra.mxu0 %v704
    %v706 = vpop.f32.mrf.mxu0
    %v707 = vadd.f32 %v539, %v706
    %v708 = vpop.f32.mrf.mxu0
    %v709 = vadd.f32 %v541, %v708
    %710 = vmatprep.mubr.f32.mxu0 0.0
    %v711 = vand.u32 %v47, 4294901760
    %v712 = vsub.f32 %v47, %v711
    %v713 = vand.u32 %v712, 4294901760
    %714 = vmatmul.mubr.f32.gmra.mxu0 %v713
    %v715 = vpop.f32.mrf.mxu0
    %v716 = vadd.f32 %v547, %v715
    %v717 = vpop.f32.mrf.mxu0
    %v718 = vadd.f32 %v549, %v717
    %719 = vmatprep.mubr.f32.mxu0 0.0
    %v720 = vand.u32 %v50, 4294901760
    %v721 = vsub.f32 %v50, %v720
    %v722 = vand.u32 %v721, 4294901760
    %723 = vmatmul.mubr.f32.gmra.mxu0 %v722
    %v724 = vpop.f32.mrf.mxu0
    %v725 = vadd.f32 %v555, %v724
    %v726 = vpop.f32.mrf.mxu0
    %v727 = vadd.f32 %v557, %v726
    %728 = vmatprep.mubr.f32.mxu0 0.0
    %v729 = vand.u32 %v53, 4294901760
    %v730 = vsub.f32 %v53, %v729
    %v731 = vand.u32 %v730, 4294901760
    %732 = vmatmul.mubr.f32.gmra.mxu0 %v731
    %v733 = vpop.f32.mrf.mxu0
    %v734 = vadd.f32 %v563, %v733
    %v735 = vpop.f32.mrf.mxu0
    %v736 = vadd.f32 %v565, %v735
    %737 = vmatprep.mubr.f32.mxu0 0.0
    %v738 = vand.u32 %v56, 4294901760
    %v739 = vsub.f32 %v56, %v738
    %v740 = vand.u32 %v739, 4294901760
    %741 = vmatmul.mubr.f32.gmra.mxu0 %v740
    %v742 = vpop.f32.mrf.mxu0
    %v743 = vadd.f32 %v571, %v742
    %v744 = vpop.f32.mrf.mxu0
    %v745 = vadd.f32 %v573, %v744
    %746 = vmatprep.mubr.f32.mxu0 0.0
    %v747 = vand.u32 %v59, 4294901760
    %v748 = vsub.f32 %v59, %v747
    %v749 = vand.u32 %v748, 4294901760
    %750 = vmatmul.mubr.f32.gmra.mxu0 %v749
    %v751 = vpop.f32.mrf.mxu0
    %v752 = vadd.f32 %v579, %v751
    %v753 = vpop.f32.mrf.mxu0
    %v754 = vadd.f32 %v581, %v753
    %755 = vmatprep.mubr.f32.mxu0 0.0
    %v756 = vand.u32 %v62, 4294901760
    %v757 = vsub.f32 %v62, %v756
    %v758 = vand.u32 %v757, 4294901760
    %759 = vmatmul.mubr.f32.gmra.mxu0 %v758
    %v760 = vpop.f32.mrf.mxu0
    %v761 = vadd.f32 %v587, %v760
    %v762 = vpop.f32.mrf.mxu0
    %v763 = vadd.f32 %v589, %v762
    %764 = vmatprep.mubr.f32.mxu0 0.0
    %v765 = vand.u32 %v65, 4294901760
    %v766 = vsub.f32 %v65, %v765
    %v767 = vand.u32 %v766, 4294901760
    %768 = vmatmul.mubr.f32.gmra.mxu0 %v767
    %v769 = vpop.f32.mrf.mxu0
    %v770 = vadd.f32 %v595, %v769
    %v771 = vpop.f32.mrf.mxu0
    %v772 = vadd.f32 %v597, %v771
    %773 = vdwg.mxu0
    %774 = vmatprep.subr.mxu0 0.0
    %775 = vmatpush1.msra.mxu0 0.0
    %776 = vmatprep.subr.mxu0 0.0
    %777 = vmatpush1.msra.mxu0 0.0
    %778 = vmatprep.subr.mxu0 0.0
    %779 = vmatpush1.msra.mxu0 0.0
    %780 = vmatprep.subr.mxu0 0.0
    %781 = vmatpush1.msra.mxu0 0.0
    %782 = vmatprep.subr.mxu0 0.0
    %783 = vmatpush1.msra.mxu0 0.0
    %784 = vmatprep.subr.mxu0 0.0
    %785 = vmatpush1.msra.mxu0 0.0
    %786 = vmatprep.subr.mxu0 0.0
    %787 = vmatpush1.msra.mxu0 0.0
    %788 = vmatprep.subr.mxu0 0.0
    %789 = vmatpush1.msra.mxu0 0.0
    %790 = vmatprep.subr.mxu0 0.0
    %791 = vmatpush1.msra.mxu0 0.0
    %792 = vmatprep.subr.mxu0 0.0
    %793 = vmatpush1.msra.mxu0 0.0
    %794 = vmatprep.subr.mxu0 0.0
    %795 = vmatpush1.msra.mxu0 0.0
    %796 = vmatprep.subr.mxu0 0.0
    %797 = vmatpush1.msra.mxu0 0.0
    %798 = vmatprep.subr.mxu0 0.0
    %799 = vmatpush1.msra.mxu0 0.0
    %800 = vmatprep.subr.mxu0 0.0
    %801 = vmatpush1.msra.mxu0 0.0
    %802 = vmatprep.subr.mxu0 0.0
    %803 = vmatpush1.msra.mxu0 0.0
    %v804 = vand.u32 %v70, 4294901760
    %v805 = vsub.f32 %v70, %v804
    %v806 = vand.u32 %v805, 4294901760
    %807 = vmatprep.subr.mxu0 %v806
    %v808 = vand.u32 %v68, 4294901760
    %v809 = vsub.f32 %v68, %v808
    %v810 = vand.u32 %v809, 4294901760
    %811 = vmatpush1.msra.mxu0 %v810
    %812 = vmatprep.subr.mxu0 0.0
    %813 = vmatpush2.msra.mxu0 0.0
    %814 = vmatprep.subr.mxu0 0.0
    %815 = vmatpush2.msra.mxu0 0.0
    %816 = vmatprep.subr.mxu0 0.0
    %817 = vmatpush2.msra.mxu0 0.0
    %818 = vmatprep.subr.mxu0 0.0
    %819 = vmatpush2.msra.mxu0 0.0
    %820 = vmatprep.subr.mxu0 0.0
    %821 = vmatpush2.msra.mxu0 0.0
    %822 = vmatprep.subr.mxu0 0.0
    %823 = vmatpush2.msra.mxu0 0.0
    %824 = vmatprep.subr.mxu0 0.0
    %825 = vmatpush2.msra.mxu0 0.0
    %826 = vmatprep.subr.mxu0 0.0
    %827 = vmatpush2.msra.mxu0 0.0
    %828 = vmatprep.subr.mxu0 0.0
    %829 = vmatpush2.msra.mxu0 0.0
    %830 = vmatprep.subr.mxu0 0.0
    %831 = vmatpush2.msra.mxu0 0.0
    %832 = vmatprep.subr.mxu0 0.0
    %833 = vmatpush2.msra.mxu0 0.0
    %834 = vmatprep.subr.mxu0 0.0
    %835 = vmatpush2.msra.mxu0 0.0
    %836 = vmatprep.subr.mxu0 0.0
    %837 = vmatpush2.msra.mxu0 0.0
    %838 = vmatprep.subr.mxu0 0.0
    %839 = vmatpush2.msra.mxu0 0.0
    %840 = vmatprep.subr.mxu0 0.0
    %841 = vmatpush2.msra.mxu0 0.0
    %842 = vmatprep.subr.mxu0 0.0
    %843 = vmatpush2.msra.mxu0 0.0
    %844 = vmatprep.mubr.f32.mxu0 0.0
    %v845 = vand.u32 %v32, 4294901760
    %846 = vmatmul.mubr.f32.gmra.mxu0 %v845
    %v847 = vpop.f32.mrf.mxu0
    %v848 = vadd.f32 %v671, %v847
    %v849 = vpop.f32.mrf.mxu0
    %v850 = vadd.f32 %v673, %v849
    %851 = vmatprep.mubr.f32.mxu0 0.0
    %v852 = vand.u32 %v35, 4294901760
    %853 = vmatmul.mubr.f32.gmra.mxu0 %v852
    %v854 = vpop.f32.mrf.mxu0
    %v855 = vadd.f32 %v680, %v854
    %v856 = vpop.f32.mrf.mxu0
    %v857 = vadd.f32 %v682, %v856
    %858 = vmatprep.mubr.f32.mxu0 0.0
    %v859 = vand.u32 %v38, 4294901760
    %860 = vmatmul.mubr.f32.gmra.mxu0 %v859
    %v861 = vpop.f32.mrf.mxu0
    %v862 = vadd.f32 %v689, %v861
    %v863 = vpop.f32.mrf.mxu0
    %v864 = vadd.f32 %v691, %v863
    %865 = vmatprep.mubr.f32.mxu0 0.0
    %v866 = vand.u32 %v41, 4294901760
    %867 = vmatmul.mubr.f32.gmra.mxu0 %v866
    %v868 = vpop.f32.mrf.mxu0
    %v869 = vadd.f32 %v698, %v868
    %v870 = vpop.f32.mrf.mxu0
    %v871 = vadd.f32 %v700, %v870
    %872 = vmatprep.mubr.f32.mxu0 0.0
    %v873 = vand.u32 %v44, 4294901760
    %874 = vmatmul.mubr.f32.gmra.mxu0 %v873
    %v875 = vpop.f32.mrf.mxu0
    %v876 = vadd.f32 %v707, %v875
    %v877 = vpop.f32.mrf.mxu0
    %v878 = vadd.f32 %v709, %v877
    %879 = vmatprep.mubr.f32.mxu0 0.0
    %v880 = vand.u32 %v47, 4294901760
    %881 = vmatmul.mubr.f32.gmra.mxu0 %v880
    %v882 = vpop.f32.mrf.mxu0
    %v883 = vadd.f32 %v716, %v882
    %v884 = vpop.f32.mrf.mxu0
    %v885 = vadd.f32 %v718, %v884
    %886 = vmatprep.mubr.f32.mxu0 0.0
    %v887 = vand.u32 %v50, 4294901760
    %888 = vmatmul.mubr.f32.gmra.mxu0 %v887
    %v889 = vpop.f32.mrf.mxu0
    %v890 = vadd.f32 %v725, %v889
    %v891 = vpop.f32.mrf.mxu0
    %v892 = vadd.f32 %v727, %v891
    %893 = vmatprep.mubr.f32.mxu0 0.0
    %v894 = vand.u32 %v53, 4294901760
    %895 = vmatmul.mubr.f32.gmra.mxu0 %v894
    %v896 = vpop.f32.mrf.mxu0
    %v897 = vadd.f32 %v734, %v896
    %v898 = vpop.f32.mrf.mxu0
    %v899 = vadd.f32 %v736, %v898
    %900 = vmatprep.mubr.f32.mxu0 0.0
    %v901 = vand.u32 %v56, 4294901760
    %902 = vmatmul.mubr.f32.gmra.mxu0 %v901
    %v903 = vpop.f32.mrf.mxu0
    %v904 = vadd.f32 %v743, %v903
    %v905 = vpop.f32.mrf.mxu0
    %v906 = vadd.f32 %v745, %v905
    %907 = vmatprep.mubr.f32.mxu0 0.0
    %v908 = vand.u32 %v59, 4294901760
    %909 = vmatmul.mubr.f32.gmra.mxu0 %v908
    %v910 = vpop.f32.mrf.mxu0
    %v911 = vadd.f32 %v752, %v910
    %v912 = vpop.f32.mrf.mxu0
    %v913 = vadd.f32 %v754, %v912
    %914 = vmatprep.mubr.f32.mxu0 0.0
    %v915 = vand.u32 %v62, 4294901760
    %916 = vmatmul.mubr.f32.gmra.mxu0 %v915
    %v917 = vpop.f32.mrf.mxu0
    %v918 = vadd.f32 %v761, %v917
    %v919 = vpop.f32.mrf.mxu0
    %v920 = vadd.f32 %v763, %v919
    %921 = vmatprep.mubr.f32.mxu0 0.0
    %v922 = vand.u32 %v65, 4294901760
    %923 = vmatmul.mubr.f32.gmra.mxu0 %v922
    %v924 = vpop.f32.mrf.mxu0
    %v925 = vadd.f32 %v770, %v924
    %v926 = vpop.f32.mrf.mxu0
    %v927 = vadd.f32 %v772, %v926
    %928 = vdwg.mxu0
    %929 = vmatprep.subr.mxu0 0.0
    %930 = vmatpush1.msra.mxu0 0.0
    %931 = vmatprep.subr.mxu0 0.0
    %932 = vmatpush1.msra.mxu0 0.0
    %933 = vmatprep.subr.mxu0 0.0
    %934 = vmatpush1.msra.mxu0 0.0
    %935 = vmatprep.subr.mxu0 0.0
    %936 = vmatpush1.msra.mxu0 0.0
    %937 = vmatprep.subr.mxu0 0.0
    %938 = vmatpush1.msra.mxu0 0.0
    %939 = vmatprep.subr.mxu0 0.0
    %940 = vmatpush1.msra.mxu0 0.0
    %941 = vmatprep.subr.mxu0 0.0
    %942 = vmatpush1.msra.mxu0 0.0
    %943 = vmatprep.subr.mxu0 0.0
    %944 = vmatpush1.msra.mxu0 0.0
    %945 = vmatprep.subr.mxu0 0.0
    %946 = vmatpush1.msra.mxu0 0.0
    %947 = vmatprep.subr.mxu0 0.0
    %948 = vmatpush1.msra.mxu0 0.0
    %949 = vmatprep.subr.mxu0 0.0
    %950 = vmatpush1.msra.mxu0 0.0
    %951 = vmatprep.subr.mxu0 0.0
    %952 = vmatpush1.msra.mxu0 0.0
    %953 = vmatprep.subr.mxu0 0.0
    %954 = vmatpush1.msra.mxu0 0.0
    %955 = vmatprep.subr.mxu0 0.0
    %956 = vmatpush1.msra.mxu0 0.0
    %957 = vmatprep.subr.mxu0 0.0
    %958 = vmatpush1.msra.mxu0 0.0
    %v959 = vand.u32 %v70, 4294901760
    %960 = vmatprep.subr.mxu0 %v959
    %v961 = vand.u32 %v68, 4294901760
    %962 = vmatpush1.msra.mxu0 %v961
    %963 = vmatprep.subr.mxu0 0.0
    %964 = vmatpush2.msra.mxu0 0.0
    %965 = vmatprep.subr.mxu0 0.0
    %966 = vmatpush2.msra.mxu0 0.0
    %967 = vmatprep.subr.mxu0 0.0
    %968 = vmatpush2.msra.mxu0 0.0
    %969 = vmatprep.subr.mxu0 0.0
    %970 = vmatpush2.msra.mxu0 0.0
    %971 = vmatprep.subr.mxu0 0.0
    %972 = vmatpush2.msra.mxu0 0.0
    %973 = vmatprep.subr.mxu0 0.0
    %974 = vmatpush2.msra.mxu0 0.0
    %975 = vmatprep.subr.mxu0 0.0
    %976 = vmatpush2.msra.mxu0 0.0
    %977 = vmatprep.subr.mxu0 0.0
    %978 = vmatpush2.msra.mxu0 0.0
    %979 = vmatprep.subr.mxu0 0.0
    %980 = vmatpush2.msra.mxu0 0.0
    %981 = vmatprep.subr.mxu0 0.0
    %982 = vmatpush2.msra.mxu0 0.0
    %983 = vmatprep.subr.mxu0 0.0
    %984 = vmatpush2.msra.mxu0 0.0
    %985 = vmatprep.subr.mxu0 0.0
    %986 = vmatpush2.msra.mxu0 0.0
    %987 = vmatprep.subr.mxu0 0.0
    %988 = vmatpush2.msra.mxu0 0.0
    %989 = vmatprep.subr.mxu0 0.0
    %990 = vmatpush2.msra.mxu0 0.0
    %991 = vmatprep.subr.mxu0 0.0
    %992 = vmatpush2.msra.mxu0 0.0
    %993 = vmatprep.subr.mxu0 0.0
    %994 = vmatpush2.msra.mxu0 0.0
    %995 = vmatprep.mubr.f32.mxu0 0.0
    %v996 = vand.u32 %v32, 4294901760
    %997 = vmatmul.mubr.f32.gmra.mxu0 %v996
    %v998 = vpop.f32.mrf.mxu0
    %v999 = vadd.f32 %v848, %v998
    %v1000 = vpop.f32.mrf.mxu0
    %v1001 = vadd.f32 %v850, %v1000
    %1002 = vmatprep.mubr.f32.mxu0 0.0
    %v1003 = vand.u32 %v35, 4294901760
    %1004 = vmatmul.mubr.f32.gmra.mxu0 %v1003
    %v1005 = vpop.f32.mrf.mxu0
    %v1006 = vadd.f32 %v855, %v1005
    %v1007 = vpop.f32.mrf.mxu0
    %v1008 = vadd.f32 %v857, %v1007
    %1009 = vmatprep.mubr.f32.mxu0 0.0
    %v1010 = vand.u32 %v38, 4294901760
    %1011 = vmatmul.mubr.f32.gmra.mxu0 %v1010
    %v1012 = vpop.f32.mrf.mxu0
    %v1013 = vadd.f32 %v862, %v1012
    %v1014 = vpop.f32.mrf.mxu0
    %v1015 = vadd.f32 %v864, %v1014
    %1016 = vmatprep.mubr.f32.mxu0 0.0
    %v1017 = vand.u32 %v41, 4294901760
    %1018 = vmatmul.mubr.f32.gmra.mxu0 %v1017
    %v1019 = vpop.f32.mrf.mxu0
    %v1020 = vadd.f32 %v869, %v1019
    %v1021 = vpop.f32.mrf.mxu0
    %v1022 = vadd.f32 %v871, %v1021
    %1023 = vmatprep.mubr.f32.mxu0 0.0
    %v1024 = vand.u32 %v44, 4294901760
    %1025 = vmatmul.mubr.f32.gmra.mxu0 %v1024
    %v1026 = vpop.f32.mrf.mxu0
    %v1027 = vadd.f32 %v876, %v1026
    %v1028 = vpop.f32.mrf.mxu0
    %v1029 = vadd.f32 %v878, %v1028
    %1030 = vmatprep.mubr.f32.mxu0 0.0
    %v1031 = vand.u32 %v47, 4294901760
    %1032 = vmatmul.mubr.f32.gmra.mxu0 %v1031
    %v1033 = vpop.f32.mrf.mxu0
    %v1034 = vadd.f32 %v883, %v1033
    %v1035 = vpop.f32.mrf.mxu0
    %v1036 = vadd.f32 %v885, %v1035
    %1037 = vmatprep.mubr.f32.mxu0 0.0
    %v1038 = vand.u32 %v50, 4294901760
    %1039 = vmatmul.mubr.f32.gmra.mxu0 %v1038
    %v1040 = vpop.f32.mrf.mxu0
    %v1041 = vadd.f32 %v890, %v1040
    %v1042 = vpop.f32.mrf.mxu0
    %v1043 = vadd.f32 %v892, %v1042
    %1044 = vmatprep.mubr.f32.mxu0 0.0
    %v1045 = vand.u32 %v53, 4294901760
    %1046 = vmatmul.mubr.f32.gmra.mxu0 %v1045
    %v1047 = vpop.f32.mrf.mxu0
    %v1048 = vadd.f32 %v897, %v1047
    %v1049 = vpop.f32.mrf.mxu0
    %v1050 = vadd.f32 %v899, %v1049
    %1051 = vmatprep.mubr.f32.mxu0 0.0
    %v1052 = vand.u32 %v56, 4294901760
    %1053 = vmatmul.mubr.f32.gmra.mxu0 %v1052
    %v1054 = vpop.f32.mrf.mxu0
    %v1055 = vadd.f32 %v904, %v1054
    %v1056 = vpop.f32.mrf.mxu0
    %v1057 = vadd.f32 %v906, %v1056
    %1058 = vmatprep.mubr.f32.mxu0 0.0
    %v1059 = vand.u32 %v59, 4294901760
    %1060 = vmatmul.mubr.f32.gmra.mxu0 %v1059
    %v1061 = vpop.f32.mrf.mxu0
    %v1062 = vadd.f32 %v911, %v1061
    %v1063 = vpop.f32.mrf.mxu0
    %v1064 = vadd.f32 %v913, %v1063
    %1065 = vmatprep.mubr.f32.mxu0 0.0
    %v1066 = vand.u32 %v62, 4294901760
    %1067 = vmatmul.mubr.f32.gmra.mxu0 %v1066
    %v1068 = vpop.f32.mrf.mxu0
    %v1069 = vadd.f32 %v918, %v1068
    %v1070 = vpop.f32.mrf.mxu0
    %v1071 = vadd.f32 %v920, %v1070
    %1072 = vmatprep.mubr.f32.mxu0 0.0
    %v1073 = vand.u32 %v65, 4294901760
    %1074 = vmatmul.mubr.f32.gmra.mxu0 %v1073
    %v1075 = vpop.f32.mrf.mxu0
    %v1076 = vadd.f32 %v925, %v1075
    %v1077 = vpop.f32.mrf.mxu0
    %v1078 = vadd.f32 %v927, %v1077
    %1079 = vdwg.mxu0
    %1080 = vmatprep.subr.mxu0 0.0
    %1081 = vmatpush1.msra.mxu0 0.0
    %1082 = vmatprep.subr.mxu0 0.0
    %1083 = vmatpush1.msra.mxu0 0.0
    %1084 = vmatprep.subr.mxu0 0.0
    %1085 = vmatpush1.msra.mxu0 0.0
    %1086 = vmatprep.subr.mxu0 0.0
    %1087 = vmatpush1.msra.mxu0 0.0
    %1088 = vmatprep.subr.mxu0 0.0
    %1089 = vmatpush1.msra.mxu0 0.0
    %1090 = vmatprep.subr.mxu0 0.0
    %1091 = vmatpush1.msra.mxu0 0.0
    %1092 = vmatprep.subr.mxu0 0.0
    %1093 = vmatpush1.msra.mxu0 0.0
    %1094 = vmatprep.subr.mxu0 0.0
    %1095 = vmatpush1.msra.mxu0 0.0
    %1096 = vmatprep.subr.mxu0 0.0
    %1097 = vmatpush1.msra.mxu0 0.0
    %1098 = vmatprep.subr.mxu0 0.0
    %1099 = vmatpush1.msra.mxu0 0.0
    %1100 = vmatprep.subr.mxu0 0.0
    %1101 = vmatpush1.msra.mxu0 0.0
    %1102 = vmatprep.subr.mxu0 0.0
    %1103 = vmatpush1.msra.mxu0 0.0
    %1104 = vmatprep.subr.mxu0 0.0
    %1105 = vmatpush1.msra.mxu0 0.0
    %1106 = vmatprep.subr.mxu0 0.0
    %1107 = vmatpush1.msra.mxu0 0.0
    %1108 = vmatprep.subr.mxu0 0.0
    %1109 = vmatpush1.msra.mxu0 0.0
    %v1110 = vand.u32 %v74, 4294901760
    %1111 = vmatprep.subr.mxu0 %v1110
    %v1112 = vand.u32 %v72, 4294901760
    %1113 = vmatpush1.msra.mxu0 %v1112
    %1114 = vmatprep.subr.mxu0 0.0
    %1115 = vmatpush2.msra.mxu0 0.0
    %1116 = vmatprep.subr.mxu0 0.0
    %1117 = vmatpush2.msra.mxu0 0.0
    %1118 = vmatprep.subr.mxu0 0.0
    %1119 = vmatpush2.msra.mxu0 0.0
    %1120 = vmatprep.subr.mxu0 0.0
    %1121 = vmatpush2.msra.mxu0 0.0
    %1122 = vmatprep.subr.mxu0 0.0
    %1123 = vmatpush2.msra.mxu0 0.0
    %1124 = vmatprep.subr.mxu0 0.0
    %1125 = vmatpush2.msra.mxu0 0.0
    %1126 = vmatprep.subr.mxu0 0.0
    %1127 = vmatpush2.msra.mxu0 0.0
    %1128 = vmatprep.subr.mxu0 0.0
    %1129 = vmatpush2.msra.mxu0 0.0
    %1130 = vmatprep.subr.mxu0 0.0
    %1131 = vmatpush2.msra.mxu0 0.0
    %1132 = vmatprep.subr.mxu0 0.0
    %1133 = vmatpush2.msra.mxu0 0.0
    %1134 = vmatprep.subr.mxu0 0.0
    %1135 = vmatpush2.msra.mxu0 0.0
    %1136 = vmatprep.subr.mxu0 0.0
    %1137 = vmatpush2.msra.mxu0 0.0
    %1138 = vmatprep.subr.mxu0 0.0
    %1139 = vmatpush2.msra.mxu0 0.0
    %1140 = vmatprep.subr.mxu0 0.0
    %1141 = vmatpush2.msra.mxu0 0.0
    %1142 = vmatprep.subr.mxu0 0.0
    %1143 = vmatpush2.msra.mxu0 0.0
    %1144 = vmatprep.subr.mxu0 0.0
    %1145 = vmatpush2.msra.mxu0 0.0
    %1146 = vmatprep.mubr.f32.mxu0 0.0
    %v1147 = vand.u32 %v32, 4294901760
    %v1148 = vsub.f32 %v32, %v1147
    %v1149 = vand.u32 %v1148, 4294901760
    %v1150 = vsub.f32 %v1148, %v1149
    %v1151 = vand.u32 %v1150, 4294901760
    %1152 = vmatmul.mubr.f32.gmra.mxu0 %v1151
    %v1153 = vpop.f32.mrf.mxu0
    %v1154 = vadd.f32 0.0, %v1153
    %v1155 = vpop.f32.mrf.mxu0
    %v1156 = vadd.f32 0.0, %v1155
    %1157 = vmatprep.mubr.f32.mxu0 0.0
    %v1158 = vand.u32 %v35, 4294901760
    %v1159 = vsub.f32 %v35, %v1158
    %v1160 = vand.u32 %v1159, 4294901760
    %v1161 = vsub.f32 %v1159, %v1160
    %v1162 = vand.u32 %v1161, 4294901760
    %1163 = vmatmul.mubr.f32.gmra.mxu0 %v1162
    %v1164 = vpop.f32.mrf.mxu0
    %v1165 = vadd.f32 0.0, %v1164
    %v1166 = vpop.f32.mrf.mxu0
    %v1167 = vadd.f32 0.0, %v1166
    %1168 = vmatprep.mubr.f32.mxu0 0.0
    %v1169 = vand.u32 %v38, 4294901760
    %v1170 = vsub.f32 %v38, %v1169
    %v1171 = vand.u32 %v1170, 4294901760
    %v1172 = vsub.f32 %v1170, %v1171
    %v1173 = vand.u32 %v1172, 4294901760
    %1174 = vmatmul.mubr.f32.gmra.mxu0 %v1173
    %v1175 = vpop.f32.mrf.mxu0
    %v1176 = vadd.f32 0.0, %v1175
    %v1177 = vpop.f32.mrf.mxu0
    %v1178 = vadd.f32 0.0, %v1177
    %1179 = vmatprep.mubr.f32.mxu0 0.0
    %v1180 = vand.u32 %v41, 4294901760
    %v1181 = vsub.f32 %v41, %v1180
    %v1182 = vand.u32 %v1181, 4294901760
    %v1183 = vsub.f32 %v1181, %v1182
    %v1184 = vand.u32 %v1183, 4294901760
    %1185 = vmatmul.mubr.f32.gmra.mxu0 %v1184
    %v1186 = vpop.f32.mrf.mxu0
    %v1187 = vadd.f32 0.0, %v1186
    %v1188 = vpop.f32.mrf.mxu0
    %v1189 = vadd.f32 0.0, %v1188
    %1190 = vmatprep.mubr.f32.mxu0 0.0
    %v1191 = vand.u32 %v44, 4294901760
    %v1192 = vsub.f32 %v44, %v1191
    %v1193 = vand.u32 %v1192, 4294901760
    %v1194 = vsub.f32 %v1192, %v1193
    %v1195 = vand.u32 %v1194, 4294901760
    %1196 = vmatmul.mubr.f32.gmra.mxu0 %v1195
    %v1197 = vpop.f32.mrf.mxu0
    %v1198 = vadd.f32 0.0, %v1197
    %v1199 = vpop.f32.mrf.mxu0
    %v1200 = vadd.f32 0.0, %v1199
    %1201 = vmatprep.mubr.f32.mxu0 0.0
    %v1202 = vand.u32 %v47, 4294901760
    %v1203 = vsub.f32 %v47, %v1202
    %v1204 = vand.u32 %v1203, 4294901760
    %v1205 = vsub.f32 %v1203, %v1204
    %v1206 = vand.u32 %v1205, 4294901760
    %1207 = vmatmul.mubr.f32.gmra.mxu0 %v1206
    %v1208 = vpop.f32.mrf.mxu0
    %v1209 = vadd.f32 0.0, %v1208
    %v1210 = vpop.f32.mrf.mxu0
    %v1211 = vadd.f32 0.0, %v1210
    %1212 = vmatprep.mubr.f32.mxu0 0.0
    %v1213 = vand.u32 %v50, 4294901760
    %v1214 = vsub.f32 %v50, %v1213
    %v1215 = vand.u32 %v1214, 4294901760
    %v1216 = vsub.f32 %v1214, %v1215
    %v1217 = vand.u32 %v1216, 4294901760
    %1218 = vmatmul.mubr.f32.gmra.mxu0 %v1217
    %v1219 = vpop.f32.mrf.mxu0
    %v1220 = vadd.f32 0.0, %v1219
    %v1221 = vpop.f32.mrf.mxu0
    %v1222 = vadd.f32 0.0, %v1221
    %1223 = vmatprep.mubr.f32.mxu0 0.0
    %v1224 = vand.u32 %v53, 4294901760
    %v1225 = vsub.f32 %v53, %v1224
    %v1226 = vand.u32 %v1225, 4294901760
    %v1227 = vsub.f32 %v1225, %v1226
    %v1228 = vand.u32 %v1227, 4294901760
    %1229 = vmatmul.mubr.f32.gmra.mxu0 %v1228
    %v1230 = vpop.f32.mrf.mxu0
    %v1231 = vadd.f32 0.0, %v1230
    %v1232 = vpop.f32.mrf.mxu0
    %v1233 = vadd.f32 0.0, %v1232
    %1234 = vmatprep.mubr.f32.mxu0 0.0
    %v1235 = vand.u32 %v56, 4294901760
    %v1236 = vsub.f32 %v56, %v1235
    %v1237 = vand.u32 %v1236, 4294901760
    %v1238 = vsub.f32 %v1236, %v1237
    %v1239 = vand.u32 %v1238, 4294901760
    %1240 = vmatmul.mubr.f32.gmra.mxu0 %v1239
    %v1241 = vpop.f32.mrf.mxu0
    %v1242 = vadd.f32 0.0, %v1241
    %v1243 = vpop.f32.mrf.mxu0
    %v1244 = vadd.f32 0.0, %v1243
    %1245 = vmatprep.mubr.f32.mxu0 0.0
    %v1246 = vand.u32 %v59, 4294901760
    %v1247 = vsub.f32 %v59, %v1246
    %v1248 = vand.u32 %v1247, 4294901760
    %v1249 = vsub.f32 %v1247, %v1248
    %v1250 = vand.u32 %v1249, 4294901760
    %1251 = vmatmul.mubr.f32.gmra.mxu0 %v1250
    %v1252 = vpop.f32.mrf.mxu0
    %v1253 = vadd.f32 0.0, %v1252
    %v1254 = vpop.f32.mrf.mxu0
    %v1255 = vadd.f32 0.0, %v1254
    %1256 = vmatprep.mubr.f32.mxu0 0.0
    %v1257 = vand.u32 %v62, 4294901760
    %v1258 = vsub.f32 %v62, %v1257
    %v1259 = vand.u32 %v1258, 4294901760
    %v1260 = vsub.f32 %v1258, %v1259
    %v1261 = vand.u32 %v1260, 4294901760
    %1262 = vmatmul.mubr.f32.gmra.mxu0 %v1261
    %v1263 = vpop.f32.mrf.mxu0
    %v1264 = vadd.f32 0.0, %v1263
    %v1265 = vpop.f32.mrf.mxu0
    %v1266 = vadd.f32 0.0, %v1265
    %1267 = vmatprep.mubr.f32.mxu0 0.0
    %v1268 = vand.u32 %v65, 4294901760
    %v1269 = vsub.f32 %v65, %v1268
    %v1270 = vand.u32 %v1269, 4294901760
    %v1271 = vsub.f32 %v1269, %v1270
    %v1272 = vand.u32 %v1271, 4294901760
    %1273 = vmatmul.mubr.f32.gmra.mxu0 %v1272
    %v1274 = vpop.f32.mrf.mxu0
    %v1275 = vadd.f32 0.0, %v1274
    %v1276 = vpop.f32.mrf.mxu0
    %v1277 = vadd.f32 0.0, %v1276
    %1278 = vdwg.mxu0
    %1279 = vmatprep.subr.mxu0 0.0
    %1280 = vmatpush1.msra.mxu0 0.0
    %1281 = vmatprep.subr.mxu0 0.0
    %1282 = vmatpush1.msra.mxu0 0.0
    %1283 = vmatprep.subr.mxu0 0.0
    %1284 = vmatpush1.msra.mxu0 0.0
    %1285 = vmatprep.subr.mxu0 0.0
    %1286 = vmatpush1.msra.mxu0 0.0
    %1287 = vmatprep.subr.mxu0 0.0
    %1288 = vmatpush1.msra.mxu0 0.0
    %1289 = vmatprep.subr.mxu0 0.0
    %1290 = vmatpush1.msra.mxu0 0.0
    %1291 = vmatprep.subr.mxu0 0.0
    %1292 = vmatpush1.msra.mxu0 0.0
    %1293 = vmatprep.subr.mxu0 0.0
    %1294 = vmatpush1.msra.mxu0 0.0
    %1295 = vmatprep.subr.mxu0 0.0
    %1296 = vmatpush1.msra.mxu0 0.0
    %1297 = vmatprep.subr.mxu0 0.0
    %1298 = vmatpush1.msra.mxu0 0.0
    %1299 = vmatprep.subr.mxu0 0.0
    %1300 = vmatpush1.msra.mxu0 0.0
    %1301 = vmatprep.subr.mxu0 0.0
    %1302 = vmatpush1.msra.mxu0 0.0
    %1303 = vmatprep.subr.mxu0 0.0
    %1304 = vmatpush1.msra.mxu0 0.0
    %1305 = vmatprep.subr.mxu0 0.0
    %1306 = vmatpush1.msra.mxu0 0.0
    %1307 = vmatprep.subr.mxu0 0.0
    %1308 = vmatpush1.msra.mxu0 0.0
    %v1309 = vand.u32 %v74, 4294901760
    %v1310 = vsub.f32 %v74, %v1309
    %v1311 = vand.u32 %v1310, 4294901760
    %v1312 = vsub.f32 %v1310, %v1311
    %v1313 = vand.u32 %v1312, 4294901760
    %1314 = vmatprep.subr.mxu0 %v1313
    %v1315 = vand.u32 %v72, 4294901760
    %v1316 = vsub.f32 %v72, %v1315
    %v1317 = vand.u32 %v1316, 4294901760
    %v1318 = vsub.f32 %v1316, %v1317
    %v1319 = vand.u32 %v1318, 4294901760
    %1320 = vmatpush1.msra.mxu0 %v1319
    %1321 = vmatprep.subr.mxu0 0.0
    %1322 = vmatpush2.msra.mxu0 0.0
    %1323 = vmatprep.subr.mxu0 0.0
    %1324 = vmatpush2.msra.mxu0 0.0
    %1325 = vmatprep.subr.mxu0 0.0
    %1326 = vmatpush2.msra.mxu0 0.0
    %1327 = vmatprep.subr.mxu0 0.0
    %1328 = vmatpush2.msra.mxu0 0.0
    %1329 = vmatprep.subr.mxu0 0.0
    %1330 = vmatpush2.msra.mxu0 0.0
    %1331 = vmatprep.subr.mxu0 0.0
    %1332 = vmatpush2.msra.mxu0 0.0
    %1333 = vmatprep.subr.mxu0 0.0
    %1334 = vmatpush2.msra.mxu0 0.0
    %1335 = vmatprep.subr.mxu0 0.0
    %1336 = vmatpush2.msra.mxu0 0.0
    %1337 = vmatprep.subr.mxu0 0.0
    %1338 = vmatpush2.msra.mxu0 0.0
    %1339 = vmatprep.subr.mxu0 0.0
    %1340 = vmatpush2.msra.mxu0 0.0
    %1341 = vmatprep.subr.mxu0 0.0
    %1342 = vmatpush2.msra.mxu0 0.0
    %1343 = vmatprep.subr.mxu0 0.0
    %1344 = vmatpush2.msra.mxu0 0.0
    %1345 = vmatprep.subr.mxu0 0.0
    %1346 = vmatpush2.msra.mxu0 0.0
    %1347 = vmatprep.subr.mxu0 0.0
    %1348 = vmatpush2.msra.mxu0 0.0
    %1349 = vmatprep.subr.mxu0 0.0
    %1350 = vmatpush2.msra.mxu0 0.0
    %1351 = vmatprep.subr.mxu0 0.0
    %1352 = vmatpush2.msra.mxu0 0.0
    %1353 = vmatprep.mubr.f32.mxu0 0.0
    %v1354 = vand.u32 %v32, 4294901760
    %1355 = vmatmul.mubr.f32.gmra.mxu0 %v1354
    %v1356 = vpop.f32.mrf.mxu0
    %v1357 = vadd.f32 %v1154, %v1356
    %v1358 = vpop.f32.mrf.mxu0
    %v1359 = vadd.f32 %v1156, %v1358
    %1360 = vmatprep.mubr.f32.mxu0 0.0
    %v1361 = vand.u32 %v35, 4294901760
    %1362 = vmatmul.mubr.f32.gmra.mxu0 %v1361
    %v1363 = vpop.f32.mrf.mxu0
    %v1364 = vadd.f32 %v1165, %v1363
    %v1365 = vpop.f32.mrf.mxu0
    %v1366 = vadd.f32 %v1167, %v1365
    %1367 = vmatprep.mubr.f32.mxu0 0.0
    %v1368 = vand.u32 %v38, 4294901760
    %1369 = vmatmul.mubr.f32.gmra.mxu0 %v1368
    %v1370 = vpop.f32.mrf.mxu0
    %v1371 = vadd.f32 %v1176, %v1370
    %v1372 = vpop.f32.mrf.mxu0
    %v1373 = vadd.f32 %v1178, %v1372
    %1374 = vmatprep.mubr.f32.mxu0 0.0
    %v1375 = vand.u32 %v41, 4294901760
    %1376 = vmatmul.mubr.f32.gmra.mxu0 %v1375
    %v1377 = vpop.f32.mrf.mxu0
    %v1378 = vadd.f32 %v1187, %v1377
    %v1379 = vpop.f32.mrf.mxu0
    %v1380 = vadd.f32 %v1189, %v1379
    %1381 = vmatprep.mubr.f32.mxu0 0.0
    %v1382 = vand.u32 %v44, 4294901760
    %1383 = vmatmul.mubr.f32.gmra.mxu0 %v1382
    %v1384 = vpop.f32.mrf.mxu0
    %v1385 = vadd.f32 %v1198, %v1384
    %v1386 = vpop.f32.mrf.mxu0
    %v1387 = vadd.f32 %v1200, %v1386
    %1388 = vmatprep.mubr.f32.mxu0 0.0
    %v1389 = vand.u32 %v47, 4294901760
    %1390 = vmatmul.mubr.f32.gmra.mxu0 %v1389
    %v1391 = vpop.f32.mrf.mxu0
    %v1392 = vadd.f32 %v1209, %v1391
    %v1393 = vpop.f32.mrf.mxu0
    %v1394 = vadd.f32 %v1211, %v1393
    %1395 = vmatprep.mubr.f32.mxu0 0.0
    %v1396 = vand.u32 %v50, 4294901760
    %1397 = vmatmul.mubr.f32.gmra.mxu0 %v1396
    %v1398 = vpop.f32.mrf.mxu0
    %v1399 = vadd.f32 %v1220, %v1398
    %v1400 = vpop.f32.mrf.mxu0
    %v1401 = vadd.f32 %v1222, %v1400
    %1402 = vmatprep.mubr.f32.mxu0 0.0
    %v1403 = vand.u32 %v53, 4294901760
    %1404 = vmatmul.mubr.f32.gmra.mxu0 %v1403
    %v1405 = vpop.f32.mrf.mxu0
    %v1406 = vadd.f32 %v1231, %v1405
    %v1407 = vpop.f32.mrf.mxu0
    %v1408 = vadd.f32 %v1233, %v1407
    %1409 = vmatprep.mubr.f32.mxu0 0.0
    %v1410 = vand.u32 %v56, 4294901760
    %1411 = vmatmul.mubr.f32.gmra.mxu0 %v1410
    %v1412 = vpop.f32.mrf.mxu0
    %v1413 = vadd.f32 %v1242, %v1412
    %v1414 = vpop.f32.mrf.mxu0
    %v1415 = vadd.f32 %v1244, %v1414
    %1416 = vmatprep.mubr.f32.mxu0 0.0
    %v1417 = vand.u32 %v59, 4294901760
    %1418 = vmatmul.mubr.f32.gmra.mxu0 %v1417
    %v1419 = vpop.f32.mrf.mxu0
    %v1420 = vadd.f32 %v1253, %v1419
    %v1421 = vpop.f32.mrf.mxu0
    %v1422 = vadd.f32 %v1255, %v1421
    %1423 = vmatprep.mubr.f32.mxu0 0.0
    %v1424 = vand.u32 %v62, 4294901760
    %1425 = vmatmul.mubr.f32.gmra.mxu0 %v1424
    %v1426 = vpop.f32.mrf.mxu0
    %v1427 = vadd.f32 %v1264, %v1426
    %v1428 = vpop.f32.mrf.mxu0
    %v1429 = vadd.f32 %v1266, %v1428
    %1430 = vmatprep.mubr.f32.mxu0 0.0
    %v1431 = vand.u32 %v65, 4294901760
    %1432 = vmatmul.mubr.f32.gmra.mxu0 %v1431
    %v1433 = vpop.f32.mrf.mxu0
    %v1434 = vadd.f32 %v1275, %v1433
    %v1435 = vpop.f32.mrf.mxu0
    %v1436 = vadd.f32 %v1277, %v1435
    %1437 = vdwg.mxu0
    %1438 = vmatprep.subr.mxu0 0.0
    %1439 = vmatpush1.msra.mxu0 0.0
    %1440 = vmatprep.subr.mxu0 0.0
    %1441 = vmatpush1.msra.mxu0 0.0
    %1442 = vmatprep.subr.mxu0 0.0
    %1443 = vmatpush1.msra.mxu0 0.0
    %1444 = vmatprep.subr.mxu0 0.0
    %1445 = vmatpush1.msra.mxu0 0.0
    %1446 = vmatprep.subr.mxu0 0.0
    %1447 = vmatpush1.msra.mxu0 0.0
    %1448 = vmatprep.subr.mxu0 0.0
    %1449 = vmatpush1.msra.mxu0 0.0
    %1450 = vmatprep.subr.mxu0 0.0
    %1451 = vmatpush1.msra.mxu0 0.0
    %1452 = vmatprep.subr.mxu0 0.0
    %1453 = vmatpush1.msra.mxu0 0.0
    %1454 = vmatprep.subr.mxu0 0.0
    %1455 = vmatpush1.msra.mxu0 0.0
    %1456 = vmatprep.subr.mxu0 0.0
    %1457 = vmatpush1.msra.mxu0 0.0
    %1458 = vmatprep.subr.mxu0 0.0
    %1459 = vmatpush1.msra.mxu0 0.0
    %1460 = vmatprep.subr.mxu0 0.0
    %1461 = vmatpush1.msra.mxu0 0.0
    %1462 = vmatprep.subr.mxu0 0.0
    %1463 = vmatpush1.msra.mxu0 0.0
    %1464 = vmatprep.subr.mxu0 0.0
    %1465 = vmatpush1.msra.mxu0 0.0
    %1466 = vmatprep.subr.mxu0 0.0
    %1467 = vmatpush1.msra.mxu0 0.0
    %v1468 = vand.u32 %v74, 4294901760
    %v1469 = vsub.f32 %v74, %v1468
    %1470 = vmatprep.subr.mxu0 %v1469
    %v1471 = vand.u32 %v72, 4294901760
    %v1472 = vsub.f32 %v72, %v1471
    %1473 = vmatpush1.msra.mxu0 %v1472
    %1474 = vmatprep.subr.mxu0 0.0
    %1475 = vmatpush2.msra.mxu0 0.0
    %1476 = vmatprep.subr.mxu0 0.0
    %1477 = vmatpush2.msra.mxu0 0.0
    %1478 = vmatprep.subr.mxu0 0.0
    %1479 = vmatpush2.msra.mxu0 0.0
    %1480 = vmatprep.subr.mxu0 0.0
    %1481 = vmatpush2.msra.mxu0 0.0
    %1482 = vmatprep.subr.mxu0 0.0
    %1483 = vmatpush2.msra.mxu0 0.0
    %1484 = vmatprep.subr.mxu0 0.0
    %1485 = vmatpush2.msra.mxu0 0.0
    %1486 = vmatprep.subr.mxu0 0.0
    %1487 = vmatpush2.msra.mxu0 0.0
    %1488 = vmatprep.subr.mxu0 0.0
    %1489 = vmatpush2.msra.mxu0 0.0
    %1490 = vmatprep.subr.mxu0 0.0
    %1491 = vmatpush2.msra.mxu0 0.0
    %1492 = vmatprep.subr.mxu0 0.0
    %1493 = vmatpush2.msra.mxu0 0.0
    %1494 = vmatprep.subr.mxu0 0.0
    %1495 = vmatpush2.msra.mxu0 0.0
    %1496 = vmatprep.subr.mxu0 0.0
    %1497 = vmatpush2.msra.mxu0 0.0
    %1498 = vmatprep.subr.mxu0 0.0
    %1499 = vmatpush2.msra.mxu0 0.0
    %1500 = vmatprep.subr.mxu0 0.0
    %1501 = vmatpush2.msra.mxu0 0.0
    %1502 = vmatprep.subr.mxu0 0.0
    %1503 = vmatpush2.msra.mxu0 0.0
    %1504 = vmatprep.subr.mxu0 0.0
    %1505 = vmatpush2.msra.mxu0 0.0
    %1506 = vmatprep.mubr.f32.mxu0 0.0
    %v1507 = vand.u32 %v32, 4294901760
    %v1508 = vsub.f32 %v32, %v1507
    %1509 = vmatmul.mubr.f32.gmra.mxu0 %v1508
    %v1510 = vpop.f32.mrf.mxu0
    %v1511 = vadd.f32 %v1357, %v1510
    %v1512 = vpop.f32.mrf.mxu0
    %v1513 = vadd.f32 %v1359, %v1512
    %1514 = vmatprep.mubr.f32.mxu0 0.0
    %v1515 = vand.u32 %v35, 4294901760
    %v1516 = vsub.f32 %v35, %v1515
    %1517 = vmatmul.mubr.f32.gmra.mxu0 %v1516
    %v1518 = vpop.f32.mrf.mxu0
    %v1519 = vadd.f32 %v1364, %v1518
    %v1520 = vpop.f32.mrf.mxu0
    %v1521 = vadd.f32 %v1366, %v1520
    %1522 = vmatprep.mubr.f32.mxu0 0.0
    %v1523 = vand.u32 %v38, 4294901760
    %v1524 = vsub.f32 %v38, %v1523
    %1525 = vmatmul.mubr.f32.gmra.mxu0 %v1524
    %v1526 = vpop.f32.mrf.mxu0
    %v1527 = vadd.f32 %v1371, %v1526
    %v1528 = vpop.f32.mrf.mxu0
    %v1529 = vadd.f32 %v1373, %v1528
    %1530 = vmatprep.mubr.f32.mxu0 0.0
    %v1531 = vand.u32 %v41, 4294901760
    %v1532 = vsub.f32 %v41, %v1531
    %1533 = vmatmul.mubr.f32.gmra.mxu0 %v1532
    %v1534 = vpop.f32.mrf.mxu0
    %v1535 = vadd.f32 %v1378, %v1534
    %v1536 = vpop.f32.mrf.mxu0
    %v1537 = vadd.f32 %v1380, %v1536
    %1538 = vmatprep.mubr.f32.mxu0 0.0
    %v1539 = vand.u32 %v44, 4294901760
    %v1540 = vsub.f32 %v44, %v1539
    %1541 = vmatmul.mubr.f32.gmra.mxu0 %v1540
    %v1542 = vpop.f32.mrf.mxu0
    %v1543 = vadd.f32 %v1385, %v1542
    %v1544 = vpop.f32.mrf.mxu0
    %v1545 = vadd.f32 %v1387, %v1544
    %1546 = vmatprep.mubr.f32.mxu0 0.0
    %v1547 = vand.u32 %v47, 4294901760
    %v1548 = vsub.f32 %v47, %v1547
    %1549 = vmatmul.mubr.f32.gmra.mxu0 %v1548
    %v1550 = vpop.f32.mrf.mxu0
    %v1551 = vadd.f32 %v1392, %v1550
    %v1552 = vpop.f32.mrf.mxu0
    %v1553 = vadd.f32 %v1394, %v1552
    %1554 = vmatprep.mubr.f32.mxu0 0.0
    %v1555 = vand.u32 %v50, 4294901760
    %v1556 = vsub.f32 %v50, %v1555
    %1557 = vmatmul.mubr.f32.gmra.mxu0 %v1556
    %v1558 = vpop.f32.mrf.mxu0
    %v1559 = vadd.f32 %v1399, %v1558
    %v1560 = vpop.f32.mrf.mxu0
    %v1561 = vadd.f32 %v1401, %v1560
    %1562 = vmatprep.mubr.f32.mxu0 0.0
    %v1563 = vand.u32 %v53, 4294901760
    %v1564 = vsub.f32 %v53, %v1563
    %1565 = vmatmul.mubr.f32.gmra.mxu0 %v1564
    %v1566 = vpop.f32.mrf.mxu0
    %v1567 = vadd.f32 %v1406, %v1566
    %v1568 = vpop.f32.mrf.mxu0
    %v1569 = vadd.f32 %v1408, %v1568
    %1570 = vmatprep.mubr.f32.mxu0 0.0
    %v1571 = vand.u32 %v56, 4294901760
    %v1572 = vsub.f32 %v56, %v1571
    %1573 = vmatmul.mubr.f32.gmra.mxu0 %v1572
    %v1574 = vpop.f32.mrf.mxu0
    %v1575 = vadd.f32 %v1413, %v1574
    %v1576 = vpop.f32.mrf.mxu0
    %v1577 = vadd.f32 %v1415, %v1576
    %1578 = vmatprep.mubr.f32.mxu0 0.0
    %v1579 = vand.u32 %v59, 4294901760
    %v1580 = vsub.f32 %v59, %v1579
    %1581 = vmatmul.mubr.f32.gmra.mxu0 %v1580
    %v1582 = vpop.f32.mrf.mxu0
    %v1583 = vadd.f32 %v1420, %v1582
    %v1584 = vpop.f32.mrf.mxu0
    %v1585 = vadd.f32 %v1422, %v1584
    %1586 = vmatprep.mubr.f32.mxu0 0.0
    %v1587 = vand.u32 %v62, 4294901760
    %v1588 = vsub.f32 %v62, %v1587
    %1589 = vmatmul.mubr.f32.gmra.mxu0 %v1588
    %v1590 = vpop.f32.mrf.mxu0
    %v1591 = vadd.f32 %v1427, %v1590
    %v1592 = vpop.f32.mrf.mxu0
    %v1593 = vadd.f32 %v1429, %v1592
    %1594 = vmatprep.mubr.f32.mxu0 0.0
    %v1595 = vand.u32 %v65, 4294901760
    %v1596 = vsub.f32 %v65, %v1595
    %1597 = vmatmul.mubr.f32.gmra.mxu0 %v1596
    %v1598 = vpop.f32.mrf.mxu0
    %v1599 = vadd.f32 %v1434, %v1598
    %v1600 = vpop.f32.mrf.mxu0
    %v1601 = vadd.f32 %v1436, %v1600
    %1602 = vdwg.mxu0
    %1603 = vmatprep.subr.mxu0 0.0
    %1604 = vmatpush1.msra.mxu0 0.0
    %1605 = vmatprep.subr.mxu0 0.0
    %1606 = vmatpush1.msra.mxu0 0.0
    %1607 = vmatprep.subr.mxu0 0.0
    %1608 = vmatpush1.msra.mxu0 0.0
    %1609 = vmatprep.subr.mxu0 0.0
    %1610 = vmatpush1.msra.mxu0 0.0
    %1611 = vmatprep.subr.mxu0 0.0
    %1612 = vmatpush1.msra.mxu0 0.0
    %1613 = vmatprep.subr.mxu0 0.0
    %1614 = vmatpush1.msra.mxu0 0.0
    %1615 = vmatprep.subr.mxu0 0.0
    %1616 = vmatpush1.msra.mxu0 0.0
    %1617 = vmatprep.subr.mxu0 0.0
    %1618 = vmatpush1.msra.mxu0 0.0
    %1619 = vmatprep.subr.mxu0 0.0
    %1620 = vmatpush1.msra.mxu0 0.0
    %1621 = vmatprep.subr.mxu0 0.0
    %1622 = vmatpush1.msra.mxu0 0.0
    %1623 = vmatprep.subr.mxu0 0.0
    %1624 = vmatpush1.msra.mxu0 0.0
    %1625 = vmatprep.subr.mxu0 0.0
    %1626 = vmatpush1.msra.mxu0 0.0
    %1627 = vmatprep.subr.mxu0 0.0
    %1628 = vmatpush1.msra.mxu0 0.0
    %1629 = vmatprep.subr.mxu0 0.0
    %1630 = vmatpush1.msra.mxu0 0.0
    %1631 = vmatprep.subr.mxu0 0.0
    %1632 = vmatpush1.msra.mxu0 0.0
    %v1633 = vand.u32 %v74, 4294901760
    %1634 = vmatprep.subr.mxu0 %v1633
    %v1635 = vand.u32 %v72, 4294901760
    %1636 = vmatpush1.msra.mxu0 %v1635
    %1637 = vmatprep.subr.mxu0 0.0
    %1638 = vmatpush2.msra.mxu0 0.0
    %1639 = vmatprep.subr.mxu0 0.0
    %1640 = vmatpush2.msra.mxu0 0.0
    %1641 = vmatprep.subr.mxu0 0.0
    %1642 = vmatpush2.msra.mxu0 0.0
    %1643 = vmatprep.subr.mxu0 0.0
    %1644 = vmatpush2.msra.mxu0 0.0
    %1645 = vmatprep.subr.mxu0 0.0
    %1646 = vmatpush2.msra.mxu0 0.0
    %1647 = vmatprep.subr.mxu0 0.0
    %1648 = vmatpush2.msra.mxu0 0.0
    %1649 = vmatprep.subr.mxu0 0.0
    %1650 = vmatpush2.msra.mxu0 0.0
    %1651 = vmatprep.subr.mxu0 0.0
    %1652 = vmatpush2.msra.mxu0 0.0
    %1653 = vmatprep.subr.mxu0 0.0
    %1654 = vmatpush2.msra.mxu0 0.0
    %1655 = vmatprep.subr.mxu0 0.0
    %1656 = vmatpush2.msra.mxu0 0.0
    %1657 = vmatprep.subr.mxu0 0.0
    %1658 = vmatpush2.msra.mxu0 0.0
    %1659 = vmatprep.subr.mxu0 0.0
    %1660 = vmatpush2.msra.mxu0 0.0
    %1661 = vmatprep.subr.mxu0 0.0
    %1662 = vmatpush2.msra.mxu0 0.0
    %1663 = vmatprep.subr.mxu0 0.0
    %1664 = vmatpush2.msra.mxu0 0.0
    %1665 = vmatprep.subr.mxu0 0.0
    %1666 = vmatpush2.msra.mxu0 0.0
    %1667 = vmatprep.subr.mxu0 0.0
    %1668 = vmatpush2.msra.mxu0 0.0
    %1669 = vmatprep.mubr.f32.mxu0 0.0
    %v1670 = vand.u32 %v32, 4294901760
    %v1671 = vsub.f32 %v32, %v1670
    %v1672 = vand.u32 %v1671, 4294901760
    %1673 = vmatmul.mubr.f32.gmra.mxu0 %v1672
    %v1674 = vpop.f32.mrf.mxu0
    %v1675 = vadd.f32 %v1511, %v1674
    %v1676 = vpop.f32.mrf.mxu0
    %v1677 = vadd.f32 %v1513, %v1676
    %1678 = vmatprep.mubr.f32.mxu0 0.0
    %v1679 = vand.u32 %v35, 4294901760
    %v1680 = vsub.f32 %v35, %v1679
    %v1681 = vand.u32 %v1680, 4294901760
    %1682 = vmatmul.mubr.f32.gmra.mxu0 %v1681
    %v1683 = vpop.f32.mrf.mxu0
    %v1684 = vadd.f32 %v1519, %v1683
    %v1685 = vpop.f32.mrf.mxu0
    %v1686 = vadd.f32 %v1521, %v1685
    %1687 = vmatprep.mubr.f32.mxu0 0.0
    %v1688 = vand.u32 %v38, 4294901760
    %v1689 = vsub.f32 %v38, %v1688
    %v1690 = vand.u32 %v1689, 4294901760
    %1691 = vmatmul.mubr.f32.gmra.mxu0 %v1690
    %v1692 = vpop.f32.mrf.mxu0
    %v1693 = vadd.f32 %v1527, %v1692
    %v1694 = vpop.f32.mrf.mxu0
    %v1695 = vadd.f32 %v1529, %v1694
    %1696 = vmatprep.mubr.f32.mxu0 0.0
    %v1697 = vand.u32 %v41, 4294901760
    %v1698 = vsub.f32 %v41, %v1697
    %v1699 = vand.u32 %v1698, 4294901760
    %1700 = vmatmul.mubr.f32.gmra.mxu0 %v1699
    %v1701 = vpop.f32.mrf.mxu0
    %v1702 = vadd.f32 %v1535, %v1701
    %v1703 = vpop.f32.mrf.mxu0
    %v1704 = vadd.f32 %v1537, %v1703
    %1705 = vmatprep.mubr.f32.mxu0 0.0
    %v1706 = vand.u32 %v44, 4294901760
    %v1707 = vsub.f32 %v44, %v1706
    %v1708 = vand.u32 %v1707, 4294901760
    %1709 = vmatmul.mubr.f32.gmra.mxu0 %v1708
    %v1710 = vpop.f32.mrf.mxu0
    %v1711 = vadd.f32 %v1543, %v1710
    %v1712 = vpop.f32.mrf.mxu0
    %v1713 = vadd.f32 %v1545, %v1712
    %1714 = vmatprep.mubr.f32.mxu0 0.0
    %v1715 = vand.u32 %v47, 4294901760
    %v1716 = vsub.f32 %v47, %v1715
    %v1717 = vand.u32 %v1716, 4294901760
    %1718 = vmatmul.mubr.f32.gmra.mxu0 %v1717
    %v1719 = vpop.f32.mrf.mxu0
    %v1720 = vadd.f32 %v1551, %v1719
    %v1721 = vpop.f32.mrf.mxu0
    %v1722 = vadd.f32 %v1553, %v1721
    %1723 = vmatprep.mubr.f32.mxu0 0.0
    %v1724 = vand.u32 %v50, 4294901760
    %v1725 = vsub.f32 %v50, %v1724
    %v1726 = vand.u32 %v1725, 4294901760
    %1727 = vmatmul.mubr.f32.gmra.mxu0 %v1726
    %v1728 = vpop.f32.mrf.mxu0
    %v1729 = vadd.f32 %v1559, %v1728
    %v1730 = vpop.f32.mrf.mxu0
    %v1731 = vadd.f32 %v1561, %v1730
    %1732 = vmatprep.mubr.f32.mxu0 0.0
    %v1733 = vand.u32 %v53, 4294901760
    %v1734 = vsub.f32 %v53, %v1733
    %v1735 = vand.u32 %v1734, 4294901760
    %1736 = vmatmul.mubr.f32.gmra.mxu0 %v1735
    %v1737 = vpop.f32.mrf.mxu0
    %v1738 = vadd.f32 %v1567, %v1737
    %v1739 = vpop.f32.mrf.mxu0
    %v1740 = vadd.f32 %v1569, %v1739
    %1741 = vmatprep.mubr.f32.mxu0 0.0
    %v1742 = vand.u32 %v56, 4294901760
    %v1743 = vsub.f32 %v56, %v1742
    %v1744 = vand.u32 %v1743, 4294901760
    %1745 = vmatmul.mubr.f32.gmra.mxu0 %v1744
    %v1746 = vpop.f32.mrf.mxu0
    %v1747 = vadd.f32 %v1575, %v1746
    %v1748 = vpop.f32.mrf.mxu0
    %v1749 = vadd.f32 %v1577, %v1748
    %1750 = vmatprep.mubr.f32.mxu0 0.0
    %v1751 = vand.u32 %v59, 4294901760
    %v1752 = vsub.f32 %v59, %v1751
    %v1753 = vand.u32 %v1752, 4294901760
    %1754 = vmatmul.mubr.f32.gmra.mxu0 %v1753
    %v1755 = vpop.f32.mrf.mxu0
    %v1756 = vadd.f32 %v1583, %v1755
    %v1757 = vpop.f32.mrf.mxu0
    %v1758 = vadd.f32 %v1585, %v1757
    %1759 = vmatprep.mubr.f32.mxu0 0.0
    %v1760 = vand.u32 %v62, 4294901760
    %v1761 = vsub.f32 %v62, %v1760
    %v1762 = vand.u32 %v1761, 4294901760
    %1763 = vmatmul.mubr.f32.gmra.mxu0 %v1762
    %v1764 = vpop.f32.mrf.mxu0
    %v1765 = vadd.f32 %v1591, %v1764
    %v1766 = vpop.f32.mrf.mxu0
    %v1767 = vadd.f32 %v1593, %v1766
    %1768 = vmatprep.mubr.f32.mxu0 0.0
    %v1769 = vand.u32 %v65, 4294901760
    %v1770 = vsub.f32 %v65, %v1769
    %v1771 = vand.u32 %v1770, 4294901760
    %1772 = vmatmul.mubr.f32.gmra.mxu0 %v1771
    %v1773 = vpop.f32.mrf.mxu0
    %v1774 = vadd.f32 %v1599, %v1773
    %v1775 = vpop.f32.mrf.mxu0
    %v1776 = vadd.f32 %v1601, %v1775
    %1777 = vdwg.mxu0
    %1778 = vmatprep.subr.mxu0 0.0
    %1779 = vmatpush1.msra.mxu0 0.0
    %1780 = vmatprep.subr.mxu0 0.0
    %1781 = vmatpush1.msra.mxu0 0.0
    %1782 = vmatprep.subr.mxu0 0.0
    %1783 = vmatpush1.msra.mxu0 0.0
    %1784 = vmatprep.subr.mxu0 0.0
    %1785 = vmatpush1.msra.mxu0 0.0
    %1786 = vmatprep.subr.mxu0 0.0
    %1787 = vmatpush1.msra.mxu0 0.0
    %1788 = vmatprep.subr.mxu0 0.0
    %1789 = vmatpush1.msra.mxu0 0.0
    %1790 = vmatprep.subr.mxu0 0.0
    %1791 = vmatpush1.msra.mxu0 0.0
    %1792 = vmatprep.subr.mxu0 0.0
    %1793 = vmatpush1.msra.mxu0 0.0
    %1794 = vmatprep.subr.mxu0 0.0
    %1795 = vmatpush1.msra.mxu0 0.0
    %1796 = vmatprep.subr.mxu0 0.0
    %1797 = vmatpush1.msra.mxu0 0.0
    %1798 = vmatprep.subr.mxu0 0.0
    %1799 = vmatpush1.msra.mxu0 0.0
    %1800 = vmatprep.subr.mxu0 0.0
    %1801 = vmatpush1.msra.mxu0 0.0
    %1802 = vmatprep.subr.mxu0 0.0
    %1803 = vmatpush1.msra.mxu0 0.0
    %1804 = vmatprep.subr.mxu0 0.0
    %1805 = vmatpush1.msra.mxu0 0.0
    %1806 = vmatprep.subr.mxu0 0.0
    %1807 = vmatpush1.msra.mxu0 0.0
    %v1808 = vand.u32 %v74, 4294901760
    %v1809 = vsub.f32 %v74, %v1808
    %v1810 = vand.u32 %v1809, 4294901760
    %1811 = vmatprep.subr.mxu0 %v1810
    %v1812 = vand.u32 %v72, 4294901760
    %v1813 = vsub.f32 %v72, %v1812
    %v1814 = vand.u32 %v1813, 4294901760
    %1815 = vmatpush1.msra.mxu0 %v1814
    %1816 = vmatprep.subr.mxu0 0.0
    %1817 = vmatpush2.msra.mxu0 0.0
    %1818 = vmatprep.subr.mxu0 0.0
    %1819 = vmatpush2.msra.mxu0 0.0
    %1820 = vmatprep.subr.mxu0 0.0
    %1821 = vmatpush2.msra.mxu0 0.0
    %1822 = vmatprep.subr.mxu0 0.0
    %1823 = vmatpush2.msra.mxu0 0.0
    %1824 = vmatprep.subr.mxu0 0.0
    %1825 = vmatpush2.msra.mxu0 0.0
    %1826 = vmatprep.subr.mxu0 0.0
    %1827 = vmatpush2.msra.mxu0 0.0
    %1828 = vmatprep.subr.mxu0 0.0
    %1829 = vmatpush2.msra.mxu0 0.0
    %1830 = vmatprep.subr.mxu0 0.0
    %1831 = vmatpush2.msra.mxu0 0.0
    %1832 = vmatprep.subr.mxu0 0.0
    %1833 = vmatpush2.msra.mxu0 0.0
    %1834 = vmatprep.subr.mxu0 0.0
    %1835 = vmatpush2.msra.mxu0 0.0
    %1836 = vmatprep.subr.mxu0 0.0
    %1837 = vmatpush2.msra.mxu0 0.0
    %1838 = vmatprep.subr.mxu0 0.0
    %1839 = vmatpush2.msra.mxu0 0.0
    %1840 = vmatprep.subr.mxu0 0.0
    %1841 = vmatpush2.msra.mxu0 0.0
    %1842 = vmatprep.subr.mxu0 0.0
    %1843 = vmatpush2.msra.mxu0 0.0
    %1844 = vmatprep.subr.mxu0 0.0
    %1845 = vmatpush2.msra.mxu0 0.0
    %1846 = vmatprep.subr.mxu0 0.0
    %1847 = vmatpush2.msra.mxu0 0.0
    %1848 = vmatprep.mubr.f32.mxu0 0.0
    %v1849 = vand.u32 %v32, 4294901760
    %1850 = vmatmul.mubr.f32.gmra.mxu0 %v1849
    %v1851 = vpop.f32.mrf.mxu0
    %v1852 = vadd.f32 %v1675, %v1851
    %v1853 = vpop.f32.mrf.mxu0
    %v1854 = vadd.f32 %v1677, %v1853
    %1855 = vmatprep.mubr.f32.mxu0 0.0
    %v1856 = vand.u32 %v35, 4294901760
    %1857 = vmatmul.mubr.f32.gmra.mxu0 %v1856
    %v1858 = vpop.f32.mrf.mxu0
    %v1859 = vadd.f32 %v1684, %v1858
    %v1860 = vpop.f32.mrf.mxu0
    %v1861 = vadd.f32 %v1686, %v1860
    %1862 = vmatprep.mubr.f32.mxu0 0.0
    %v1863 = vand.u32 %v38, 4294901760
    %1864 = vmatmul.mubr.f32.gmra.mxu0 %v1863
    %v1865 = vpop.f32.mrf.mxu0
    %v1866 = vadd.f32 %v1693, %v1865
    %v1867 = vpop.f32.mrf.mxu0
    %v1868 = vadd.f32 %v1695, %v1867
    %1869 = vmatprep.mubr.f32.mxu0 0.0
    %v1870 = vand.u32 %v41, 4294901760
    %1871 = vmatmul.mubr.f32.gmra.mxu0 %v1870
    %v1872 = vpop.f32.mrf.mxu0
    %v1873 = vadd.f32 %v1702, %v1872
    %v1874 = vpop.f32.mrf.mxu0
    %v1875 = vadd.f32 %v1704, %v1874
    %1876 = vmatprep.mubr.f32.mxu0 0.0
    %v1877 = vand.u32 %v44, 4294901760
    %1878 = vmatmul.mubr.f32.gmra.mxu0 %v1877
    %v1879 = vpop.f32.mrf.mxu0
    %v1880 = vadd.f32 %v1711, %v1879
    %v1881 = vpop.f32.mrf.mxu0
    %v1882 = vadd.f32 %v1713, %v1881
    %1883 = vmatprep.mubr.f32.mxu0 0.0
    %v1884 = vand.u32 %v47, 4294901760
    %1885 = vmatmul.mubr.f32.gmra.mxu0 %v1884
    %v1886 = vpop.f32.mrf.mxu0
    %v1887 = vadd.f32 %v1720, %v1886
    %v1888 = vpop.f32.mrf.mxu0
    %v1889 = vadd.f32 %v1722, %v1888
    %1890 = vmatprep.mubr.f32.mxu0 0.0
    %v1891 = vand.u32 %v50, 4294901760
    %1892 = vmatmul.mubr.f32.gmra.mxu0 %v1891
    %v1893 = vpop.f32.mrf.mxu0
    %v1894 = vadd.f32 %v1729, %v1893
    %v1895 = vpop.f32.mrf.mxu0
    %v1896 = vadd.f32 %v1731, %v1895
    %1897 = vmatprep.mubr.f32.mxu0 0.0
    %v1898 = vand.u32 %v53, 4294901760
    %1899 = vmatmul.mubr.f32.gmra.mxu0 %v1898
    %v1900 = vpop.f32.mrf.mxu0
    %v1901 = vadd.f32 %v1738, %v1900
    %v1902 = vpop.f32.mrf.mxu0
    %v1903 = vadd.f32 %v1740, %v1902
    %1904 = vmatprep.mubr.f32.mxu0 0.0
    %v1905 = vand.u32 %v56, 4294901760
    %1906 = vmatmul.mubr.f32.gmra.mxu0 %v1905
    %v1907 = vpop.f32.mrf.mxu0
    %v1908 = vadd.f32 %v1747, %v1907
    %v1909 = vpop.f32.mrf.mxu0
    %v1910 = vadd.f32 %v1749, %v1909
    %1911 = vmatprep.mubr.f32.mxu0 0.0
    %v1912 = vand.u32 %v59, 4294901760
    %1913 = vmatmul.mubr.f32.gmra.mxu0 %v1912
    %v1914 = vpop.f32.mrf.mxu0
    %v1915 = vadd.f32 %v1756, %v1914
    %v1916 = vpop.f32.mrf.mxu0
    %v1917 = vadd.f32 %v1758, %v1916
    %1918 = vmatprep.mubr.f32.mxu0 0.0
    %v1919 = vand.u32 %v62, 4294901760
    %1920 = vmatmul.mubr.f32.gmra.mxu0 %v1919
    %v1921 = vpop.f32.mrf.mxu0
    %v1922 = vadd.f32 %v1765, %v1921
    %v1923 = vpop.f32.mrf.mxu0
    %v1924 = vadd.f32 %v1767, %v1923
    %1925 = vmatprep.mubr.f32.mxu0 0.0
    %v1926 = vand.u32 %v65, 4294901760
    %1927 = vmatmul.mubr.f32.gmra.mxu0 %v1926
    %v1928 = vpop.f32.mrf.mxu0
    %v1929 = vadd.f32 %v1774, %v1928
    %v1930 = vpop.f32.mrf.mxu0
    %v1931 = vadd.f32 %v1776, %v1930
    %1932 = vdwg.mxu0
    %1933 = vmatprep.subr.mxu0 0.0
    %1934 = vmatpush1.msra.mxu0 0.0
    %1935 = vmatprep.subr.mxu0 0.0
    %1936 = vmatpush1.msra.mxu0 0.0
    %1937 = vmatprep.subr.mxu0 0.0
    %1938 = vmatpush1.msra.mxu0 0.0
    %1939 = vmatprep.subr.mxu0 0.0
    %1940 = vmatpush1.msra.mxu0 0.0
    %1941 = vmatprep.subr.mxu0 0.0
    %1942 = vmatpush1.msra.mxu0 0.0
    %1943 = vmatprep.subr.mxu0 0.0
    %1944 = vmatpush1.msra.mxu0 0.0
    %1945 = vmatprep.subr.mxu0 0.0
    %1946 = vmatpush1.msra.mxu0 0.0
    %1947 = vmatprep.subr.mxu0 0.0
    %1948 = vmatpush1.msra.mxu0 0.0
    %1949 = vmatprep.subr.mxu0 0.0
    %1950 = vmatpush1.msra.mxu0 0.0
    %1951 = vmatprep.subr.mxu0 0.0
    %1952 = vmatpush1.msra.mxu0 0.0
    %1953 = vmatprep.subr.mxu0 0.0
    %1954 = vmatpush1.msra.mxu0 0.0
    %1955 = vmatprep.subr.mxu0 0.0
    %1956 = vmatpush1.msra.mxu0 0.0
    %1957 = vmatprep.subr.mxu0 0.0
    %1958 = vmatpush1.msra.mxu0 0.0
    %1959 = vmatprep.subr.mxu0 0.0
    %1960 = vmatpush1.msra.mxu0 0.0
    %1961 = vmatprep.subr.mxu0 0.0
    %1962 = vmatpush1.msra.mxu0 0.0
    %v1963 = vand.u32 %v74, 4294901760
    %1964 = vmatprep.subr.mxu0 %v1963
    %v1965 = vand.u32 %v72, 4294901760
    %1966 = vmatpush1.msra.mxu0 %v1965
    %1967 = vmatprep.subr.mxu0 0.0
    %1968 = vmatpush2.msra.mxu0 0.0
    %1969 = vmatprep.subr.mxu0 0.0
    %1970 = vmatpush2.msra.mxu0 0.0
    %1971 = vmatprep.subr.mxu0 0.0
    %1972 = vmatpush2.msra.mxu0 0.0
    %1973 = vmatprep.subr.mxu0 0.0
    %1974 = vmatpush2.msra.mxu0 0.0
    %1975 = vmatprep.subr.mxu0 0.0
    %1976 = vmatpush2.msra.mxu0 0.0
    %1977 = vmatprep.subr.mxu0 0.0
    %1978 = vmatpush2.msra.mxu0 0.0
    %1979 = vmatprep.subr.mxu0 0.0
    %1980 = vmatpush2.msra.mxu0 0.0
    %1981 = vmatprep.subr.mxu0 0.0
    %1982 = vmatpush2.msra.mxu0 0.0
    %1983 = vmatprep.subr.mxu0 0.0
    %1984 = vmatpush2.msra.mxu0 0.0
    %1985 = vmatprep.subr.mxu0 0.0
    %1986 = vmatpush2.msra.mxu0 0.0
    %1987 = vmatprep.subr.mxu0 0.0
    %1988 = vmatpush2.msra.mxu0 0.0
    %1989 = vmatprep.subr.mxu0 0.0
    %1990 = vmatpush2.msra.mxu0 0.0
    %1991 = vmatprep.subr.mxu0 0.0
    %1992 = vmatpush2.msra.mxu0 0.0
    %1993 = vmatprep.subr.mxu0 0.0
    %1994 = vmatpush2.msra.mxu0 0.0
    %1995 = vmatprep.subr.mxu0 0.0
    %1996 = vmatpush2.msra.mxu0 0.0
    %1997 = vmatprep.subr.mxu0 0.0
    %1998 = vmatpush2.msra.mxu0 0.0
    %1999 = vmatprep.mubr.f32.mxu0 0.0
    %v2000 = vand.u32 %v32, 4294901760
    %2001 = vmatmul.mubr.f32.gmra.mxu0 %v2000
    %v2002 = vpop.f32.mrf.mxu0
    %v2003 = vadd.f32 %v1852, %v2002
    %v2004 = vpop.f32.mrf.mxu0
    %v2005 = vadd.f32 %v1854, %v2004
    %2006 = vmatprep.mubr.f32.mxu0 0.0
    %v2007 = vand.u32 %v35, 4294901760
    %2008 = vmatmul.mubr.f32.gmra.mxu0 %v2007
    %v2009 = vpop.f32.mrf.mxu0
    %v2010 = vadd.f32 %v1859, %v2009
    %v2011 = vpop.f32.mrf.mxu0
    %v2012 = vadd.f32 %v1861, %v2011
    %2013 = vmatprep.mubr.f32.mxu0 0.0
    %v2014 = vand.u32 %v38, 4294901760
    %2015 = vmatmul.mubr.f32.gmra.mxu0 %v2014
    %v2016 = vpop.f32.mrf.mxu0
    %v2017 = vadd.f32 %v1866, %v2016
    %v2018 = vpop.f32.mrf.mxu0
    %v2019 = vadd.f32 %v1868, %v2018
    %2020 = vmatprep.mubr.f32.mxu0 0.0
    %v2021 = vand.u32 %v41, 4294901760
    %2022 = vmatmul.mubr.f32.gmra.mxu0 %v2021
    %v2023 = vpop.f32.mrf.mxu0
    %v2024 = vadd.f32 %v1873, %v2023
    %v2025 = vpop.f32.mrf.mxu0
    %v2026 = vadd.f32 %v1875, %v2025
    %2027 = vmatprep.mubr.f32.mxu0 0.0
    %v2028 = vand.u32 %v44, 4294901760
    %2029 = vmatmul.mubr.f32.gmra.mxu0 %v2028
    %v2030 = vpop.f32.mrf.mxu0
    %v2031 = vadd.f32 %v1880, %v2030
    %v2032 = vpop.f32.mrf.mxu0
    %v2033 = vadd.f32 %v1882, %v2032
    %2034 = vmatprep.mubr.f32.mxu0 0.0
    %v2035 = vand.u32 %v47, 4294901760
    %2036 = vmatmul.mubr.f32.gmra.mxu0 %v2035
    %v2037 = vpop.f32.mrf.mxu0
    %v2038 = vadd.f32 %v1887, %v2037
    %v2039 = vpop.f32.mrf.mxu0
    %v2040 = vadd.f32 %v1889, %v2039
    %2041 = vmatprep.mubr.f32.mxu0 0.0
    %v2042 = vand.u32 %v50, 4294901760
    %2043 = vmatmul.mubr.f32.gmra.mxu0 %v2042
    %v2044 = vpop.f32.mrf.mxu0
    %v2045 = vadd.f32 %v1894, %v2044
    %v2046 = vpop.f32.mrf.mxu0
    %v2047 = vadd.f32 %v1896, %v2046
    %2048 = vmatprep.mubr.f32.mxu0 0.0
    %v2049 = vand.u32 %v53, 4294901760
    %2050 = vmatmul.mubr.f32.gmra.mxu0 %v2049
    %v2051 = vpop.f32.mrf.mxu0
    %v2052 = vadd.f32 %v1901, %v2051
    %v2053 = vpop.f32.mrf.mxu0
    %v2054 = vadd.f32 %v1903, %v2053
    %2055 = vmatprep.mubr.f32.mxu0 0.0
    %v2056 = vand.u32 %v56, 4294901760
    %2057 = vmatmul.mubr.f32.gmra.mxu0 %v2056
    %v2058 = vpop.f32.mrf.mxu0
    %v2059 = vadd.f32 %v1908, %v2058
    %v2060 = vpop.f32.mrf.mxu0
    %v2061 = vadd.f32 %v1910, %v2060
    %2062 = vmatprep.mubr.f32.mxu0 0.0
    %v2063 = vand.u32 %v59, 4294901760
    %2064 = vmatmul.mubr.f32.gmra.mxu0 %v2063
    %v2065 = vpop.f32.mrf.mxu0
    %v2066 = vadd.f32 %v1915, %v2065
    %v2067 = vpop.f32.mrf.mxu0
    %v2068 = vadd.f32 %v1917, %v2067
    %2069 = vmatprep.mubr.f32.mxu0 0.0
    %v2070 = vand.u32 %v62, 4294901760
    %2071 = vmatmul.mubr.f32.gmra.mxu0 %v2070
    %v2072 = vpop.f32.mrf.mxu0
    %v2073 = vadd.f32 %v1922, %v2072
    %v2074 = vpop.f32.mrf.mxu0
    %v2075 = vadd.f32 %v1924, %v2074
    %2076 = vmatprep.mubr.f32.mxu0 0.0
    %v2077 = vand.u32 %v65, 4294901760
    %2078 = vmatmul.mubr.f32.gmra.mxu0 %v2077
    %v2079 = vpop.f32.mrf.mxu0
    %v2080 = vadd.f32 %v1929, %v2079
    %v2081 = vpop.f32.mrf.mxu0
    %v2082 = vadd.f32 %v1931, %v2081
    %2083 = vdwg.mxu0
    %v2084 = vmul.f32 %v999, %v999
    %v2085 = vmul.f32 %v1001, %v1001
    %v2086 = vmul.f32 %v2003, %v2003
    %v2087 = vmul.f32 %v2005, %v2005
    %v2088 = vmul.f32 %v1006, %v1006
    %v2089 = vmul.f32 %v1008, %v1008
    %v2090 = vmul.f32 %v2010, %v2010
    %v2091 = vmul.f32 %v2012, %v2012
    %v2092 = vmul.f32 %v1013, %v1013
    %v2093 = vmul.f32 %v1015, %v1015
    %v2094 = vmul.f32 %v2017, %v2017
    %v2095 = vmul.f32 %v2019, %v2019
    %v2096 = vmul.f32 %v1020, %v1020
    %v2097 = vmul.f32 %v1022, %v1022
    %v2098 = vmul.f32 %v2024, %v2024
    %v2099 = vmul.f32 %v2026, %v2026
    %v2100 = vmul.f32 %v1027, %v1027
    %v2101 = vmul.f32 %v1029, %v1029
    %v2102 = vmul.f32 %v2031, %v2031
    %v2103 = vmul.f32 %v2033, %v2033
    %v2104 = vmul.f32 %v1034, %v1034
    %v2105 = vmul.f32 %v1036, %v1036
    %v2106 = vmul.f32 %v2038, %v2038
    %v2107 = vmul.f32 %v2040, %v2040
    %v2108 = vmul.f32 %v1041, %v1041
    %v2109 = vmul.f32 %v1043, %v1043
    %v2110 = vmul.f32 %v2045, %v2045
    %v2111 = vmul.f32 %v2047, %v2047
    %v2112 = vmul.f32 %v1048, %v1048
    %v2113 = vmul.f32 %v1050, %v1050
    %v2114 = vmul.f32 %v2052, %v2052
    %v2115 = vmul.f32 %v2054, %v2054
    %v2116 = vadd.f32 %v2084, %v2100
    %v2117 = vadd.f32 %v2085, %v2101
    %v2118 = vadd.f32 %v2086, %v2102
    %v2119 = vadd.f32 %v2087, %v2103
    %v2120 = vadd.f32 %v2088, %v2104
    %v2121 = vadd.f32 %v2089, %v2105
    %v2122 = vadd.f32 %v2090, %v2106
    %v2123 = vadd.f32 %v2091, %v2107
    %v2124 = vadd.f32 %v2092, %v2108
    %v2125 = vadd.f32 %v2093, %v2109
    %v2126 = vadd.f32 %v2094, %v2110
    %v2127 = vadd.f32 %v2095, %v2111
    %v2128 = vadd.f32 %v2096, %v2112
    %v2129 = vadd.f32 %v2097, %v2113
    %v2130 = vadd.f32 %v2098, %v2114
    %v2131 = vadd.f32 %v2099, %v2115
    %v2132 = vsub.f32 0.0, %v2116
    %v2133 = vsub.f32 0.0, %v2117
    %v2134 = vsub.f32 0.0, %v2118
    %v2135 = vsub.f32 0.0, %v2119
    %v2136 = vsub.f32 0.0, %v2120
    %v2137 = vsub.f32 0.0, %v2121
    %v2138 = vsub.f32 0.0, %v2122
    %v2139 = vsub.f32 0.0, %v2123
    %v2140 = vsub.f32 0.0, %v2124
    %v2141 = vsub.f32 0.0, %v2125
    %v2142 = vsub.f32 0.0, %v2126
    %v2143 = vsub.f32 0.0, %v2127
    %v2144 = vsub.f32 0.0, %v2128
    %v2145 = vsub.f32 0.0, %v2129
    %v2146 = vsub.f32 0.0, %v2130
    %v2147 = vsub.f32 0.0, %v2131
    %v2148 = vmul.f32 %v2132, 1.442695
    %v2149 = vpow.pop %v2148
    %v2150 = vmul.f32 %v2133, 1.442695
    %v2151 = vpow.pop %v2150
    %v2152 = vmul.f32 %v2134, 1.442695
    %v2153 = vpow.pop %v2152
    %v2154 = vmul.f32 %v2135, 1.442695
    %v2155 = vpow.pop %v2154
    %v2156 = vmul.f32 %v2136, 1.442695
    %v2157 = vpow.pop %v2156
    %v2158 = vmul.f32 %v2137, 1.442695
    %v2159 = vpow.pop %v2158
    %v2160 = vmul.f32 %v2138, 1.442695
    %v2161 = vpow.pop %v2160
    %v2162 = vmul.f32 %v2139, 1.442695
    %v2163 = vpow.pop %v2162
    %v2164 = vmul.f32 %v2140, 1.442695
    %v2165 = vpow.pop %v2164
    %v2166 = vmul.f32 %v2141, 1.442695
    %v2167 = vpow.pop %v2166
    %v2168 = vmul.f32 %v2142, 1.442695
    %v2169 = vpow.pop %v2168
    %v2170 = vmul.f32 %v2143, 1.442695
    %v2171 = vpow.pop %v2170
    %v2172 = vmul.f32 %v2144, 1.442695
    %v2173 = vpow.pop %v2172
    %v2174 = vmul.f32 %v2145, 1.442695
    %v2175 = vpow.pop %v2174
    %v2176 = vmul.f32 %v2146, 1.442695
    %v2177 = vpow.pop %v2176
    %v2178 = vmul.f32 %v2147, 1.442695
    %v2179 = vpow.pop %v2178
    %v2180 = vand.u32 2147483647, %v1055
    %vm2181 = vcmp.le.f32.partialorder %v2180, 0.7853982
    %vm2182 = vcmp.lt.s32.totalorder %v1055, 0
    %v2183 = vand.u32 %v1055, 2139095040
    %v2184 = vshrl.u32 %v2183, 23
    %v2185 = vsub.s32 %v2184, 127
    %v2186 = vand.u32 2147483647, %v1055
    %v2187 = vand.u32 %v2186, 8388607
    %v2188 = vor.u32 %v2187, 8388608
    %v2189 = vsub.s32 0, %v2188
    %v2190 = vadd.s32 %v2185, 1
    %vm2191 = vcmp.gt.s32.totalorder %v2190, 0
    %v2192 = vsel %vm2191, %v2190, 0
    %v2193 = vshrl.u32 %v2192, 5
    %v2194 = vand.u32 %v2192, 31
    %v2195 = vsub.s32 32, %v2194
    %v2196 = vshrl.u32 683565275, %v2195
    %v2197 = vshll.u32 683565275, %v2194
    %v2198 = vshrl.u32 2475754826, %v2195
    %v2199 = vor.u32 %v2197, %v2198
    %v2200 = vshll.u32 2475754826, %v2194
    %v2201 = vshrl.u32 2131351028, %v2195
    %v2202 = vor.u32 %v2200, %v2201
    %v2203 = vshll.u32 2131351028, %v2194
    %v2204 = vshrl.u32 2102212464, %v2195
    %v2205 = vor.u32 %v2203, %v2204
    %v2206 = vshll.u32 2102212464, %v2194
    %v2207 = vshrl.u32 920167782, %v2195
    %v2208 = vor.u32 %v2206, %v2207
    %v2209 = vshll.u32 920167782, %v2194
    %v2210 = vshrl.u32 1326507024, %v2195
    %v2211 = vor.u32 %v2209, %v2210
    %vm2212 = vcmp.lt.s32.totalorder %v2193, 1
    %vm2213 = vcmp.lt.s32.totalorder %v2193, 2
    %vm2214 = vcmp.lt.s32.totalorder %v2193, 3
    %vm2215 = vcmp.lt.s32.totalorder %v2193, 4
    %v2216 = vsel %vm2212, %v2196, %v2199
    %v2217 = vsel %vm2215, %v2205, 2102212464
    %v2218 = vsel %vm2214, %v2202, %v2217
    %v2219 = vsel %vm2213, %v2216, %v2218
    %v2220 = vsel %vm2212, %v2199, %v2202
    %v2221 = vsel %vm2215, %v2208, 920167782
    %v2222 = vsel %vm2214, %v2205, %v2221
    %v2223 = vsel %vm2213, %v2220, %v2222
    %v2224 = vsel %vm2212, %v2202, %v2205
    %v2225 = vsel %vm2215, %v2211, 1326507024
    %v2226 = vsel %vm2214, %v2208, %v2225
    %v2227 = vsel %vm2213, %v2224, %v2226
    %v2228 = vshll.u32 %v2188, 8
    %v2229 = vmul.u32.u64.compose %v2228, %v2227
    %v2230 = vextract.low.u32 %v2229
    %v2231 = vextract.high.u32 %v2229
    %v2232 = vmul.u32.u64.compose %v2228, %v2223
    %v2233 = vextract.low.u32 %v2232
    %v2234 = vextract.high.u32 %v2232
    %v2235 = vmul.u32 %v2228, %v2219
    %v2236 = vadd.s32 %v2231, %v2233
    %vm2237 = vc.u32 %v2231, %v2233
    %v2238 = vadd.s32 %v2234, 1
    %v2239 = vsel %vm2237, %v2238, %v2234
    %v2240 = vadd.s32 %v2235, %v2239
    %v2241 = vadd.s32 %v2240, 536870912
    %v2242 = vshrl.u32 %v2241, 30
    %v2243 = vshll.u32 %v2242, 30
    %v2244 = vsub.s32 %v2240, %v2243
    %vm2245 = vcmp.lt.s32.totalorder %v2244, 0
    %v2246 = vsub.s32 0, %v2244
    %v2247 = vsel %vm2245, %v2246, %v2244
    %v2248 = vclz %v2247
    %v2249 = vsub.s32 %v2248, 2
    %vm2250 = vcmp.gt.s32.totalorder 0, %v2249
    %v2251 = vsel %vm2250, 0, %v2249
    %v2252 = vsub.s32 32, %v2251
    %v2253 = vshll.u32 %v2244, %v2251
    %v2254 = vshrl.u32 %v2236, %v2252
    %v2255 = vor.u32 %v2253, %v2254
    %v2256 = vsub.s32 4294967266, %v2251
    %v2257 = vadd.s32 %v2256, 127
    %v2258 = vshll.u32 %v2257, 23
    %v2259 = vor.u32 4788187, %v2258
    %v2260 = vand.u32 2147483647, %v2259
    %v2262 = vcvt.s32.f32 %v2255
    %v2263 = vmul.f32 %v2262, %v2260
    %v2264 = vxor.u32 %v2263, 2147483648
    %v2265 = vsel %vm2182, %v2264, %v2263
    %v2266 = vsub.s32 4, %v2242
    %v2267 = vsel %vm2182, %v2266, %v2242
    %v2268 = vsel %vm2181, %v1055, %v2265
    %v2269 = vsel %vm2181, 0, %v2267
    %v2270 = vcosq.f32.pop %v2268
    %v2271 = vsinq.f32.pop %v2268
    %vm2272 = vweird.f32 %v1055
    %v2273 = vadd.s32 %v2269, 3
    %v2274 = vand.u32 %v2273, 3
    %vm2275 = vcmp.lt.s32.totalorder %v2274, 2
    %vm2276 = vcmp.eq.s32.totalorder %v2274, 0
    %v2277 = vxor.u32 %v2271, 2147483648
    %v2278 = vsel %vm2276, %v2270, %v2277
    %vm2279 = vcmp.eq.s32.totalorder %v2274, 2
    %v2280 = vxor.u32 %v2270, 2147483648
    %v2281 = vsel %vm2279, %v2280, %v2271
    %v2282 = vsel %vm2275, %v2278, %v2281
    %v2283 = vsel %vm2272, nan, %v2282
    %v2284 = vand.u32 2147483647, %v1057
    %vm2285 = vcmp.le.f32.partialorder %v2284, 0.7853982
    %vm2286 = vcmp.lt.s32.totalorder %v1057, 0
    %v2287 = vand.u32 %v1057, 2139095040
    %v2288 = vshrl.u32 %v2287, 23
    %v2289 = vsub.s32 %v2288, 127
    %v2290 = vand.u32 2147483647, %v1057
    %v2291 = vand.u32 %v2290, 8388607
    %v2292 = vor.u32 %v2291, 8388608
    %v2293 = vsub.s32 0, %v2292
    %v2294 = vadd.s32 %v2289, 1
    %vm2295 = vcmp.gt.s32.totalorder %v2294, 0
    %v2296 = vsel %vm2295, %v2294, 0
    %v2297 = vshrl.u32 %v2296, 5
    %v2298 = vand.u32 %v2296, 31
    %v2299 = vsub.s32 32, %v2298
    %v2300 = vshrl.u32 683565275, %v2299
    %v2301 = vshll.u32 683565275, %v2298
    %v2302 = vshrl.u32 2475754826, %v2299
    %v2303 = vor.u32 %v2301, %v2302
    %v2304 = vshll.u32 2475754826, %v2298
    %v2305 = vshrl.u32 2131351028, %v2299
    %v2306 = vor.u32 %v2304, %v2305
    %v2307 = vshll.u32 2131351028, %v2298
    %v2308 = vshrl.u32 2102212464, %v2299
    %v2309 = vor.u32 %v2307, %v2308
    %v2310 = vshll.u32 2102212464, %v2298
    %v2311 = vshrl.u32 920167782, %v2299
    %v2312 = vor.u32 %v2310, %v2311
    %v2313 = vshll.u32 920167782, %v2298
    %v2314 = vshrl.u32 1326507024, %v2299
    %v2315 = vor.u32 %v2313, %v2314
    %vm2316 = vcmp.lt.s32.totalorder %v2297, 1
    %vm2317 = vcmp.lt.s32.totalorder %v2297, 2
    %vm2318 = vcmp.lt.s32.totalorder %v2297, 3
    %vm2319 = vcmp.lt.s32.totalorder %v2297, 4
    %v2320 = vsel %vm2316, %v2300, %v2303
    %v2321 = vsel %vm2319, %v2309, 2102212464
    %v2322 = vsel %vm2318, %v2306, %v2321
    %v2323 = vsel %vm2317, %v2320, %v2322
    %v2324 = vsel %vm2316, %v2303, %v2306
    %v2325 = vsel %vm2319, %v2312, 920167782
    %v2326 = vsel %vm2318, %v2309, %v2325
    %v2327 = vsel %vm2317, %v2324, %v2326
    %v2328 = vsel %vm2316, %v2306, %v2309
    %v2329 = vsel %vm2319, %v2315, 1326507024
    %v2330 = vsel %vm2318, %v2312, %v2329
    %v2331 = vsel %vm2317, %v2328, %v2330
    %v2332 = vshll.u32 %v2292, 8
    %v2333 = vmul.u32.u64.compose %v2332, %v2331
    %v2334 = vextract.low.u32 %v2333
    %v2335 = vextract.high.u32 %v2333
    %v2336 = vmul.u32.u64.compose %v2332, %v2327
    %v2337 = vextract.low.u32 %v2336
    %v2338 = vextract.high.u32 %v2336
    %v2339 = vmul.u32 %v2332, %v2323
    %v2340 = vadd.s32 %v2335, %v2337
    %vm2341 = vc.u32 %v2335, %v2337
    %v2342 = vadd.s32 %v2338, 1
    %v2343 = vsel %vm2341, %v2342, %v2338
    %v2344 = vadd.s32 %v2339, %v2343
    %v2345 = vadd.s32 %v2344, 536870912
    %v2346 = vshrl.u32 %v2345, 30
    %v2347 = vshll.u32 %v2346, 30
    %v2348 = vsub.s32 %v2344, %v2347
    %vm2349 = vcmp.lt.s32.totalorder %v2348, 0
    %v2350 = vsub.s32 0, %v2348
    %v2351 = vsel %vm2349, %v2350, %v2348
    %v2352 = vclz %v2351
    %v2353 = vsub.s32 %v2352, 2
    %vm2354 = vcmp.gt.s32.totalorder 0, %v2353
    %v2355 = vsel %vm2354, 0, %v2353
    %v2356 = vsub.s32 32, %v2355
    %v2357 = vshll.u32 %v2348, %v2355
    %v2358 = vshrl.u32 %v2340, %v2356
    %v2359 = vor.u32 %v2357, %v2358
    %v2360 = vsub.s32 4294967266, %v2355
    %v2361 = vadd.s32 %v2360, 127
    %v2362 = vshll.u32 %v2361, 23
    %v2363 = vor.u32 4788187, %v2362
    %v2364 = vand.u32 2147483647, %v2363
    %v2366 = vcvt.s32.f32 %v2359
    %v2367 = vmul.f32 %v2366, %v2364
    %v2368 = vxor.u32 %v2367, 2147483648
    %v2369 = vsel %vm2286, %v2368, %v2367
    %v2370 = vsub.s32 4, %v2346
    %v2371 = vsel %vm2286, %v2370, %v2346
    %v2372 = vsel %vm2285, %v1057, %v2369
    %v2373 = vsel %vm2285, 0, %v2371
    %v2374 = vcosq.f32.pop %v2372
    %v2375 = vsinq.f32.pop %v2372
    %vm2376 = vweird.f32 %v1057
    %v2377 = vadd.s32 %v2373, 3
    %v2378 = vand.u32 %v2377, 3
    %vm2379 = vcmp.lt.s32.totalorder %v2378, 2
    %vm2380 = vcmp.eq.s32.totalorder %v2378, 0
    %v2381 = vxor.u32 %v2375, 2147483648
    %v2382 = vsel %vm2380, %v2374, %v2381
    %vm2383 = vcmp.eq.s32.totalorder %v2378, 2
    %v2384 = vxor.u32 %v2374, 2147483648
    %v2385 = vsel %vm2383, %v2384, %v2375
    %v2386 = vsel %vm2379, %v2382, %v2385
    %v2387 = vsel %vm2376, nan, %v2386
    %v2388 = vand.u32 2147483647, %v2059
    %vm2389 = vcmp.le.f32.partialorder %v2388, 0.7853982
    %vm2390 = vcmp.lt.s32.totalorder %v2059, 0
    %v2391 = vand.u32 %v2059, 2139095040
    %v2392 = vshrl.u32 %v2391, 23
    %v2393 = vsub.s32 %v2392, 127
    %v2394 = vand.u32 2147483647, %v2059
    %v2395 = vand.u32 %v2394, 8388607
    %v2396 = vor.u32 %v2395, 8388608
    %v2397 = vsub.s32 0, %v2396
    %v2398 = vadd.s32 %v2393, 1
    %vm2399 = vcmp.gt.s32.totalorder %v2398, 0
    %v2400 = vsel %vm2399, %v2398, 0
    %v2401 = vshrl.u32 %v2400, 5
    %v2402 = vand.u32 %v2400, 31
    %v2403 = vsub.s32 32, %v2402
    %v2404 = vshrl.u32 683565275, %v2403
    %v2405 = vshll.u32 683565275, %v2402
    %v2406 = vshrl.u32 2475754826, %v2403
    %v2407 = vor.u32 %v2405, %v2406
    %v2408 = vshll.u32 2475754826, %v2402
    %v2409 = vshrl.u32 2131351028, %v2403
    %v2410 = vor.u32 %v2408, %v2409
    %v2411 = vshll.u32 2131351028, %v2402
    %v2412 = vshrl.u32 2102212464, %v2403
    %v2413 = vor.u32 %v2411, %v2412
    %v2414 = vshll.u32 2102212464, %v2402
    %v2415 = vshrl.u32 920167782, %v2403
    %v2416 = vor.u32 %v2414, %v2415
    %v2417 = vshll.u32 920167782, %v2402
    %v2418 = vshrl.u32 1326507024, %v2403
    %v2419 = vor.u32 %v2417, %v2418
    %vm2420 = vcmp.lt.s32.totalorder %v2401, 1
    %vm2421 = vcmp.lt.s32.totalorder %v2401, 2
    %vm2422 = vcmp.lt.s32.totalorder %v2401, 3
    %vm2423 = vcmp.lt.s32.totalorder %v2401, 4
    %v2424 = vsel %vm2420, %v2404, %v2407
    %v2425 = vsel %vm2423, %v2413, 2102212464
    %v2426 = vsel %vm2422, %v2410, %v2425
    %v2427 = vsel %vm2421, %v2424, %v2426
    %v2428 = vsel %vm2420, %v2407, %v2410
    %v2429 = vsel %vm2423, %v2416, 920167782
    %v2430 = vsel %vm2422, %v2413, %v2429
    %v2431 = vsel %vm2421, %v2428, %v2430
    %v2432 = vsel %vm2420, %v2410, %v2413
    %v2433 = vsel %vm2423, %v2419, 1326507024
    %v2434 = vsel %vm2422, %v2416, %v2433
    %v2435 = vsel %vm2421, %v2432, %v2434
    %v2436 = vshll.u32 %v2396, 8
    %v2437 = vmul.u32.u64.compose %v2436, %v2435
    %v2438 = vextract.low.u32 %v2437
    %v2439 = vextract.high.u32 %v2437
    %v2440 = vmul.u32.u64.compose %v2436, %v2431
    %v2441 = vextract.low.u32 %v2440
    %v2442 = vextract.high.u32 %v2440
    %v2443 = vmul.u32 %v2436, %v2427
    %v2444 = vadd.s32 %v2439, %v2441
    %vm2445 = vc.u32 %v2439, %v2441
    %v2446 = vadd.s32 %v2442, 1
    %v2447 = vsel %vm2445, %v2446, %v2442
    %v2448 = vadd.s32 %v2443, %v2447
    %v2449 = vadd.s32 %v2448, 536870912
    %v2450 = vshrl.u32 %v2449, 30
    %v2451 = vshll.u32 %v2450, 30
    %v2452 = vsub.s32 %v2448, %v2451
    %vm2453 = vcmp.lt.s32.totalorder %v2452, 0
    %v2454 = vsub.s32 0, %v2452
    %v2455 = vsel %vm2453, %v2454, %v2452
    %v2456 = vclz %v2455
    %v2457 = vsub.s32 %v2456, 2
    %vm2458 = vcmp.gt.s32.totalorder 0, %v2457
    %v2459 = vsel %vm2458, 0, %v2457
    %v2460 = vsub.s32 32, %v2459
    %v2461 = vshll.u32 %v2452, %v2459
    %v2462 = vshrl.u32 %v2444, %v2460
    %v2463 = vor.u32 %v2461, %v2462
    %v2464 = vsub.s32 4294967266, %v2459
    %v2465 = vadd.s32 %v2464, 127
    %v2466 = vshll.u32 %v2465, 23
    %v2467 = vor.u32 4788187, %v2466
    %v2468 = vand.u32 2147483647, %v2467
    %v2470 = vcvt.s32.f32 %v2463
    %v2471 = vmul.f32 %v2470, %v2468
    %v2472 = vxor.u32 %v2471, 2147483648
    %v2473 = vsel %vm2390, %v2472, %v2471
    %v2474 = vsub.s32 4, %v2450
    %v2475 = vsel %vm2390, %v2474, %v2450
    %v2476 = vsel %vm2389, %v2059, %v2473
    %v2477 = vsel %vm2389, 0, %v2475
    %v2478 = vcosq.f32.pop %v2476
    %v2479 = vsinq.f32.pop %v2476
    %vm2480 = vweird.f32 %v2059
    %v2481 = vadd.s32 %v2477, 3
    %v2482 = vand.u32 %v2481, 3
    %vm2483 = vcmp.lt.s32.totalorder %v2482, 2
    %vm2484 = vcmp.eq.s32.totalorder %v2482, 0
    %v2485 = vxor.u32 %v2479, 2147483648
    %v2486 = vsel %vm2484, %v2478, %v2485
    %vm2487 = vcmp.eq.s32.totalorder %v2482, 2
    %v2488 = vxor.u32 %v2478, 2147483648
    %v2489 = vsel %vm2487, %v2488, %v2479
    %v2490 = vsel %vm2483, %v2486, %v2489
    %v2491 = vsel %vm2480, nan, %v2490
    %v2492 = vand.u32 2147483647, %v2061
    %vm2493 = vcmp.le.f32.partialorder %v2492, 0.7853982
    %vm2494 = vcmp.lt.s32.totalorder %v2061, 0
    %v2495 = vand.u32 %v2061, 2139095040
    %v2496 = vshrl.u32 %v2495, 23
    %v2497 = vsub.s32 %v2496, 127
    %v2498 = vand.u32 2147483647, %v2061
    %v2499 = vand.u32 %v2498, 8388607
    %v2500 = vor.u32 %v2499, 8388608
    %v2501 = vsub.s32 0, %v2500
    %v2502 = vadd.s32 %v2497, 1
    %vm2503 = vcmp.gt.s32.totalorder %v2502, 0
    %v2504 = vsel %vm2503, %v2502, 0
    %v2505 = vshrl.u32 %v2504, 5
    %v2506 = vand.u32 %v2504, 31
    %v2507 = vsub.s32 32, %v2506
    %v2508 = vshrl.u32 683565275, %v2507
    %v2509 = vshll.u32 683565275, %v2506
    %v2510 = vshrl.u32 2475754826, %v2507
    %v2511 = vor.u32 %v2509, %v2510
    %v2512 = vshll.u32 2475754826, %v2506
    %v2513 = vshrl.u32 2131351028, %v2507
    %v2514 = vor.u32 %v2512, %v2513
    %v2515 = vshll.u32 2131351028, %v2506
    %v2516 = vshrl.u32 2102212464, %v2507
    %v2517 = vor.u32 %v2515, %v2516
    %v2518 = vshll.u32 2102212464, %v2506
    %v2519 = vshrl.u32 920167782, %v2507
    %v2520 = vor.u32 %v2518, %v2519
    %v2521 = vshll.u32 920167782, %v2506
    %v2522 = vshrl.u32 1326507024, %v2507
    %v2523 = vor.u32 %v2521, %v2522
    %vm2524 = vcmp.lt.s32.totalorder %v2505, 1
    %vm2525 = vcmp.lt.s32.totalorder %v2505, 2
    %vm2526 = vcmp.lt.s32.totalorder %v2505, 3
    %vm2527 = vcmp.lt.s32.totalorder %v2505, 4
    %v2528 = vsel %vm2524, %v2508, %v2511
    %v2529 = vsel %vm2527, %v2517, 2102212464
    %v2530 = vsel %vm2526, %v2514, %v2529
    %v2531 = vsel %vm2525, %v2528, %v2530
    %v2532 = vsel %vm2524, %v2511, %v2514
    %v2533 = vsel %vm2527, %v2520, 920167782
    %v2534 = vsel %vm2526, %v2517, %v2533
    %v2535 = vsel %vm2525, %v2532, %v2534
    %v2536 = vsel %vm2524, %v2514, %v2517
    %v2537 = vsel %vm2527, %v2523, 1326507024
    %v2538 = vsel %vm2526, %v2520, %v2537
    %v2539 = vsel %vm2525, %v2536, %v2538
    %v2540 = vshll.u32 %v2500, 8
    %v2541 = vmul.u32.u64.compose %v2540, %v2539
    %v2542 = vextract.low.u32 %v2541
    %v2543 = vextract.high.u32 %v2541
    %v2544 = vmul.u32.u64.compose %v2540, %v2535
    %v2545 = vextract.low.u32 %v2544
    %v2546 = vextract.high.u32 %v2544
    %v2547 = vmul.u32 %v2540, %v2531
    %v2548 = vadd.s32 %v2543, %v2545
    %vm2549 = vc.u32 %v2543, %v2545
    %v2550 = vadd.s32 %v2546, 1
    %v2551 = vsel %vm2549, %v2550, %v2546
    %v2552 = vadd.s32 %v2547, %v2551
    %v2553 = vadd.s32 %v2552, 536870912
    %v2554 = vshrl.u32 %v2553, 30
    %v2555 = vshll.u32 %v2554, 30
    %v2556 = vsub.s32 %v2552, %v2555
    %vm2557 = vcmp.lt.s32.totalorder %v2556, 0
    %v2558 = vsub.s32 0, %v2556
    %v2559 = vsel %vm2557, %v2558, %v2556
    %v2560 = vclz %v2559
    %v2561 = vsub.s32 %v2560, 2
    %vm2562 = vcmp.gt.s32.totalorder 0, %v2561
    %v2563 = vsel %vm2562, 0, %v2561
    %v2564 = vsub.s32 32, %v2563
    %v2565 = vshll.u32 %v2556, %v2563
    %v2566 = vshrl.u32 %v2548, %v2564
    %v2567 = vor.u32 %v2565, %v2566
    %v2568 = vsub.s32 4294967266, %v2563
    %v2569 = vadd.s32 %v2568, 127
    %v2570 = vshll.u32 %v2569, 23
    %v2571 = vor.u32 4788187, %v2570
    %v2572 = vand.u32 2147483647, %v2571
    %v2574 = vcvt.s32.f32 %v2567
    %v2575 = vmul.f32 %v2574, %v2572
    %v2576 = vxor.u32 %v2575, 2147483648
    %v2577 = vsel %vm2494, %v2576, %v2575
    %v2578 = vsub.s32 4, %v2554
    %v2579 = vsel %vm2494, %v2578, %v2554
    %v2580 = vsel %vm2493, %v2061, %v2577
    %v2581 = vsel %vm2493, 0, %v2579
    %v2582 = vcosq.f32.pop %v2580
    %v2583 = vsinq.f32.pop %v2580
    %vm2584 = vweird.f32 %v2061
    %v2585 = vadd.s32 %v2581, 3
    %v2586 = vand.u32 %v2585, 3
    %vm2587 = vcmp.lt.s32.totalorder %v2586, 2
    %vm2588 = vcmp.eq.s32.totalorder %v2586, 0
    %v2589 = vxor.u32 %v2583, 2147483648
    %v2590 = vsel %vm2588, %v2582, %v2589
    %vm2591 = vcmp.eq.s32.totalorder %v2586, 2
    %v2592 = vxor.u32 %v2582, 2147483648
    %v2593 = vsel %vm2591, %v2592, %v2583
    %v2594 = vsel %vm2587, %v2590, %v2593
    %v2595 = vsel %vm2584, nan, %v2594
    %v2596 = vand.u32 2147483647, %v1062
    %vm2597 = vcmp.le.f32.partialorder %v2596, 0.7853982
    %vm2598 = vcmp.lt.s32.totalorder %v1062, 0
    %v2599 = vand.u32 %v1062, 2139095040
    %v2600 = vshrl.u32 %v2599, 23
    %v2601 = vsub.s32 %v2600, 127
    %v2602 = vand.u32 2147483647, %v1062
    %v2603 = vand.u32 %v2602, 8388607
    %v2604 = vor.u32 %v2603, 8388608
    %v2605 = vsub.s32 0, %v2604
    %v2606 = vadd.s32 %v2601, 1
    %vm2607 = vcmp.gt.s32.totalorder %v2606, 0
    %v2608 = vsel %vm2607, %v2606, 0
    %v2609 = vshrl.u32 %v2608, 5
    %v2610 = vand.u32 %v2608, 31
    %v2611 = vsub.s32 32, %v2610
    %v2612 = vshrl.u32 683565275, %v2611
    %v2613 = vshll.u32 683565275, %v2610
    %v2614 = vshrl.u32 2475754826, %v2611
    %v2615 = vor.u32 %v2613, %v2614
    %v2616 = vshll.u32 2475754826, %v2610
    %v2617 = vshrl.u32 2131351028, %v2611
    %v2618 = vor.u32 %v2616, %v2617
    %v2619 = vshll.u32 2131351028, %v2610
    %v2620 = vshrl.u32 2102212464, %v2611
    %v2621 = vor.u32 %v2619, %v2620
    %v2622 = vshll.u32 2102212464, %v2610
    %v2623 = vshrl.u32 920167782, %v2611
    %v2624 = vor.u32 %v2622, %v2623
    %v2625 = vshll.u32 920167782, %v2610
    %v2626 = vshrl.u32 1326507024, %v2611
    %v2627 = vor.u32 %v2625, %v2626
    %vm2628 = vcmp.lt.s32.totalorder %v2609, 1
    %vm2629 = vcmp.lt.s32.totalorder %v2609, 2
    %vm2630 = vcmp.lt.s32.totalorder %v2609, 3
    %vm2631 = vcmp.lt.s32.totalorder %v2609, 4
    %v2632 = vsel %vm2628, %v2612, %v2615
    %v2633 = vsel %vm2631, %v2621, 2102212464
    %v2634 = vsel %vm2630, %v2618, %v2633
    %v2635 = vsel %vm2629, %v2632, %v2634
    %v2636 = vsel %vm2628, %v2615, %v2618
    %v2637 = vsel %vm2631, %v2624, 920167782
    %v2638 = vsel %vm2630, %v2621, %v2637
    %v2639 = vsel %vm2629, %v2636, %v2638
    %v2640 = vsel %vm2628, %v2618, %v2621
    %v2641 = vsel %vm2631, %v2627, 1326507024
    %v2642 = vsel %vm2630, %v2624, %v2641
    %v2643 = vsel %vm2629, %v2640, %v2642
    %v2644 = vshll.u32 %v2604, 8
    %v2645 = vmul.u32.u64.compose %v2644, %v2643
    %v2646 = vextract.low.u32 %v2645
    %v2647 = vextract.high.u32 %v2645
    %v2648 = vmul.u32.u64.compose %v2644, %v2639
    %v2649 = vextract.low.u32 %v2648
    %v2650 = vextract.high.u32 %v2648
    %v2651 = vmul.u32 %v2644, %v2635
    %v2652 = vadd.s32 %v2647, %v2649
    %vm2653 = vc.u32 %v2647, %v2649
    %v2654 = vadd.s32 %v2650, 1
    %v2655 = vsel %vm2653, %v2654, %v2650
    %v2656 = vadd.s32 %v2651, %v2655
    %v2657 = vadd.s32 %v2656, 536870912
    %v2658 = vshrl.u32 %v2657, 30
    %v2659 = vshll.u32 %v2658, 30
    %v2660 = vsub.s32 %v2656, %v2659
    %vm2661 = vcmp.lt.s32.totalorder %v2660, 0
    %v2662 = vsub.s32 0, %v2660
    %v2663 = vsel %vm2661, %v2662, %v2660
    %v2664 = vclz %v2663
    %v2665 = vsub.s32 %v2664, 2
    %vm2666 = vcmp.gt.s32.totalorder 0, %v2665
    %v2667 = vsel %vm2666, 0, %v2665
    %v2668 = vsub.s32 32, %v2667
    %v2669 = vshll.u32 %v2660, %v2667
    %v2670 = vshrl.u32 %v2652, %v2668
    %v2671 = vor.u32 %v2669, %v2670
    %v2672 = vsub.s32 4294967266, %v2667
    %v2673 = vadd.s32 %v2672, 127
    %v2674 = vshll.u32 %v2673, 23
    %v2675 = vor.u32 4788187, %v2674
    %v2676 = vand.u32 2147483647, %v2675
    %v2678 = vcvt.s32.f32 %v2671
    %v2679 = vmul.f32 %v2678, %v2676
    %v2680 = vxor.u32 %v2679, 2147483648
    %v2681 = vsel %vm2598, %v2680, %v2679
    %v2682 = vsub.s32 4, %v2658
    %v2683 = vsel %vm2598, %v2682, %v2658
    %v2684 = vsel %vm2597, %v1062, %v2681
    %v2685 = vsel %vm2597, 0, %v2683
    %v2686 = vcosq.f32.pop %v2684
    %v2687 = vsinq.f32.pop %v2684
    %vm2688 = vweird.f32 %v1062
    %v2689 = vadd.s32 %v2685, 3
    %v2690 = vand.u32 %v2689, 3
    %vm2691 = vcmp.lt.s32.totalorder %v2690, 2
    %vm2692 = vcmp.eq.s32.totalorder %v2690, 0
    %v2693 = vxor.u32 %v2687, 2147483648
    %v2694 = vsel %vm2692, %v2686, %v2693
    %vm2695 = vcmp.eq.s32.totalorder %v2690, 2
    %v2696 = vxor.u32 %v2686, 2147483648
    %v2697 = vsel %vm2695, %v2696, %v2687
    %v2698 = vsel %vm2691, %v2694, %v2697
    %v2699 = vsel %vm2688, nan, %v2698
    %v2700 = vand.u32 2147483647, %v1064
    %vm2701 = vcmp.le.f32.partialorder %v2700, 0.7853982
    %vm2702 = vcmp.lt.s32.totalorder %v1064, 0
    %v2703 = vand.u32 %v1064, 2139095040
    %v2704 = vshrl.u32 %v2703, 23
    %v2705 = vsub.s32 %v2704, 127
    %v2706 = vand.u32 2147483647, %v1064
    %v2707 = vand.u32 %v2706, 8388607
    %v2708 = vor.u32 %v2707, 8388608
    %v2709 = vsub.s32 0, %v2708
    %v2710 = vadd.s32 %v2705, 1
    %vm2711 = vcmp.gt.s32.totalorder %v2710, 0
    %v2712 = vsel %vm2711, %v2710, 0
    %v2713 = vshrl.u32 %v2712, 5
    %v2714 = vand.u32 %v2712, 31
    %v2715 = vsub.s32 32, %v2714
    %v2716 = vshrl.u32 683565275, %v2715
    %v2717 = vshll.u32 683565275, %v2714
    %v2718 = vshrl.u32 2475754826, %v2715
    %v2719 = vor.u32 %v2717, %v2718
    %v2720 = vshll.u32 2475754826, %v2714
    %v2721 = vshrl.u32 2131351028, %v2715
    %v2722 = vor.u32 %v2720, %v2721
    %v2723 = vshll.u32 2131351028, %v2714
    %v2724 = vshrl.u32 2102212464, %v2715
    %v2725 = vor.u32 %v2723, %v2724
    %v2726 = vshll.u32 2102212464, %v2714
    %v2727 = vshrl.u32 920167782, %v2715
    %v2728 = vor.u32 %v2726, %v2727
    %v2729 = vshll.u32 920167782, %v2714
    %v2730 = vshrl.u32 1326507024, %v2715
    %v2731 = vor.u32 %v2729, %v2730
    %vm2732 = vcmp.lt.s32.totalorder %v2713, 1
    %vm2733 = vcmp.lt.s32.totalorder %v2713, 2
    %vm2734 = vcmp.lt.s32.totalorder %v2713, 3
    %vm2735 = vcmp.lt.s32.totalorder %v2713, 4
    %v2736 = vsel %vm2732, %v2716, %v2719
    %v2737 = vsel %vm2735, %v2725, 2102212464
    %v2738 = vsel %vm2734, %v2722, %v2737
    %v2739 = vsel %vm2733, %v2736, %v2738
    %v2740 = vsel %vm2732, %v2719, %v2722
    %v2741 = vsel %vm2735, %v2728, 920167782
    %v2742 = vsel %vm2734, %v2725, %v2741
    %v2743 = vsel %vm2733, %v2740, %v2742
    %v2744 = vsel %vm2732, %v2722, %v2725
    %v2745 = vsel %vm2735, %v2731, 1326507024
    %v2746 = vsel %vm2734, %v2728, %v2745
    %v2747 = vsel %vm2733, %v2744, %v2746
    %v2748 = vshll.u32 %v2708, 8
    %v2749 = vmul.u32.u64.compose %v2748, %v2747
    %v2750 = vextract.low.u32 %v2749
    %v2751 = vextract.high.u32 %v2749
    %v2752 = vmul.u32.u64.compose %v2748, %v2743
    %v2753 = vextract.low.u32 %v2752
    %v2754 = vextract.high.u32 %v2752
    %v2755 = vmul.u32 %v2748, %v2739
    %v2756 = vadd.s32 %v2751, %v2753
    %vm2757 = vc.u32 %v2751, %v2753
    %v2758 = vadd.s32 %v2754, 1
    %v2759 = vsel %vm2757, %v2758, %v2754
    %v2760 = vadd.s32 %v2755, %v2759
    %v2761 = vadd.s32 %v2760, 536870912
    %v2762 = vshrl.u32 %v2761, 30
    %v2763 = vshll.u32 %v2762, 30
    %v2764 = vsub.s32 %v2760, %v2763
    %vm2765 = vcmp.lt.s32.totalorder %v2764, 0
    %v2766 = vsub.s32 0, %v2764
    %v2767 = vsel %vm2765, %v2766, %v2764
    %v2768 = vclz %v2767
    %v2769 = vsub.s32 %v2768, 2
    %vm2770 = vcmp.gt.s32.totalorder 0, %v2769
    %v2771 = vsel %vm2770, 0, %v2769
    %v2772 = vsub.s32 32, %v2771
    %v2773 = vshll.u32 %v2764, %v2771
    %v2774 = vshrl.u32 %v2756, %v2772
    %v2775 = vor.u32 %v2773, %v2774
    %v2776 = vsub.s32 4294967266, %v2771
    %v2777 = vadd.s32 %v2776, 127
    %v2778 = vshll.u32 %v2777, 23
    %v2779 = vor.u32 4788187, %v2778
    %v2780 = vand.u32 2147483647, %v2779
    %v2782 = vcvt.s32.f32 %v2775
    %v2783 = vmul.f32 %v2782, %v2780
    %v2784 = vxor.u32 %v2783, 2147483648
    %v2785 = vsel %vm2702, %v2784, %v2783
    %v2786 = vsub.s32 4, %v2762
    %v2787 = vsel %vm2702, %v2786, %v2762
    %v2788 = vsel %vm2701, %v1064, %v2785
    %v2789 = vsel %vm2701, 0, %v2787
    %v2790 = vcosq.f32.pop %v2788
    %v2791 = vsinq.f32.pop %v2788
    %vm2792 = vweird.f32 %v1064
    %v2793 = vadd.s32 %v2789, 3
    %v2794 = vand.u32 %v2793, 3
    %vm2795 = vcmp.lt.s32.totalorder %v2794, 2
    %vm2796 = vcmp.eq.s32.totalorder %v2794, 0
    %v2797 = vxor.u32 %v2791, 2147483648
    %v2798 = vsel %vm2796, %v2790, %v2797
    %vm2799 = vcmp.eq.s32.totalorder %v2794, 2
    %v2800 = vxor.u32 %v2790, 2147483648
    %v2801 = vsel %vm2799, %v2800, %v2791
    %v2802 = vsel %vm2795, %v2798, %v2801
    %v2803 = vsel %vm2792, nan, %v2802
    %v2804 = vand.u32 2147483647, %v2066
    %vm2805 = vcmp.le.f32.partialorder %v2804, 0.7853982
    %vm2806 = vcmp.lt.s32.totalorder %v2066, 0
    %v2807 = vand.u32 %v2066, 2139095040
    %v2808 = vshrl.u32 %v2807, 23
    %v2809 = vsub.s32 %v2808, 127
    %v2810 = vand.u32 2147483647, %v2066
    %v2811 = vand.u32 %v2810, 8388607
    %v2812 = vor.u32 %v2811, 8388608
    %v2813 = vsub.s32 0, %v2812
    %v2814 = vadd.s32 %v2809, 1
    %vm2815 = vcmp.gt.s32.totalorder %v2814, 0
    %v2816 = vsel %vm2815, %v2814, 0
    %v2817 = vshrl.u32 %v2816, 5
    %v2818 = vand.u32 %v2816, 31
    %v2819 = vsub.s32 32, %v2818
    %v2820 = vshrl.u32 683565275, %v2819
    %v2821 = vshll.u32 683565275, %v2818
    %v2822 = vshrl.u32 2475754826, %v2819
    %v2823 = vor.u32 %v2821, %v2822
    %v2824 = vshll.u32 2475754826, %v2818
    %v2825 = vshrl.u32 2131351028, %v2819
    %v2826 = vor.u32 %v2824, %v2825
    %v2827 = vshll.u32 2131351028, %v2818
    %v2828 = vshrl.u32 2102212464, %v2819
    %v2829 = vor.u32 %v2827, %v2828
    %v2830 = vshll.u32 2102212464, %v2818
    %v2831 = vshrl.u32 920167782, %v2819
    %v2832 = vor.u32 %v2830, %v2831
    %v2833 = vshll.u32 920167782, %v2818
    %v2834 = vshrl.u32 1326507024, %v2819
    %v2835 = vor.u32 %v2833, %v2834
    %vm2836 = vcmp.lt.s32.totalorder %v2817, 1
    %vm2837 = vcmp.lt.s32.totalorder %v2817, 2
    %vm2838 = vcmp.lt.s32.totalorder %v2817, 3
    %vm2839 = vcmp.lt.s32.totalorder %v2817, 4
    %v2840 = vsel %vm2836, %v2820, %v2823
    %v2841 = vsel %vm2839, %v2829, 2102212464
    %v2842 = vsel %vm2838, %v2826, %v2841
    %v2843 = vsel %vm2837, %v2840, %v2842
    %v2844 = vsel %vm2836, %v2823, %v2826
    %v2845 = vsel %vm2839, %v2832, 920167782
    %v2846 = vsel %vm2838, %v2829, %v2845
    %v2847 = vsel %vm2837, %v2844, %v2846
    %v2848 = vsel %vm2836, %v2826, %v2829
    %v2849 = vsel %vm2839, %v2835, 1326507024
    %v2850 = vsel %vm2838, %v2832, %v2849
    %v2851 = vsel %vm2837, %v2848, %v2850
    %v2852 = vshll.u32 %v2812, 8
    %v2853 = vmul.u32.u64.compose %v2852, %v2851
    %v2854 = vextract.low.u32 %v2853
    %v2855 = vextract.high.u32 %v2853
    %v2856 = vmul.u32.u64.compose %v2852, %v2847
    %v2857 = vextract.low.u32 %v2856
    %v2858 = vextract.high.u32 %v2856
    %v2859 = vmul.u32 %v2852, %v2843
    %v2860 = vadd.s32 %v2855, %v2857
    %vm2861 = vc.u32 %v2855, %v2857
    %v2862 = vadd.s32 %v2858, 1
    %v2863 = vsel %vm2861, %v2862, %v2858
    %v2864 = vadd.s32 %v2859, %v2863
    %v2865 = vadd.s32 %v2864, 536870912
    %v2866 = vshrl.u32 %v2865, 30
    %v2867 = vshll.u32 %v2866, 30
    %v2868 = vsub.s32 %v2864, %v2867
    %vm2869 = vcmp.lt.s32.totalorder %v2868, 0
    %v2870 = vsub.s32 0, %v2868
    %v2871 = vsel %vm2869, %v2870, %v2868
    %v2872 = vclz %v2871
    %v2873 = vsub.s32 %v2872, 2
    %vm2874 = vcmp.gt.s32.totalorder 0, %v2873
    %v2875 = vsel %vm2874, 0, %v2873
    %v2876 = vsub.s32 32, %v2875
    %v2877 = vshll.u32 %v2868, %v2875
    %v2878 = vshrl.u32 %v2860, %v2876
    %v2879 = vor.u32 %v2877, %v2878
    %v2880 = vsub.s32 4294967266, %v2875
    %v2881 = vadd.s32 %v2880, 127
    %v2882 = vshll.u32 %v2881, 23
    %v2883 = vor.u32 4788187, %v2882
    %v2884 = vand.u32 2147483647, %v2883
    %v2886 = vcvt.s32.f32 %v2879
    %v2887 = vmul.f32 %v2886, %v2884
    %v2888 = vxor.u32 %v2887, 2147483648
    %v2889 = vsel %vm2806, %v2888, %v2887
    %v2890 = vsub.s32 4, %v2866
    %v2891 = vsel %vm2806, %v2890, %v2866
    %v2892 = vsel %vm2805, %v2066, %v2889
    %v2893 = vsel %vm2805, 0, %v2891
    %v2894 = vcosq.f32.pop %v2892
    %v2895 = vsinq.f32.pop %v2892
    %vm2896 = vweird.f32 %v2066
    %v2897 = vadd.s32 %v2893, 3
    %v2898 = vand.u32 %v2897, 3
    %vm2899 = vcmp.lt.s32.totalorder %v2898, 2
    %vm2900 = vcmp.eq.s32.totalorder %v2898, 0
    %v2901 = vxor.u32 %v2895, 2147483648
    %v2902 = vsel %vm2900, %v2894, %v2901
    %vm2903 = vcmp.eq.s32.totalorder %v2898, 2
    %v2904 = vxor.u32 %v2894, 2147483648
    %v2905 = vsel %vm2903, %v2904, %v2895
    %v2906 = vsel %vm2899, %v2902, %v2905
    %v2907 = vsel %vm2896, nan, %v2906
    %v2908 = vand.u32 2147483647, %v2068
    %vm2909 = vcmp.le.f32.partialorder %v2908, 0.7853982
    %vm2910 = vcmp.lt.s32.totalorder %v2068, 0
    %v2911 = vand.u32 %v2068, 2139095040
    %v2912 = vshrl.u32 %v2911, 23
    %v2913 = vsub.s32 %v2912, 127
    %v2914 = vand.u32 2147483647, %v2068
    %v2915 = vand.u32 %v2914, 8388607
    %v2916 = vor.u32 %v2915, 8388608
    %v2917 = vsub.s32 0, %v2916
    %v2918 = vadd.s32 %v2913, 1
    %vm2919 = vcmp.gt.s32.totalorder %v2918, 0
    %v2920 = vsel %vm2919, %v2918, 0
    %v2921 = vshrl.u32 %v2920, 5
    %v2922 = vand.u32 %v2920, 31
    %v2923 = vsub.s32 32, %v2922
    %v2924 = vshrl.u32 683565275, %v2923
    %v2925 = vshll.u32 683565275, %v2922
    %v2926 = vshrl.u32 2475754826, %v2923
    %v2927 = vor.u32 %v2925, %v2926
    %v2928 = vshll.u32 2475754826, %v2922
    %v2929 = vshrl.u32 2131351028, %v2923
    %v2930 = vor.u32 %v2928, %v2929
    %v2931 = vshll.u32 2131351028, %v2922
    %v2932 = vshrl.u32 2102212464, %v2923
    %v2933 = vor.u32 %v2931, %v2932
    %v2934 = vshll.u32 2102212464, %v2922
    %v2935 = vshrl.u32 920167782, %v2923
    %v2936 = vor.u32 %v2934, %v2935
    %v2937 = vshll.u32 920167782, %v2922
    %v2938 = vshrl.u32 1326507024, %v2923
    %v2939 = vor.u32 %v2937, %v2938
    %vm2940 = vcmp.lt.s32.totalorder %v2921, 1
    %vm2941 = vcmp.lt.s32.totalorder %v2921, 2
    %vm2942 = vcmp.lt.s32.totalorder %v2921, 3
    %vm2943 = vcmp.lt.s32.totalorder %v2921, 4
    %v2944 = vsel %vm2940, %v2924, %v2927
    %v2945 = vsel %vm2943, %v2933, 2102212464
    %v2946 = vsel %vm2942, %v2930, %v2945
    %v2947 = vsel %vm2941, %v2944, %v2946
    %v2948 = vsel %vm2940, %v2927, %v2930
    %v2949 = vsel %vm2943, %v2936, 920167782
    %v2950 = vsel %vm2942, %v2933, %v2949
    %v2951 = vsel %vm2941, %v2948, %v2950
    %v2952 = vsel %vm2940, %v2930, %v2933
    %v2953 = vsel %vm2943, %v2939, 1326507024
    %v2954 = vsel %vm2942, %v2936, %v2953
    %v2955 = vsel %vm2941, %v2952, %v2954
    %v2956 = vshll.u32 %v2916, 8
    %v2957 = vmul.u32.u64.compose %v2956, %v2955
    %v2958 = vextract.low.u32 %v2957
    %v2959 = vextract.high.u32 %v2957
    %v2960 = vmul.u32.u64.compose %v2956, %v2951
    %v2961 = vextract.low.u32 %v2960
    %v2962 = vextract.high.u32 %v2960
    %v2963 = vmul.u32 %v2956, %v2947
    %v2964 = vadd.s32 %v2959, %v2961
    %vm2965 = vc.u32 %v2959, %v2961
    %v2966 = vadd.s32 %v2962, 1
    %v2967 = vsel %vm2965, %v2966, %v2962
    %v2968 = vadd.s32 %v2963, %v2967
    %v2969 = vadd.s32 %v2968, 536870912
    %v2970 = vshrl.u32 %v2969, 30
    %v2971 = vshll.u32 %v2970, 30
    %v2972 = vsub.s32 %v2968, %v2971
    %vm2973 = vcmp.lt.s32.totalorder %v2972, 0
    %v2974 = vsub.s32 0, %v2972
    %v2975 = vsel %vm2973, %v2974, %v2972
    %v2976 = vclz %v2975
    %v2977 = vsub.s32 %v2976, 2
    %vm2978 = vcmp.gt.s32.totalorder 0, %v2977
    %v2979 = vsel %vm2978, 0, %v2977
    %v2980 = vsub.s32 32, %v2979
    %v2981 = vshll.u32 %v2972, %v2979
    %v2982 = vshrl.u32 %v2964, %v2980
    %v2983 = vor.u32 %v2981, %v2982
    %v2984 = vsub.s32 4294967266, %v2979
    %v2985 = vadd.s32 %v2984, 127
    %v2986 = vshll.u32 %v2985, 23
    %v2987 = vor.u32 4788187, %v2986
    %v2988 = vand.u32 2147483647, %v2987
    %v2990 = vcvt.s32.f32 %v2983
    %v2991 = vmul.f32 %v2990, %v2988
    %v2992 = vxor.u32 %v2991, 2147483648
    %v2993 = vsel %vm2910, %v2992, %v2991
    %v2994 = vsub.s32 4, %v2970
    %v2995 = vsel %vm2910, %v2994, %v2970
    %v2996 = vsel %vm2909, %v2068, %v2993
    %v2997 = vsel %vm2909, 0, %v2995
    %v2998 = vcosq.f32.pop %v2996
    %v2999 = vsinq.f32.pop %v2996
    %vm3000 = vweird.f32 %v2068
    %v3001 = vadd.s32 %v2997, 3
    %v3002 = vand.u32 %v3001, 3
    %vm3003 = vcmp.lt.s32.totalorder %v3002, 2
    %vm3004 = vcmp.eq.s32.totalorder %v3002, 0
    %v3005 = vxor.u32 %v2999, 2147483648
    %v3006 = vsel %vm3004, %v2998, %v3005
    %vm3007 = vcmp.eq.s32.totalorder %v3002, 2
    %v3008 = vxor.u32 %v2998, 2147483648
    %v3009 = vsel %vm3007, %v3008, %v2999
    %v3010 = vsel %vm3003, %v3006, %v3009
    %v3011 = vsel %vm3000, nan, %v3010
    %v3012 = vand.u32 2147483647, %v1069
    %vm3013 = vcmp.le.f32.partialorder %v3012, 0.7853982
    %vm3014 = vcmp.lt.s32.totalorder %v1069, 0
    %v3015 = vand.u32 %v1069, 2139095040
    %v3016 = vshrl.u32 %v3015, 23
    %v3017 = vsub.s32 %v3016, 127
    %v3018 = vand.u32 2147483647, %v1069
    %v3019 = vand.u32 %v3018, 8388607
    %v3020 = vor.u32 %v3019, 8388608
    %v3021 = vsub.s32 0, %v3020
    %v3022 = vadd.s32 %v3017, 1
    %vm3023 = vcmp.gt.s32.totalorder %v3022, 0
    %v3024 = vsel %vm3023, %v3022, 0
    %v3025 = vshrl.u32 %v3024, 5
    %v3026 = vand.u32 %v3024, 31
    %v3027 = vsub.s32 32, %v3026
    %v3028 = vshrl.u32 683565275, %v3027
    %v3029 = vshll.u32 683565275, %v3026
    %v3030 = vshrl.u32 2475754826, %v3027
    %v3031 = vor.u32 %v3029, %v3030
    %v3032 = vshll.u32 2475754826, %v3026
    %v3033 = vshrl.u32 2131351028, %v3027
    %v3034 = vor.u32 %v3032, %v3033
    %v3035 = vshll.u32 2131351028, %v3026
    %v3036 = vshrl.u32 2102212464, %v3027
    %v3037 = vor.u32 %v3035, %v3036
    %v3038 = vshll.u32 2102212464, %v3026
    %v3039 = vshrl.u32 920167782, %v3027
    %v3040 = vor.u32 %v3038, %v3039
    %v3041 = vshll.u32 920167782, %v3026
    %v3042 = vshrl.u32 1326507024, %v3027
    %v3043 = vor.u32 %v3041, %v3042
    %vm3044 = vcmp.lt.s32.totalorder %v3025, 1
    %vm3045 = vcmp.lt.s32.totalorder %v3025, 2
    %vm3046 = vcmp.lt.s32.totalorder %v3025, 3
    %vm3047 = vcmp.lt.s32.totalorder %v3025, 4
    %v3048 = vsel %vm3044, %v3028, %v3031
    %v3049 = vsel %vm3047, %v3037, 2102212464
    %v3050 = vsel %vm3046, %v3034, %v3049
    %v3051 = vsel %vm3045, %v3048, %v3050
    %v3052 = vsel %vm3044, %v3031, %v3034
    %v3053 = vsel %vm3047, %v3040, 920167782
    %v3054 = vsel %vm3046, %v3037, %v3053
    %v3055 = vsel %vm3045, %v3052, %v3054
    %v3056 = vsel %vm3044, %v3034, %v3037
    %v3057 = vsel %vm3047, %v3043, 1326507024
    %v3058 = vsel %vm3046, %v3040, %v3057
    %v3059 = vsel %vm3045, %v3056, %v3058
    %v3060 = vshll.u32 %v3020, 8
    %v3061 = vmul.u32.u64.compose %v3060, %v3059
    %v3062 = vextract.low.u32 %v3061
    %v3063 = vextract.high.u32 %v3061
    %v3064 = vmul.u32.u64.compose %v3060, %v3055
    %v3065 = vextract.low.u32 %v3064
    %v3066 = vextract.high.u32 %v3064
    %v3067 = vmul.u32 %v3060, %v3051
    %v3068 = vadd.s32 %v3063, %v3065
    %vm3069 = vc.u32 %v3063, %v3065
    %v3070 = vadd.s32 %v3066, 1
    %v3071 = vsel %vm3069, %v3070, %v3066
    %v3072 = vadd.s32 %v3067, %v3071
    %v3073 = vadd.s32 %v3072, 536870912
    %v3074 = vshrl.u32 %v3073, 30
    %v3075 = vshll.u32 %v3074, 30
    %v3076 = vsub.s32 %v3072, %v3075
    %vm3077 = vcmp.lt.s32.totalorder %v3076, 0
    %v3078 = vsub.s32 0, %v3076
    %v3079 = vsel %vm3077, %v3078, %v3076
    %v3080 = vclz %v3079
    %v3081 = vsub.s32 %v3080, 2
    %vm3082 = vcmp.gt.s32.totalorder 0, %v3081
    %v3083 = vsel %vm3082, 0, %v3081
    %v3084 = vsub.s32 32, %v3083
    %v3085 = vshll.u32 %v3076, %v3083
    %v3086 = vshrl.u32 %v3068, %v3084
    %v3087 = vor.u32 %v3085, %v3086
    %v3088 = vsub.s32 4294967266, %v3083
    %v3089 = vadd.s32 %v3088, 127
    %v3090 = vshll.u32 %v3089, 23
    %v3091 = vor.u32 4788187, %v3090
    %v3092 = vand.u32 2147483647, %v3091
    %v3094 = vcvt.s32.f32 %v3087
    %v3095 = vmul.f32 %v3094, %v3092
    %v3096 = vxor.u32 %v3095, 2147483648
    %v3097 = vsel %vm3014, %v3096, %v3095
    %v3098 = vsub.s32 4, %v3074
    %v3099 = vsel %vm3014, %v3098, %v3074
    %v3100 = vsel %vm3013, %v1069, %v3097
    %v3101 = vsel %vm3013, 0, %v3099
    %v3102 = vcosq.f32.pop %v3100
    %v3103 = vsinq.f32.pop %v3100
    %vm3104 = vweird.f32 %v1069
    %v3105 = vadd.s32 %v3101, 3
    %v3106 = vand.u32 %v3105, 3
    %vm3107 = vcmp.lt.s32.totalorder %v3106, 2
    %vm3108 = vcmp.eq.s32.totalorder %v3106, 0
    %v3109 = vxor.u32 %v3103, 2147483648
    %v3110 = vsel %vm3108, %v3102, %v3109
    %vm3111 = vcmp.eq.s32.totalorder %v3106, 2
    %v3112 = vxor.u32 %v3102, 2147483648
    %v3113 = vsel %vm3111, %v3112, %v3103
    %v3114 = vsel %vm3107, %v3110, %v3113
    %v3115 = vsel %vm3104, nan, %v3114
    %v3116 = vand.u32 2147483647, %v1071
    %vm3117 = vcmp.le.f32.partialorder %v3116, 0.7853982
    %vm3118 = vcmp.lt.s32.totalorder %v1071, 0
    %v3119 = vand.u32 %v1071, 2139095040
    %v3120 = vshrl.u32 %v3119, 23
    %v3121 = vsub.s32 %v3120, 127
    %v3122 = vand.u32 2147483647, %v1071
    %v3123 = vand.u32 %v3122, 8388607
    %v3124 = vor.u32 %v3123, 8388608
    %v3125 = vsub.s32 0, %v3124
    %v3126 = vadd.s32 %v3121, 1
    %vm3127 = vcmp.gt.s32.totalorder %v3126, 0
    %v3128 = vsel %vm3127, %v3126, 0
    %v3129 = vshrl.u32 %v3128, 5
    %v3130 = vand.u32 %v3128, 31
    %v3131 = vsub.s32 32, %v3130
    %v3132 = vshrl.u32 683565275, %v3131
    %v3133 = vshll.u32 683565275, %v3130
    %v3134 = vshrl.u32 2475754826, %v3131
    %v3135 = vor.u32 %v3133, %v3134
    %v3136 = vshll.u32 2475754826, %v3130
    %v3137 = vshrl.u32 2131351028, %v3131
    %v3138 = vor.u32 %v3136, %v3137
    %v3139 = vshll.u32 2131351028, %v3130
    %v3140 = vshrl.u32 2102212464, %v3131
    %v3141 = vor.u32 %v3139, %v3140
    %v3142 = vshll.u32 2102212464, %v3130
    %v3143 = vshrl.u32 920167782, %v3131
    %v3144 = vor.u32 %v3142, %v3143
    %v3145 = vshll.u32 920167782, %v3130
    %v3146 = vshrl.u32 1326507024, %v3131
    %v3147 = vor.u32 %v3145, %v3146
    %vm3148 = vcmp.lt.s32.totalorder %v3129, 1
    %vm3149 = vcmp.lt.s32.totalorder %v3129, 2
    %vm3150 = vcmp.lt.s32.totalorder %v3129, 3
    %vm3151 = vcmp.lt.s32.totalorder %v3129, 4
    %v3152 = vsel %vm3148, %v3132, %v3135
    %v3153 = vsel %vm3151, %v3141, 2102212464
    %v3154 = vsel %vm3150, %v3138, %v3153
    %v3155 = vsel %vm3149, %v3152, %v3154
    %v3156 = vsel %vm3148, %v3135, %v3138
    %v3157 = vsel %vm3151, %v3144, 920167782
    %v3158 = vsel %vm3150, %v3141, %v3157
    %v3159 = vsel %vm3149, %v3156, %v3158
    %v3160 = vsel %vm3148, %v3138, %v3141
    %v3161 = vsel %vm3151, %v3147, 1326507024
    %v3162 = vsel %vm3150, %v3144, %v3161
    %v3163 = vsel %vm3149, %v3160, %v3162
    %v3164 = vshll.u32 %v3124, 8
    %v3165 = vmul.u32.u64.compose %v3164, %v3163
    %v3166 = vextract.low.u32 %v3165
    %v3167 = vextract.high.u32 %v3165
    %v3168 = vmul.u32.u64.compose %v3164, %v3159
    %v3169 = vextract.low.u32 %v3168
    %v3170 = vextract.high.u32 %v3168
    %v3171 = vmul.u32 %v3164, %v3155
    %v3172 = vadd.s32 %v3167, %v3169
    %vm3173 = vc.u32 %v3167, %v3169
    %v3174 = vadd.s32 %v3170, 1
    %v3175 = vsel %vm3173, %v3174, %v3170
    %v3176 = vadd.s32 %v3171, %v3175
    %v3177 = vadd.s32 %v3176, 536870912
    %v3178 = vshrl.u32 %v3177, 30
    %v3179 = vshll.u32 %v3178, 30
    %v3180 = vsub.s32 %v3176, %v3179
    %vm3181 = vcmp.lt.s32.totalorder %v3180, 0
    %v3182 = vsub.s32 0, %v3180
    %v3183 = vsel %vm3181, %v3182, %v3180
    %v3184 = vclz %v3183
    %v3185 = vsub.s32 %v3184, 2
    %vm3186 = vcmp.gt.s32.totalorder 0, %v3185
    %v3187 = vsel %vm3186, 0, %v3185
    %v3188 = vsub.s32 32, %v3187
    %v3189 = vshll.u32 %v3180, %v3187
    %v3190 = vshrl.u32 %v3172, %v3188
    %v3191 = vor.u32 %v3189, %v3190
    %v3192 = vsub.s32 4294967266, %v3187
    %v3193 = vadd.s32 %v3192, 127
    %v3194 = vshll.u32 %v3193, 23
    %v3195 = vor.u32 4788187, %v3194
    %v3196 = vand.u32 2147483647, %v3195
    %v3198 = vcvt.s32.f32 %v3191
    %v3199 = vmul.f32 %v3198, %v3196
    %v3200 = vxor.u32 %v3199, 2147483648
    %v3201 = vsel %vm3118, %v3200, %v3199
    %v3202 = vsub.s32 4, %v3178
    %v3203 = vsel %vm3118, %v3202, %v3178
    %v3204 = vsel %vm3117, %v1071, %v3201
    %v3205 = vsel %vm3117, 0, %v3203
    %v3206 = vcosq.f32.pop %v3204
    %v3207 = vsinq.f32.pop %v3204
    %vm3208 = vweird.f32 %v1071
    %v3209 = vadd.s32 %v3205, 3
    %v3210 = vand.u32 %v3209, 3
    %vm3211 = vcmp.lt.s32.totalorder %v3210, 2
    %vm3212 = vcmp.eq.s32.totalorder %v3210, 0
    %v3213 = vxor.u32 %v3207, 2147483648
    %v3214 = vsel %vm3212, %v3206, %v3213
    %vm3215 = vcmp.eq.s32.totalorder %v3210, 2
    %v3216 = vxor.u32 %v3206, 2147483648
    %v3217 = vsel %vm3215, %v3216, %v3207
    %v3218 = vsel %vm3211, %v3214, %v3217
    %v3219 = vsel %vm3208, nan, %v3218
    %v3220 = vand.u32 2147483647, %v2073
    %vm3221 = vcmp.le.f32.partialorder %v3220, 0.7853982
    %vm3222 = vcmp.lt.s32.totalorder %v2073, 0
    %v3223 = vand.u32 %v2073, 2139095040
    %v3224 = vshrl.u32 %v3223, 23
    %v3225 = vsub.s32 %v3224, 127
    %v3226 = vand.u32 2147483647, %v2073
    %v3227 = vand.u32 %v3226, 8388607
    %v3228 = vor.u32 %v3227, 8388608
    %v3229 = vsub.s32 0, %v3228
    %v3230 = vadd.s32 %v3225, 1
    %vm3231 = vcmp.gt.s32.totalorder %v3230, 0
    %v3232 = vsel %vm3231, %v3230, 0
    %v3233 = vshrl.u32 %v3232, 5
    %v3234 = vand.u32 %v3232, 31
    %v3235 = vsub.s32 32, %v3234
    %v3236 = vshrl.u32 683565275, %v3235
    %v3237 = vshll.u32 683565275, %v3234
    %v3238 = vshrl.u32 2475754826, %v3235
    %v3239 = vor.u32 %v3237, %v3238
    %v3240 = vshll.u32 2475754826, %v3234
    %v3241 = vshrl.u32 2131351028, %v3235
    %v3242 = vor.u32 %v3240, %v3241
    %v3243 = vshll.u32 2131351028, %v3234
    %v3244 = vshrl.u32 2102212464, %v3235
    %v3245 = vor.u32 %v3243, %v3244
    %v3246 = vshll.u32 2102212464, %v3234
    %v3247 = vshrl.u32 920167782, %v3235
    %v3248 = vor.u32 %v3246, %v3247
    %v3249 = vshll.u32 920167782, %v3234
    %v3250 = vshrl.u32 1326507024, %v3235
    %v3251 = vor.u32 %v3249, %v3250
    %vm3252 = vcmp.lt.s32.totalorder %v3233, 1
    %vm3253 = vcmp.lt.s32.totalorder %v3233, 2
    %vm3254 = vcmp.lt.s32.totalorder %v3233, 3
    %vm3255 = vcmp.lt.s32.totalorder %v3233, 4
    %v3256 = vsel %vm3252, %v3236, %v3239
    %v3257 = vsel %vm3255, %v3245, 2102212464
    %v3258 = vsel %vm3254, %v3242, %v3257
    %v3259 = vsel %vm3253, %v3256, %v3258
    %v3260 = vsel %vm3252, %v3239, %v3242
    %v3261 = vsel %vm3255, %v3248, 920167782
    %v3262 = vsel %vm3254, %v3245, %v3261
    %v3263 = vsel %vm3253, %v3260, %v3262
    %v3264 = vsel %vm3252, %v3242, %v3245
    %v3265 = vsel %vm3255, %v3251, 1326507024
    %v3266 = vsel %vm3254, %v3248, %v3265
    %v3267 = vsel %vm3253, %v3264, %v3266
    %v3268 = vshll.u32 %v3228, 8
    %v3269 = vmul.u32.u64.compose %v3268, %v3267
    %v3270 = vextract.low.u32 %v3269
    %v3271 = vextract.high.u32 %v3269
    %v3272 = vmul.u32.u64.compose %v3268, %v3263
    %v3273 = vextract.low.u32 %v3272
    %v3274 = vextract.high.u32 %v3272
    %v3275 = vmul.u32 %v3268, %v3259
    %v3276 = vadd.s32 %v3271, %v3273
    %vm3277 = vc.u32 %v3271, %v3273
    %v3278 = vadd.s32 %v3274, 1
    %v3279 = vsel %vm3277, %v3278, %v3274
    %v3280 = vadd.s32 %v3275, %v3279
    %v3281 = vadd.s32 %v3280, 536870912
    %v3282 = vshrl.u32 %v3281, 30
    %v3283 = vshll.u32 %v3282, 30
    %v3284 = vsub.s32 %v3280, %v3283
    %vm3285 = vcmp.lt.s32.totalorder %v3284, 0
    %v3286 = vsub.s32 0, %v3284
    %v3287 = vsel %vm3285, %v3286, %v3284
    %v3288 = vclz %v3287
    %v3289 = vsub.s32 %v3288, 2
    %vm3290 = vcmp.gt.s32.totalorder 0, %v3289
    %v3291 = vsel %vm3290, 0, %v3289
    %v3292 = vsub.s32 32, %v3291
    %v3293 = vshll.u32 %v3284, %v3291
    %v3294 = vshrl.u32 %v3276, %v3292
    %v3295 = vor.u32 %v3293, %v3294
    %v3296 = vsub.s32 4294967266, %v3291
    %v3297 = vadd.s32 %v3296, 127
    %v3298 = vshll.u32 %v3297, 23
    %v3299 = vor.u32 4788187, %v3298
    %v3300 = vand.u32 2147483647, %v3299
    %v3302 = vcvt.s32.f32 %v3295
    %v3303 = vmul.f32 %v3302, %v3300
    %v3304 = vxor.u32 %v3303, 2147483648
    %v3305 = vsel %vm3222, %v3304, %v3303
    %v3306 = vsub.s32 4, %v3282
    %v3307 = vsel %vm3222, %v3306, %v3282
    %v3308 = vsel %vm3221, %v2073, %v3305
    %v3309 = vsel %vm3221, 0, %v3307
    %v3310 = vcosq.f32.pop %v3308
    %v3311 = vsinq.f32.pop %v3308
    %vm3312 = vweird.f32 %v2073
    %v3313 = vadd.s32 %v3309, 3
    %v3314 = vand.u32 %v3313, 3
    %vm3315 = vcmp.lt.s32.totalorder %v3314, 2
    %vm3316 = vcmp.eq.s32.totalorder %v3314, 0
    %v3317 = vxor.u32 %v3311, 2147483648
    %v3318 = vsel %vm3316, %v3310, %v3317
    %vm3319 = vcmp.eq.s32.totalorder %v3314, 2
    %v3320 = vxor.u32 %v3310, 2147483648
    %v3321 = vsel %vm3319, %v3320, %v3311
    %v3322 = vsel %vm3315, %v3318, %v3321
    %v3323 = vsel %vm3312, nan, %v3322
    %v3324 = vand.u32 2147483647, %v2075
    %vm3325 = vcmp.le.f32.partialorder %v3324, 0.7853982
    %vm3326 = vcmp.lt.s32.totalorder %v2075, 0
    %v3327 = vand.u32 %v2075, 2139095040
    %v3328 = vshrl.u32 %v3327, 23
    %v3329 = vsub.s32 %v3328, 127
    %v3330 = vand.u32 2147483647, %v2075
    %v3331 = vand.u32 %v3330, 8388607
    %v3332 = vor.u32 %v3331, 8388608
    %v3333 = vsub.s32 0, %v3332
    %v3334 = vadd.s32 %v3329, 1
    %vm3335 = vcmp.gt.s32.totalorder %v3334, 0
    %v3336 = vsel %vm3335, %v3334, 0
    %v3337 = vshrl.u32 %v3336, 5
    %v3338 = vand.u32 %v3336, 31
    %v3339 = vsub.s32 32, %v3338
    %v3340 = vshrl.u32 683565275, %v3339
    %v3341 = vshll.u32 683565275, %v3338
    %v3342 = vshrl.u32 2475754826, %v3339
    %v3343 = vor.u32 %v3341, %v3342
    %v3344 = vshll.u32 2475754826, %v3338
    %v3345 = vshrl.u32 2131351028, %v3339
    %v3346 = vor.u32 %v3344, %v3345
    %v3347 = vshll.u32 2131351028, %v3338
    %v3348 = vshrl.u32 2102212464, %v3339
    %v3349 = vor.u32 %v3347, %v3348
    %v3350 = vshll.u32 2102212464, %v3338
    %v3351 = vshrl.u32 920167782, %v3339
    %v3352 = vor.u32 %v3350, %v3351
    %v3353 = vshll.u32 920167782, %v3338
    %v3354 = vshrl.u32 1326507024, %v3339
    %v3355 = vor.u32 %v3353, %v3354
    %vm3356 = vcmp.lt.s32.totalorder %v3337, 1
    %vm3357 = vcmp.lt.s32.totalorder %v3337, 2
    %vm3358 = vcmp.lt.s32.totalorder %v3337, 3
    %vm3359 = vcmp.lt.s32.totalorder %v3337, 4
    %v3360 = vsel %vm3356, %v3340, %v3343
    %v3361 = vsel %vm3359, %v3349, 2102212464
    %v3362 = vsel %vm3358, %v3346, %v3361
    %v3363 = vsel %vm3357, %v3360, %v3362
    %v3364 = vsel %vm3356, %v3343, %v3346
    %v3365 = vsel %vm3359, %v3352, 920167782
    %v3366 = vsel %vm3358, %v3349, %v3365
    %v3367 = vsel %vm3357, %v3364, %v3366
    %v3368 = vsel %vm3356, %v3346, %v3349
    %v3369 = vsel %vm3359, %v3355, 1326507024
    %v3370 = vsel %vm3358, %v3352, %v3369
    %v3371 = vsel %vm3357, %v3368, %v3370
    %v3372 = vshll.u32 %v3332, 8
    %v3373 = vmul.u32.u64.compose %v3372, %v3371
    %v3374 = vextract.low.u32 %v3373
    %v3375 = vextract.high.u32 %v3373
    %v3376 = vmul.u32.u64.compose %v3372, %v3367
    %v3377 = vextract.low.u32 %v3376
    %v3378 = vextract.high.u32 %v3376
    %v3379 = vmul.u32 %v3372, %v3363
    %v3380 = vadd.s32 %v3375, %v3377
    %vm3381 = vc.u32 %v3375, %v3377
    %v3382 = vadd.s32 %v3378, 1
    %v3383 = vsel %vm3381, %v3382, %v3378
    %v3384 = vadd.s32 %v3379, %v3383
    %v3385 = vadd.s32 %v3384, 536870912
    %v3386 = vshrl.u32 %v3385, 30
    %v3387 = vshll.u32 %v3386, 30
    %v3388 = vsub.s32 %v3384, %v3387
    %vm3389 = vcmp.lt.s32.totalorder %v3388, 0
    %v3390 = vsub.s32 0, %v3388
    %v3391 = vsel %vm3389, %v3390, %v3388
    %v3392 = vclz %v3391
    %v3393 = vsub.s32 %v3392, 2
    %vm3394 = vcmp.gt.s32.totalorder 0, %v3393
    %v3395 = vsel %vm3394, 0, %v3393
    %v3396 = vsub.s32 32, %v3395
    %v3397 = vshll.u32 %v3388, %v3395
    %v3398 = vshrl.u32 %v3380, %v3396
    %v3399 = vor.u32 %v3397, %v3398
    %v3400 = vsub.s32 4294967266, %v3395
    %v3401 = vadd.s32 %v3400, 127
    %v3402 = vshll.u32 %v3401, 23
    %v3403 = vor.u32 4788187, %v3402
    %v3404 = vand.u32 2147483647, %v3403
    %v3406 = vcvt.s32.f32 %v3399
    %v3407 = vmul.f32 %v3406, %v3404
    %v3408 = vxor.u32 %v3407, 2147483648
    %v3409 = vsel %vm3326, %v3408, %v3407
    %v3410 = vsub.s32 4, %v3386
    %v3411 = vsel %vm3326, %v3410, %v3386
    %v3412 = vsel %vm3325, %v2075, %v3409
    %v3413 = vsel %vm3325, 0, %v3411
    %v3414 = vcosq.f32.pop %v3412
    %v3415 = vsinq.f32.pop %v3412
    %vm3416 = vweird.f32 %v2075
    %v3417 = vadd.s32 %v3413, 3
    %v3418 = vand.u32 %v3417, 3
    %vm3419 = vcmp.lt.s32.totalorder %v3418, 2
    %vm3420 = vcmp.eq.s32.totalorder %v3418, 0
    %v3421 = vxor.u32 %v3415, 2147483648
    %v3422 = vsel %vm3420, %v3414, %v3421
    %vm3423 = vcmp.eq.s32.totalorder %v3418, 2
    %v3424 = vxor.u32 %v3414, 2147483648
    %v3425 = vsel %vm3423, %v3424, %v3415
    %v3426 = vsel %vm3419, %v3422, %v3425
    %v3427 = vsel %vm3416, nan, %v3426
    %v3428 = vand.u32 2147483647, %v1076
    %vm3429 = vcmp.le.f32.partialorder %v3428, 0.7853982
    %vm3430 = vcmp.lt.s32.totalorder %v1076, 0
    %v3431 = vand.u32 %v1076, 2139095040
    %v3432 = vshrl.u32 %v3431, 23
    %v3433 = vsub.s32 %v3432, 127
    %v3434 = vand.u32 2147483647, %v1076
    %v3435 = vand.u32 %v3434, 8388607
    %v3436 = vor.u32 %v3435, 8388608
    %v3437 = vsub.s32 0, %v3436
    %v3438 = vadd.s32 %v3433, 1
    %vm3439 = vcmp.gt.s32.totalorder %v3438, 0
    %v3440 = vsel %vm3439, %v3438, 0
    %v3441 = vshrl.u32 %v3440, 5
    %v3442 = vand.u32 %v3440, 31
    %v3443 = vsub.s32 32, %v3442
    %v3444 = vshrl.u32 683565275, %v3443
    %v3445 = vshll.u32 683565275, %v3442
    %v3446 = vshrl.u32 2475754826, %v3443
    %v3447 = vor.u32 %v3445, %v3446
    %v3448 = vshll.u32 2475754826, %v3442
    %v3449 = vshrl.u32 2131351028, %v3443
    %v3450 = vor.u32 %v3448, %v3449
    %v3451 = vshll.u32 2131351028, %v3442
    %v3452 = vshrl.u32 2102212464, %v3443
    %v3453 = vor.u32 %v3451, %v3452
    %v3454 = vshll.u32 2102212464, %v3442
    %v3455 = vshrl.u32 920167782, %v3443
    %v3456 = vor.u32 %v3454, %v3455
    %v3457 = vshll.u32 920167782, %v3442
    %v3458 = vshrl.u32 1326507024, %v3443
    %v3459 = vor.u32 %v3457, %v3458
    %vm3460 = vcmp.lt.s32.totalorder %v3441, 1
    %vm3461 = vcmp.lt.s32.totalorder %v3441, 2
    %vm3462 = vcmp.lt.s32.totalorder %v3441, 3
    %vm3463 = vcmp.lt.s32.totalorder %v3441, 4
    %v3464 = vsel %vm3460, %v3444, %v3447
    %v3465 = vsel %vm3463, %v3453, 2102212464
    %v3466 = vsel %vm3462, %v3450, %v3465
    %v3467 = vsel %vm3461, %v3464, %v3466
    %v3468 = vsel %vm3460, %v3447, %v3450
    %v3469 = vsel %vm3463, %v3456, 920167782
    %v3470 = vsel %vm3462, %v3453, %v3469
    %v3471 = vsel %vm3461, %v3468, %v3470
    %v3472 = vsel %vm3460, %v3450, %v3453
    %v3473 = vsel %vm3463, %v3459, 1326507024
    %v3474 = vsel %vm3462, %v3456, %v3473
    %v3475 = vsel %vm3461, %v3472, %v3474
    %v3476 = vshll.u32 %v3436, 8
    %v3477 = vmul.u32.u64.compose %v3476, %v3475
    %v3478 = vextract.low.u32 %v3477
    %v3479 = vextract.high.u32 %v3477
    %v3480 = vmul.u32.u64.compose %v3476, %v3471
    %v3481 = vextract.low.u32 %v3480
    %v3482 = vextract.high.u32 %v3480
    %v3483 = vmul.u32 %v3476, %v3467
    %v3484 = vadd.s32 %v3479, %v3481
    %vm3485 = vc.u32 %v3479, %v3481
    %v3486 = vadd.s32 %v3482, 1
    %v3487 = vsel %vm3485, %v3486, %v3482
    %v3488 = vadd.s32 %v3483, %v3487
    %v3489 = vadd.s32 %v3488, 536870912
    %v3490 = vshrl.u32 %v3489, 30
    %v3491 = vshll.u32 %v3490, 30
    %v3492 = vsub.s32 %v3488, %v3491
    %vm3493 = vcmp.lt.s32.totalorder %v3492, 0
    %v3494 = vsub.s32 0, %v3492
    %v3495 = vsel %vm3493, %v3494, %v3492
    %v3496 = vclz %v3495
    %v3497 = vsub.s32 %v3496, 2
    %vm3498 = vcmp.gt.s32.totalorder 0, %v3497
    %v3499 = vsel %vm3498, 0, %v3497
    %v3500 = vsub.s32 32, %v3499
    %v3501 = vshll.u32 %v3492, %v3499
    %v3502 = vshrl.u32 %v3484, %v3500
    %v3503 = vor.u32 %v3501, %v3502
    %v3504 = vsub.s32 4294967266, %v3499
    %v3505 = vadd.s32 %v3504, 127
    %v3506 = vshll.u32 %v3505, 23
    %v3507 = vor.u32 4788187, %v3506
    %v3508 = vand.u32 2147483647, %v3507
    %v3510 = vcvt.s32.f32 %v3503
    %v3511 = vmul.f32 %v3510, %v3508
    %v3512 = vxor.u32 %v3511, 2147483648
    %v3513 = vsel %vm3430, %v3512, %v3511
    %v3514 = vsub.s32 4, %v3490
    %v3515 = vsel %vm3430, %v3514, %v3490
    %v3516 = vsel %vm3429, %v1076, %v3513
    %v3517 = vsel %vm3429, 0, %v3515
    %v3518 = vcosq.f32.pop %v3516
    %v3519 = vsinq.f32.pop %v3516
    %vm3520 = vweird.f32 %v1076
    %v3521 = vadd.s32 %v3517, 3
    %v3522 = vand.u32 %v3521, 3
    %vm3523 = vcmp.lt.s32.totalorder %v3522, 2
    %vm3524 = vcmp.eq.s32.totalorder %v3522, 0
    %v3525 = vxor.u32 %v3519, 2147483648
    %v3526 = vsel %vm3524, %v3518, %v3525
    %vm3527 = vcmp.eq.s32.totalorder %v3522, 2
    %v3528 = vxor.u32 %v3518, 2147483648
    %v3529 = vsel %vm3527, %v3528, %v3519
    %v3530 = vsel %vm3523, %v3526, %v3529
    %v3531 = vsel %vm3520, nan, %v3530
    %v3532 = vand.u32 2147483647, %v1078
    %vm3533 = vcmp.le.f32.partialorder %v3532, 0.7853982
    %vm3534 = vcmp.lt.s32.totalorder %v1078, 0
    %v3535 = vand.u32 %v1078, 2139095040
    %v3536 = vshrl.u32 %v3535, 23
    %v3537 = vsub.s32 %v3536, 127
    %v3538 = vand.u32 2147483647, %v1078
    %v3539 = vand.u32 %v3538, 8388607
    %v3540 = vor.u32 %v3539, 8388608
    %v3541 = vsub.s32 0, %v3540
    %v3542 = vadd.s32 %v3537, 1
    %vm3543 = vcmp.gt.s32.totalorder %v3542, 0
    %v3544 = vsel %vm3543, %v3542, 0
    %v3545 = vshrl.u32 %v3544, 5
    %v3546 = vand.u32 %v3544, 31
    %v3547 = vsub.s32 32, %v3546
    %v3548 = vshrl.u32 683565275, %v3547
    %v3549 = vshll.u32 683565275, %v3546
    %v3550 = vshrl.u32 2475754826, %v3547
    %v3551 = vor.u32 %v3549, %v3550
    %v3552 = vshll.u32 2475754826, %v3546
    %v3553 = vshrl.u32 2131351028, %v3547
    %v3554 = vor.u32 %v3552, %v3553
    %v3555 = vshll.u32 2131351028, %v3546
    %v3556 = vshrl.u32 2102212464, %v3547
    %v3557 = vor.u32 %v3555, %v3556
    %v3558 = vshll.u32 2102212464, %v3546
    %v3559 = vshrl.u32 920167782, %v3547
    %v3560 = vor.u32 %v3558, %v3559
    %v3561 = vshll.u32 920167782, %v3546
    %v3562 = vshrl.u32 1326507024, %v3547
    %v3563 = vor.u32 %v3561, %v3562
    %vm3564 = vcmp.lt.s32.totalorder %v3545, 1
    %vm3565 = vcmp.lt.s32.totalorder %v3545, 2
    %vm3566 = vcmp.lt.s32.totalorder %v3545, 3
    %vm3567 = vcmp.lt.s32.totalorder %v3545, 4
    %v3568 = vsel %vm3564, %v3548, %v3551
    %v3569 = vsel %vm3567, %v3557, 2102212464
    %v3570 = vsel %vm3566, %v3554, %v3569
    %v3571 = vsel %vm3565, %v3568, %v3570
    %v3572 = vsel %vm3564, %v3551, %v3554
    %v3573 = vsel %vm3567, %v3560, 920167782
    %v3574 = vsel %vm3566, %v3557, %v3573
    %v3575 = vsel %vm3565, %v3572, %v3574
    %v3576 = vsel %vm3564, %v3554, %v3557
    %v3577 = vsel %vm3567, %v3563, 1326507024
    %v3578 = vsel %vm3566, %v3560, %v3577
    %v3579 = vsel %vm3565, %v3576, %v3578
    %v3580 = vshll.u32 %v3540, 8
    %v3581 = vmul.u32.u64.compose %v3580, %v3579
    %v3582 = vextract.low.u32 %v3581
    %v3583 = vextract.high.u32 %v3581
    %v3584 = vmul.u32.u64.compose %v3580, %v3575
    %v3585 = vextract.low.u32 %v3584
    %v3586 = vextract.high.u32 %v3584
    %v3587 = vmul.u32 %v3580, %v3571
    %v3588 = vadd.s32 %v3583, %v3585
    %vm3589 = vc.u32 %v3583, %v3585
    %v3590 = vadd.s32 %v3586, 1
    %v3591 = vsel %vm3589, %v3590, %v3586
    %v3592 = vadd.s32 %v3587, %v3591
    %v3593 = vadd.s32 %v3592, 536870912
    %v3594 = vshrl.u32 %v3593, 30
    %v3595 = vshll.u32 %v3594, 30
    %v3596 = vsub.s32 %v3592, %v3595
    %vm3597 = vcmp.lt.s32.totalorder %v3596, 0
    %v3598 = vsub.s32 0, %v3596
    %v3599 = vsel %vm3597, %v3598, %v3596
    %v3600 = vclz %v3599
    %v3601 = vsub.s32 %v3600, 2
    %vm3602 = vcmp.gt.s32.totalorder 0, %v3601
    %v3603 = vsel %vm3602, 0, %v3601
    %v3604 = vsub.s32 32, %v3603
    %v3605 = vshll.u32 %v3596, %v3603
    %v3606 = vshrl.u32 %v3588, %v3604
    %v3607 = vor.u32 %v3605, %v3606
    %v3608 = vsub.s32 4294967266, %v3603
    %v3609 = vadd.s32 %v3608, 127
    %v3610 = vshll.u32 %v3609, 23
    %v3611 = vor.u32 4788187, %v3610
    %v3612 = vand.u32 2147483647, %v3611
    %v3614 = vcvt.s32.f32 %v3607
    %v3615 = vmul.f32 %v3614, %v3612
    %v3616 = vxor.u32 %v3615, 2147483648
    %v3617 = vsel %vm3534, %v3616, %v3615
    %v3618 = vsub.s32 4, %v3594
    %v3619 = vsel %vm3534, %v3618, %v3594
    %v3620 = vsel %vm3533, %v1078, %v3617
    %v3621 = vsel %vm3533, 0, %v3619
    %v3622 = vcosq.f32.pop %v3620
    %v3623 = vsinq.f32.pop %v3620
    %vm3624 = vweird.f32 %v1078
    %v3625 = vadd.s32 %v3621, 3
    %v3626 = vand.u32 %v3625, 3
    %vm3627 = vcmp.lt.s32.totalorder %v3626, 2
    %vm3628 = vcmp.eq.s32.totalorder %v3626, 0
    %v3629 = vxor.u32 %v3623, 2147483648
    %v3630 = vsel %vm3628, %v3622, %v3629
    %vm3631 = vcmp.eq.s32.totalorder %v3626, 2
    %v3632 = vxor.u32 %v3622, 2147483648
    %v3633 = vsel %vm3631, %v3632, %v3623
    %v3634 = vsel %vm3627, %v3630, %v3633
    %v3635 = vsel %vm3624, nan, %v3634
    %v3636 = vand.u32 2147483647, %v2080
    %vm3637 = vcmp.le.f32.partialorder %v3636, 0.7853982
    %vm3638 = vcmp.lt.s32.totalorder %v2080, 0
    %v3639 = vand.u32 %v2080, 2139095040
    %v3640 = vshrl.u32 %v3639, 23
    %v3641 = vsub.s32 %v3640, 127
    %v3642 = vand.u32 2147483647, %v2080
    %v3643 = vand.u32 %v3642, 8388607
    %v3644 = vor.u32 %v3643, 8388608
    %v3645 = vsub.s32 0, %v3644
    %v3646 = vadd.s32 %v3641, 1
    %vm3647 = vcmp.gt.s32.totalorder %v3646, 0
    %v3648 = vsel %vm3647, %v3646, 0
    %v3649 = vshrl.u32 %v3648, 5
    %v3650 = vand.u32 %v3648, 31
    %v3651 = vsub.s32 32, %v3650
    %v3652 = vshrl.u32 683565275, %v3651
    %v3653 = vshll.u32 683565275, %v3650
    %v3654 = vshrl.u32 2475754826, %v3651
    %v3655 = vor.u32 %v3653, %v3654
    %v3656 = vshll.u32 2475754826, %v3650
    %v3657 = vshrl.u32 2131351028, %v3651
    %v3658 = vor.u32 %v3656, %v3657
    %v3659 = vshll.u32 2131351028, %v3650
    %v3660 = vshrl.u32 2102212464, %v3651
    %v3661 = vor.u32 %v3659, %v3660
    %v3662 = vshll.u32 2102212464, %v3650
    %v3663 = vshrl.u32 920167782, %v3651
    %v3664 = vor.u32 %v3662, %v3663
    %v3665 = vshll.u32 920167782, %v3650
    %v3666 = vshrl.u32 1326507024, %v3651
    %v3667 = vor.u32 %v3665, %v3666
    %vm3668 = vcmp.lt.s32.totalorder %v3649, 1
    %vm3669 = vcmp.lt.s32.totalorder %v3649, 2
    %vm3670 = vcmp.lt.s32.totalorder %v3649, 3
    %vm3671 = vcmp.lt.s32.totalorder %v3649, 4
    %v3672 = vsel %vm3668, %v3652, %v3655
    %v3673 = vsel %vm3671, %v3661, 2102212464
    %v3674 = vsel %vm3670, %v3658, %v3673
    %v3675 = vsel %vm3669, %v3672, %v3674
    %v3676 = vsel %vm3668, %v3655, %v3658
    %v3677 = vsel %vm3671, %v3664, 920167782
    %v3678 = vsel %vm3670, %v3661, %v3677
    %v3679 = vsel %vm3669, %v3676, %v3678
    %v3680 = vsel %vm3668, %v3658, %v3661
    %v3681 = vsel %vm3671, %v3667, 1326507024
    %v3682 = vsel %vm3670, %v3664, %v3681
    %v3683 = vsel %vm3669, %v3680, %v3682
    %v3684 = vshll.u32 %v3644, 8
    %v3685 = vmul.u32.u64.compose %v3684, %v3683
    %v3686 = vextract.low.u32 %v3685
    %v3687 = vextract.high.u32 %v3685
    %v3688 = vmul.u32.u64.compose %v3684, %v3679
    %v3689 = vextract.low.u32 %v3688
    %v3690 = vextract.high.u32 %v3688
    %v3691 = vmul.u32 %v3684, %v3675
    %v3692 = vadd.s32 %v3687, %v3689
    %vm3693 = vc.u32 %v3687, %v3689
    %v3694 = vadd.s32 %v3690, 1
    %v3695 = vsel %vm3693, %v3694, %v3690
    %v3696 = vadd.s32 %v3691, %v3695
    %v3697 = vadd.s32 %v3696, 536870912
    %v3698 = vshrl.u32 %v3697, 30
    %v3699 = vshll.u32 %v3698, 30
    %v3700 = vsub.s32 %v3696, %v3699
    %vm3701 = vcmp.lt.s32.totalorder %v3700, 0
    %v3702 = vsub.s32 0, %v3700
    %v3703 = vsel %vm3701, %v3702, %v3700
    %v3704 = vclz %v3703
    %v3705 = vsub.s32 %v3704, 2
    %vm3706 = vcmp.gt.s32.totalorder 0, %v3705
    %v3707 = vsel %vm3706, 0, %v3705
    %v3708 = vsub.s32 32, %v3707
    %v3709 = vshll.u32 %v3700, %v3707
    %v3710 = vshrl.u32 %v3692, %v3708
    %v3711 = vor.u32 %v3709, %v3710
    %v3712 = vsub.s32 4294967266, %v3707
    %v3713 = vadd.s32 %v3712, 127
    %v3714 = vshll.u32 %v3713, 23
    %v3715 = vor.u32 4788187, %v3714
    %v3716 = vand.u32 2147483647, %v3715
    %v3718 = vcvt.s32.f32 %v3711
    %v3719 = vmul.f32 %v3718, %v3716
    %v3720 = vxor.u32 %v3719, 2147483648
    %v3721 = vsel %vm3638, %v3720, %v3719
    %v3722 = vsub.s32 4, %v3698
    %v3723 = vsel %vm3638, %v3722, %v3698
    %v3724 = vsel %vm3637, %v2080, %v3721
    %v3725 = vsel %vm3637, 0, %v3723
    %v3726 = vcosq.f32.pop %v3724
    %v3727 = vsinq.f32.pop %v3724
    %vm3728 = vweird.f32 %v2080
    %v3729 = vadd.s32 %v3725, 3
    %v3730 = vand.u32 %v3729, 3
    %vm3731 = vcmp.lt.s32.totalorder %v3730, 2
    %vm3732 = vcmp.eq.s32.totalorder %v3730, 0
    %v3733 = vxor.u32 %v3727, 2147483648
    %v3734 = vsel %vm3732, %v3726, %v3733
    %vm3735 = vcmp.eq.s32.totalorder %v3730, 2
    %v3736 = vxor.u32 %v3726, 2147483648
    %v3737 = vsel %vm3735, %v3736, %v3727
    %v3738 = vsel %vm3731, %v3734, %v3737
    %v3739 = vsel %vm3728, nan, %v3738
    %v3740 = vand.u32 2147483647, %v2082
    %vm3741 = vcmp.le.f32.partialorder %v3740, 0.7853982
    %vm3742 = vcmp.lt.s32.totalorder %v2082, 0
    %v3743 = vand.u32 %v2082, 2139095040
    %v3744 = vshrl.u32 %v3743, 23
    %v3745 = vsub.s32 %v3744, 127
    %v3746 = vand.u32 2147483647, %v2082
    %v3747 = vand.u32 %v3746, 8388607
    %v3748 = vor.u32 %v3747, 8388608
    %v3749 = vsub.s32 0, %v3748
    %v3750 = vadd.s32 %v3745, 1
    %vm3751 = vcmp.gt.s32.totalorder %v3750, 0
    %v3752 = vsel %vm3751, %v3750, 0
    %v3753 = vshrl.u32 %v3752, 5
    %v3754 = vand.u32 %v3752, 31
    %v3755 = vsub.s32 32, %v3754
    %v3756 = vshrl.u32 683565275, %v3755
    %v3757 = vshll.u32 683565275, %v3754
    %v3758 = vshrl.u32 2475754826, %v3755
    %v3759 = vor.u32 %v3757, %v3758
    %v3760 = vshll.u32 2475754826, %v3754
    %v3761 = vshrl.u32 2131351028, %v3755
    %v3762 = vor.u32 %v3760, %v3761
    %v3763 = vshll.u32 2131351028, %v3754
    %v3764 = vshrl.u32 2102212464, %v3755
    %v3765 = vor.u32 %v3763, %v3764
    %v3766 = vshll.u32 2102212464, %v3754
    %v3767 = vshrl.u32 920167782, %v3755
    %v3768 = vor.u32 %v3766, %v3767
    %v3769 = vshll.u32 920167782, %v3754
    %v3770 = vshrl.u32 1326507024, %v3755
    %v3771 = vor.u32 %v3769, %v3770
    %vm3772 = vcmp.lt.s32.totalorder %v3753, 1
    %vm3773 = vcmp.lt.s32.totalorder %v3753, 2
    %vm3774 = vcmp.lt.s32.totalorder %v3753, 3
    %vm3775 = vcmp.lt.s32.totalorder %v3753, 4
    %v3776 = vsel %vm3772, %v3756, %v3759
    %v3777 = vsel %vm3775, %v3765, 2102212464
    %v3778 = vsel %vm3774, %v3762, %v3777
    %v3779 = vsel %vm3773, %v3776, %v3778
    %v3780 = vsel %vm3772, %v3759, %v3762
    %v3781 = vsel %vm3775, %v3768, 920167782
    %v3782 = vsel %vm3774, %v3765, %v3781
    %v3783 = vsel %vm3773, %v3780, %v3782
    %v3784 = vsel %vm3772, %v3762, %v3765
    %v3785 = vsel %vm3775, %v3771, 1326507024
    %v3786 = vsel %vm3774, %v3768, %v3785
    %v3787 = vsel %vm3773, %v3784, %v3786
    %v3788 = vshll.u32 %v3748, 8
    %v3789 = vmul.u32.u64.compose %v3788, %v3787
    %v3790 = vextract.low.u32 %v3789
    %v3791 = vextract.high.u32 %v3789
    %v3792 = vmul.u32.u64.compose %v3788, %v3783
    %v3793 = vextract.low.u32 %v3792
    %v3794 = vextract.high.u32 %v3792
    %v3795 = vmul.u32 %v3788, %v3779
    %v3796 = vadd.s32 %v3791, %v3793
    %vm3797 = vc.u32 %v3791, %v3793
    %v3798 = vadd.s32 %v3794, 1
    %v3799 = vsel %vm3797, %v3798, %v3794
    %v3800 = vadd.s32 %v3795, %v3799
    %v3801 = vadd.s32 %v3800, 536870912
    %v3802 = vshrl.u32 %v3801, 30
    %v3803 = vshll.u32 %v3802, 30
    %v3804 = vsub.s32 %v3800, %v3803
    %vm3805 = vcmp.lt.s32.totalorder %v3804, 0
    %v3806 = vsub.s32 0, %v3804
    %v3807 = vsel %vm3805, %v3806, %v3804
    %v3808 = vclz %v3807
    %v3809 = vsub.s32 %v3808, 2
    %vm3810 = vcmp.gt.s32.totalorder 0, %v3809
    %v3811 = vsel %vm3810, 0, %v3809
    %v3812 = vsub.s32 32, %v3811
    %v3813 = vshll.u32 %v3804, %v3811
    %v3814 = vshrl.u32 %v3796, %v3812
    %v3815 = vor.u32 %v3813, %v3814
    %v3816 = vsub.s32 4294967266, %v3811
    %v3817 = vadd.s32 %v3816, 127
    %v3818 = vshll.u32 %v3817, 23
    %v3819 = vor.u32 4788187, %v3818
    %v3820 = vand.u32 2147483647, %v3819
    %v3822 = vcvt.s32.f32 %v3815
    %v3823 = vmul.f32 %v3822, %v3820
    %v3824 = vxor.u32 %v3823, 2147483648
    %v3825 = vsel %vm3742, %v3824, %v3823
    %v3826 = vsub.s32 4, %v3802
    %v3827 = vsel %vm3742, %v3826, %v3802
    %v3828 = vsel %vm3741, %v2082, %v3825
    %v3829 = vsel %vm3741, 0, %v3827
    %v3830 = vcosq.f32.pop %v3828
    %v3831 = vsinq.f32.pop %v3828
    %vm3832 = vweird.f32 %v2082
    %v3833 = vadd.s32 %v3829, 3
    %v3834 = vand.u32 %v3833, 3
    %vm3835 = vcmp.lt.s32.totalorder %v3834, 2
    %vm3836 = vcmp.eq.s32.totalorder %v3834, 0
    %v3837 = vxor.u32 %v3831, 2147483648
    %v3838 = vsel %vm3836, %v3830, %v3837
    %vm3839 = vcmp.eq.s32.totalorder %v3834, 2
    %v3840 = vxor.u32 %v3830, 2147483648
    %v3841 = vsel %vm3839, %v3840, %v3831
    %v3842 = vsel %vm3835, %v3838, %v3841
    %v3843 = vsel %vm3832, nan, %v3842
    %v3844 = vmul.f32 %v2149, %v2283
    %v3845 = vmul.f32 %v2151, %v2387
    %v3846 = vmul.f32 %v2153, %v2491
    %v3847 = vmul.f32 %v2155, %v2595
    %v3848 = vmul.f32 %v2157, %v2699
    %v3849 = vmul.f32 %v2159, %v2803
    %v3850 = vmul.f32 %v2161, %v2907
    %v3851 = vmul.f32 %v2163, %v3011
    %v3852 = vmul.f32 %v2165, %v3115
    %v3853 = vmul.f32 %v2167, %v3219
    %v3854 = vmul.f32 %v2169, %v3323
    %v3855 = vmul.f32 %v2171, %v3427
    %v3856 = vmul.f32 %v2173, %v3531
    %v3857 = vmul.f32 %v2175, %v3635
    %v3858 = vmul.f32 %v2177, %v3739
    %v3859 = vmul.f32 %v2179, %v3843
    %3860 = vst [vmem:[#allocation2] sm:$0xff] %v3844
    %3861 = vst [vmem:[#allocation2 + $0x8] sm:$0xff] %v3845
    %3862 = vst [vmem:[#allocation2 + $0x10] sm:$0xff] %v3846
    %3863 = vst [vmem:[#allocation2 + $0x18] sm:$0xff] %v3847
    %3864 = vst [vmem:[#allocation2 + $0x20] sm:$0xff] %v3848
    %3865 = vst [vmem:[#allocation2 + $0x28] sm:$0xff] %v3849
    %3866 = vst [vmem:[#allocation2 + $0x30] sm:$0xff] %v3850
    %3867 = vst [vmem:[#allocation2 + $0x38] sm:$0xff] %v3851
    %3868 = vst [vmem:[#allocation2 + $0x40] sm:$0xff] %v3852
    %3869 = vst [vmem:[#allocation2 + $0x48] sm:$0xff] %v3853
    %3870 = vst [vmem:[#allocation2 + $0x50] sm:$0xff] %v3854
    %3871 = vst [vmem:[#allocation2 + $0x58] sm:$0xff] %v3855
    %3872 = vst [vmem:[#allocation2 + $0x60] sm:$0xff] %v3856
    %3873 = vst [vmem:[#allocation2 + $0x68] sm:$0xff] %v3857
    %3874 = vst [vmem:[#allocation2 + $0x70] sm:$0xff] %v3858
    %3875 = vst [vmem:[#allocation2 + $0x78] sm:$0xff] %v3859
    // Predicated region
    $region10: #{tpu_custom_call.1} parent=1 // pred_check
      _
    $region11: #{tpu_custom_call.1} parent=1 // pred_check_branch
      %3877 = sbr.rel (0) target = $region13
    $region12: #{tpu_custom_call.1} parent=1 // pred_region
      %s3879 = ssub.s32 2048, 2048
      %3880 = vsyncadd [#allocation3], %s3879
      %s3881 = sshll.u32 [#allocation2], 4
      %s3882 = int_to_ptr.vmem [resolvable:$true] %s3881
      %3887 = dma.vmem_to_hbm [thread:$0]  %s3882, 2048, %s2, [#allocation3], 512, 512, 32
    $region13: #{tpu_custom_call.1} parent=1 // pred_fallthru
      _
    // Predicated region
    $region14: #{tpu_custom_call.1} parent=1 // pred_check
      _
    $region15: #{tpu_custom_call.1} parent=1 // pred_check_branch
      %3889 = sbr.rel (0) target = $region17
    $region16: #{tpu_custom_call.1} parent=1 // pred_region
      %3890 = dma.done [#allocation3], 2048
    $region17: #{tpu_custom_call.1} parent=1 // pred_fallthru
      _
    %3891 = vsyncpa [#allocation3], 1

</llo_original>
